<compile_context>
chip_gen: v5e
topology: v5e:2x2
jax: 0.10.0
libtpu: 0.0.40
codegen_flags: <defaults>
</compile_context>

<pallas_src>
import functools
import math

import jax
import jax.numpy as jnp
from jax.experimental import pallas as pl
from jax.experimental.pallas import tpu as pltpu


_TM, _TN, _TK = 512, 512, 256       # matmul tile targets
_LN_ROWS = 512                      # layernorm row-tile target
_Q_TILE = 256                       # attention q / kv tile target
_LANE = 128
_VMEM_LIMIT = 40 * 1024 * 1024      # re-derived for v7x (64 MiB/TC); harmless on v5e/v6e


def _plan(dim, target):
    """Return (tile, padded_dim).  Full-dim block if dim <= target (always legal); otherwise
    a 128-aligned tile with dim zero-padded up to a multiple of it (lane-dense, obeys (8,128))."""
    if dim <= target:
        return dim, dim
    tile = max(_LANE, (target // _LANE) * _LANE)
    padded = ((dim + tile - 1) // tile) * tile
    return tile, padded


def _pad2(a, rows, cols):
    r, c = a.shape
    if (r, c) == (rows, cols):
        return a
    return jnp.pad(a, ((0, rows - r), (0, cols - c)))


# ----------------------- tiled linear (matmul + bias [+gelu] [+fused residual]) -----------------------

def _gelu_new(y):
    c = math.sqrt(2.0 / math.pi)
    return 0.5 * y * (1.0 + jnp.tanh(c * (y + 0.044715 * y * y * y)))


def _linear_kernel(x_ref, w_ref, b_ref, o_ref, acc_ref, *, activation):
    @pl.when(pl.program_id(2) == 0)
    def _init():
        acc_ref[...] = jnp.zeros_like(acc_ref)

    acc_ref[...] += jnp.dot(x_ref[...], w_ref[...],
                            preferred_element_type=jnp.float32)

    @pl.when(pl.program_id(2) == pl.num_programs(2) - 1)
    def _fin():
        y = acc_ref[...] + b_ref[...].astype(jnp.float32)
        if activation == "gelu":
            y = _gelu_new(y)
        o_ref[...] = y.astype(o_ref.dtype)


def _linear_residual_kernel(x_ref, w_ref, b_ref, r_ref, o_ref, acc_ref):
    @pl.when(pl.program_id(2) == 0)
    def _init():
        acc_ref[...] = jnp.zeros_like(acc_ref)

    acc_ref[...] += jnp.dot(x_ref[...], w_ref[...],
                            preferred_element_type=jnp.float32)

    @pl.when(pl.program_id(2) == pl.num_programs(2) - 1)
    def _fin():
        y = acc_ref[...] + b_ref[...].astype(jnp.float32) + r_ref[...].astype(jnp.float32)
        o_ref[...] = y.astype(o_ref.dtype)


def linear(x, w, b, *, activation=None, residual=None):
    """x: (N, Din) bf16, w: (Din, Dout), b: (Dout,) [, residual (N, Dout)] -> (N, Dout) bf16."""
    N, Din = x.shape
    Dout = w.shape[1]
    tm, Np = _plan(N, _TM)
    tn, Dop = _plan(Dout, _TN)
    tk, Dip = _plan(Din, _TK)

    xp = _pad2(x, Np, Dip)
    wp = _pad2(w, Dip, Dop)
    bp = _pad2(b.reshape(1, Dout), 1, Dop)

    in_specs = [
        pl.BlockSpec((tm, tk), lambda i, j, k: (i, k)),
        pl.BlockSpec((tk, tn), lambda i, j, k: (k, j)),
        pl.BlockSpec((1, tn), lambda i, j, k: (0, j)),
    ]
    args = [xp, wp, bp]
    if residual is None:
        kernel = functools.partial(_linear_kernel, activation=activation)
    else:
        assert activation is None
        kernel = _linear_residual_kernel
        in_specs.append(pl.BlockSpec((tm, tn), lambda i, j, k: (i, j)))
        args.append(_pad2(residual, Np, Dop))

    # TODO(synk): the preceding layernorm could be fused here (per-row stats + normalize-on-load)
    # to save two full-activation HBM passes per layer; left as a standalone kernel for clarity.
    out = pl.pallas_call(
        kernel,
        out_shape=jax.ShapeDtypeStruct((Np, Dop), x.dtype),
        grid=(Np // tm, Dop // tn, Dip // tk),
        in_specs=in_specs,
        out_specs=pl.BlockSpec((tm, tn), lambda i, j, k: (i, j)),
        scratch_shapes=[pltpu.VMEM((tm, tn), jnp.float32)],
        compiler_params=pltpu.CompilerParams(
            dimension_semantics=("parallel", "parallel", "arbitrary"),
            vmem_limit_bytes=_VMEM_LIMIT),
    )(*args)
    return out[:N, :Dout] if (Np, Dop) != (N, Dout) else out


# ----------------------- tied LM head (x @ wte.T without materializing wte.T) -----------------------

def _lm_head_kernel(x_ref, w_ref, o_ref, acc_ref):
    @pl.when(pl.program_id(2) == 0)
    def _init():
        acc_ref[...] = jnp.zeros_like(acc_ref)

    acc_ref[...] += jax.lax.dot_general(
        x_ref[...], w_ref[...],
        dimension_numbers=(((1,), (1,)), ((), ())),
        preferred_element_type=jnp.float32)

    @pl.when(pl.program_id(2) == pl.num_programs(2) - 1)
    def _fin():
        o_ref[...] = acc_ref[...].astype(o_ref.dtype)


def lm_head(x, wte):
    """x: (N, D), wte: (V, D) -> logits (N, V); tied head, no bias, no wte.T copy."""
    N, D = x.shape
    V = wte.shape[0]
    tm, Np = _plan(N, _TM)
    tn, Vp = _plan(V, _TN)     # pads vocab (e.g. 50257 -> 50688) instead of a 29-wide tile
    tk, Dp = _plan(D, _TK)

    xp = _pad2(x, Np, Dp)
    wp = _pad2(wte, Vp, Dp)
    out = pl.pallas_call(
        _lm_head_kernel,
        out_shape=jax.ShapeDtypeStruct((Np, Vp), x.dtype),
        grid=(Np // tm, Vp // tn, Dp // tk),
        in_specs=[
            pl.BlockSpec((tm, tk), lambda i, j, k: (i, k)),
            pl.BlockSpec((tn, tk), lambda i, j, k: (j, k)),
        ],
        out_specs=pl.BlockSpec((tm, tn), lambda i, j, k: (i, j)),
        scratch_shapes=[pltpu.VMEM((tm, tn), jnp.float32)],
        compiler_params=pltpu.CompilerParams(
            dimension_semantics=("parallel", "parallel", "arbitrary"),
            vmem_limit_bytes=_VMEM_LIMIT),
    )(xp, wp)
    return out[:N, :V] if (Np, Vp) != (N, V) else out


# ----------------------- row-tiled layernorm (f32 math, bf16 I/O) -----------------------

def _layernorm_kernel(x_ref, g_ref, b_ref, o_ref):
    x = x_ref[...].astype(jnp.float32)
    mean = jnp.mean(x, axis=-1, keepdims=True)
    xc = x - mean
    var = jnp.mean(xc * xc, axis=-1, keepdims=True)
    y = xc * jax.lax.rsqrt(var + 1e-5) * g_ref[...].astype(jnp.float32) \
        + b_ref[...].astype(jnp.float32)
    o_ref[...] = y.astype(o_ref.dtype)


def layernorm(x, g, b):
    N, D = x.shape
    tm, Np = _plan(N, _LN_ROWS)
    xp = _pad2(x, Np, D)
    out = pl.pallas_call(
        _layernorm_kernel,
        out_shape=jax.ShapeDtypeStruct((Np, D), x.dtype),
        grid=(Np // tm,),
        in_specs=[
            pl.BlockSpec((tm, D), lambda i: (i, 0)),
            pl.BlockSpec((1, D), lambda i: (0, 0)),
            pl.BlockSpec((1, D), lambda i: (0, 0)),
        ],
        out_specs=pl.BlockSpec((tm, D), lambda i: (i, 0)),
        compiler_params=pltpu.CompilerParams(
            dimension_semantics=("parallel",),
            vmem_limit_bytes=_VMEM_LIMIT),
    )(xp, g.reshape(1, D), b.reshape(1, D))
    return out[:N] if Np != N else out


# ----------------------- flash-style causal attention, heads split in-kernel -----------------------

def _flash_attn_kernel(q_ref, k_ref, v_ref, o_ref, m_sc, l_sc, acc_sc, *,
                       scale, tq, n_head, d_head):
    qi = pl.program_id(1)
    ki = pl.program_id(2)

    @pl.when(ki == 0)
    def _init():
        m_sc[...] = jnp.full(m_sc.shape, -jnp.inf, jnp.float32)
        l_sc[...] = jnp.zeros(l_sc.shape, jnp.float32)
        acc_sc[...] = jnp.zeros(acc_sc.shape, jnp.float32)

    def _step(masked):
        q = q_ref[0]            # (tq, D) bf16, all heads
        k = k_ref[0]            # (tq, D)
        v = v_ref[0]            # (tq, D)
        if masked:              # causal mask only needed on the diagonal block
            row = qi * tq + jax.lax.broadcasted_iota(jnp.int32, (tq, tq), 0)
            col = ki * tq + jax.lax.broadcasted_iota(jnp.int32, (tq, tq), 1)
            causal = row >= col
        for h in range(n_head):                      # static unroll over heads
            lo, hi = h * d_head, (h + 1) * d_head
            s = jax.lax.dot_general(                 # trans_b: contract last dims, no transpose
                q[:, lo:hi], k[:, lo:hi],
                dimension_numbers=(((1,), (1,)), ((), ())),
                preferred_element_type=jnp.float32) * scale
            if masked:
                s = jnp.where(causal, s, -1e30)
            m_prev = m_sc[h]
            m_new = jnp.maximum(m_prev, jnp.max(s, axis=-1, keepdims=True))
            alpha = jnp.exp(m_prev - m_new)
            p = jnp.exp(s - m_new)
            l_sc[h] = alpha * l_sc[h] + jnp.sum(p, axis=-1, keepdims=True)
            acc_sc[h] = alpha * acc_sc[h] + jax.lax.dot_general(
                p.astype(v.dtype), v[:, lo:hi],
                dimension_numbers=(((1,), (0,)), ((), ())),
                preferred_element_type=jnp.float32)
            m_sc[h] = m_new

    @pl.when(ki < qi)
    def _off_diag():
        _step(masked=False)

    @pl.when(ki == qi)
    def _diag():
        _step(masked=True)

    @pl.when(ki == pl.num_programs(2) - 1)
    def _fin():
        outs = []
        for h in range(n_head):
            inv_l = pl.reciprocal(l_sc[h], approx=True)      # EUP slot, ~free
            outs.append(acc_sc[h] * inv_l)
        o_ref[0] = jnp.concatenate(outs, axis=-1).astype(o_ref.dtype)  # lane-dense store


def flash_causal_attention(q, k, v, *, n_head, q_tile=_Q_TILE):
    """q/k/v: (B, S, D) merged-head layout -> (B, S, D).  No XLA head transposes."""
    B, S, D = q.shape
    d_head = D // n_head
    scale = 1.0 / math.sqrt(d_head)
    if S <= q_tile:
        tq, Sp = S, S
    else:
        tq = q_tile
        Sp = ((S + tq - 1) // tq) * tq
    if Sp != S:
        pad = ((0, 0), (0, Sp - S), (0, 0))
        q, k, v = (jnp.pad(t, pad) for t in (q, k, v))
    nb = Sp // tq

    out = pl.pallas_call(
        functools.partial(_flash_attn_kernel, scale=scale, tq=tq,
                          n_head=n_head, d_head=d_head),
        out_shape=jax.ShapeDtypeStruct((B, Sp, D), q.dtype),
        grid=(B, nb, nb),
        in_specs=[
            pl.BlockSpec((1, tq, D), lambda b, i, j: (b, i, 0)),
            # clamp kv block index to the diagonal: causally-skipped (j > i) steps re-use the
            # previous block index, so no DMA is issued for upper-triangle K/V tiles.
            pl.BlockSpec((1, tq, D), lambda b, i, j: (b, jnp.minimum(j, i), 0)),
            pl.BlockSpec((1, tq, D), lambda b, i, j: (b, jnp.minimum(j, i), 0)),
        ],
        out_specs=pl.BlockSpec((1, tq, D), lambda b, i, j: (b, i, 0)),
        scratch_shapes=[
            pltpu.VMEM((n_head, tq, 1), jnp.float32),        # m (per head)
            pltpu.VMEM((n_head, tq, 1), jnp.float32),        # l (per head)
            pltpu.VMEM((n_head, tq, d_head), jnp.float32),   # acc (per head)
        ],
        compiler_params=pltpu.CompilerParams(
            dimension_semantics=("parallel", "parallel", "arbitrary"),
            vmem_limit_bytes=_VMEM_LIMIT),
    )(q, k, v)
    return out[:, :S, :] if Sp != S else out


# ----------------------- tiny GPT-2 model -----------------------

def init_params(key, *, vocab, max_pos, d_model, n_head, n_layer):
    def nrm(k, shape, scale=0.02):
        return (scale * jax.random.normal(k, shape)).astype(jnp.float32)

    keys = jax.random.split(key, 2 + 6 * n_layer)
    params = {
        "wte": nrm(keys[0], (vocab, d_model)),
        "wpe": nrm(keys[1], (max_pos, d_model)),
        "lnf_g": jnp.ones((d_model,), jnp.float32),
        "lnf_b": jnp.zeros((d_model,), jnp.float32),
        "blocks": [],
    }
    for l in range(n_layer):
        k = keys[2 + 6 * l: 2 + 6 * (l + 1)]
        params["blocks"].append({
            "ln1_g": jnp.ones((d_model,), jnp.float32),
            "ln1_b": jnp.zeros((d_model,), jnp.float32),
            "w_qkv": nrm(k[0], (d_model, 3 * d_model)),
            "b_qkv": jnp.zeros((3 * d_model,), jnp.float32),
            "w_proj": nrm(k[1], (d_model, d_model)),
            "b_proj": jnp.zeros((d_model,), jnp.float32),
            "ln2_g": jnp.ones((d_model,), jnp.float32),
            "ln2_b": jnp.zeros((d_model,), jnp.float32),
            "w_fc": nrm(k[2], (d_model, 4 * d_model)),
            "b_fc": jnp.zeros((4 * d_model,), jnp.float32),
            "w_mlp": nrm(k[3], (4 * d_model, d_model)),
            "b_mlp": jnp.zeros((d_model,), jnp.float32),
        })
    return params


def model_from_hf_forward(params, input_ids, *, n_head):
    """Equivalent of ModelFromHF.forward: run the wrapped causal LM, return logits (B,S,V)."""
    B, S = input_ids.shape
    V, D = params["wte"].shape

    # embedding gather stays as plain-JAX glue
    x = params["wte"][input_ids] + params["wpe"][:S][None, :, :]     # (B, S, D) bf16
    x2 = x.reshape(B * S, D)

    for blk in params["blocks"]:
        # --- attention sub-block ---
        xn = layernorm(x2, blk["ln1_g"], blk["ln1_b"])
        qkv = linear(xn, blk["w_qkv"], blk["b_qkv"])                 # (BS, 3D)
        q, k, v = jnp.split(qkv, 3, axis=-1)                         # contiguous slices, no transpose
        ctx = flash_causal_attention(q.reshape(B, S, D), k.reshape(B, S, D),
                                     v.reshape(B, S, D), n_head=n_head)  # (B, S, D)
        x2 = linear(ctx.reshape(B * S, D), blk["w_proj"], blk["b_proj"], residual=x2)

        # --- MLP sub-block ---
        xn = layernorm(x2, blk["ln2_g"], blk["ln2_b"])
        h = linear(xn, blk["w_fc"], blk["b_fc"], activation="gelu")
        x2 = linear(h, blk["w_mlp"], blk["b_mlp"], residual=x2)

    xf = layernorm(x2, params["lnf_g"], params["lnf_b"])
    logits = lm_head(xf, params["wte"])                              # tied head, no bias
    return logits.reshape(B, S, V)


# ----------------------- pure-JAX f32 reference -----------------------

def _ref_forward(params, input_ids, *, n_head):
    B, S = input_ids.shape
    D = params["wte"].shape[1]
    H, Dh = n_head, D // n_head

    def ln(x, g, b):
        mu = jnp.mean(x, -1, keepdims=True)
        xc = x - mu
        var = jnp.mean(xc * xc, -1, keepdims=True)
        return xc * jax.lax.rsqrt(var + 1e-5) * g + b

    def gelu(x):
        c = math.sqrt(2.0 / math.pi)
        return 0.5 * x * (1.0 + jnp.tanh(c * (x + 0.044715 * x ** 3)))

    x = params["wte"][input_ids] + params["wpe"][:S][None]
    mask = jnp.tril(jnp.ones((S, S), bool))
    for blk in params["blocks"]:
        xn = ln(x, blk["ln1_g"], blk["ln1_b"])
        qkv = xn @ blk["w_qkv"] + blk["b_qkv"]
        q, k, v = jnp.split(qkv, 3, axis=-1)
        q = q.reshape(B, S, H, Dh).transpose(0, 2, 1, 3)
        k = k.reshape(B, S, H, Dh).transpose(0, 2, 1, 3)
        v = v.reshape(B, S, H, Dh).transpose(0, 2, 1, 3)
        s = jnp.einsum("bhqd,bhkd->bhqk", q, k) / math.sqrt(Dh)
        s = jnp.where(mask, s, -1e30)
        p = jax.nn.softmax(s, axis=-1)
        ctx = jnp.einsum("bhqk,bhkd->bhqd", p, v).transpose(0, 2, 1, 3).reshape(B, S, D)
        x = x + ctx @ blk["w_proj"] + blk["b_proj"]
        xn = ln(x, blk["ln2_g"], blk["ln2_b"])
        x = x + gelu(xn @ blk["w_fc"] + blk["b_fc"]) @ blk["w_mlp"] + blk["b_mlp"]
    xf = ln(x, params["lnf_g"], params["lnf_b"])
    return xf @ params["wte"].T


# ----------------------- main -----------------------

if __name__ == "__main__":
    B, S = 2, 8
    D, H, L = 32, 4, 2
    VOCAB, MAX_POS = 64, 16

    key = jax.random.PRNGKey(0)
    pkey, ikey = jax.random.split(key)
    params = init_params(pkey, vocab=VOCAB, max_pos=MAX_POS, d_model=D, n_head=H, n_layer=L)
    input_ids = jax.random.randint(ikey, (B, S), 0, VOCAB, dtype=jnp.int32)

    # bf16 weights/activations for the kernel path; accumulation stays f32 inside the kernels.
    params_bf16 = jax.tree_util.tree_map(lambda a: a.astype(jnp.bfloat16), params)

    fwd = jax.jit(functools.partial(model_from_hf_forward, n_head=H))
    logits = fwd(params_bf16, input_ids)
    jax.block_until_ready(logits)

    assert logits.shape == (B, S, VOCAB), logits.shape

    ref = _ref_forward(params, input_ids, n_head=H)                  # f32 reference
    err = float(jnp.max(jnp.abs(logits.astype(jnp.float32) - ref)))
    assert err < 5e-2, f"max abs err {err}"                          # bf16-path tolerance

    print("KERNEL_OK")
</pallas_src>

<mosaic_0001>
module attributes {stable_mosaic.version = 11 : i64} {
  func.func @_linear_kernel(%arg0: i32, %arg1: i32, %arg2: i32, %arg3: memref<16x32xbf16, #tpu.memory_space<vmem>>, %arg4: memref<32x96xbf16, #tpu.memory_space<vmem>>, %arg5: memref<1x96xbf16, #tpu.memory_space<vmem>>, %arg6: memref<16x96xbf16, #tpu.memory_space<vmem>>, %arg7: memref<16x96xf32, #tpu.memory_space<vmem>>) attributes {dimension_semantics = [#tpu.dimension_semantics<parallel>, #tpu.dimension_semantics<parallel>, #tpu.dimension_semantics<arbitrary>], iteration_bounds = array<i64: 1, 1, 1>, scalar_prefetch = 0 : i64, scratch_operands = 1 : i64, tpu.core_type = #tpu.core_type<tc>, window_params = [{transform_indices = @transform_0, window_bounds = array<i64: 16, 32>}, {transform_indices = @transform_1, window_bounds = array<i64: 32, 96>}, {transform_indices = @transform_2, window_bounds = array<i64: 1, 96>}, {transform_indices = @transform_3, window_bounds = array<i64: 16, 96>}]} {
    %c0_i32 = arith.constant 0 : i32
    %0 = arith.cmpi eq, %arg2, %c0_i32 : i32
    %1 = arith.extui %0 : i1 to i32
    %c0_i32_0 = arith.constant 0 : i32
    %2 = arith.cmpi ne, %1, %c0_i32_0 : i32
    scf.if %2 {
      %cst_10 = arith.constant 0.000000e+00 : f32
      %12 = vector.broadcast %cst_10 : f32 to vector<16x96xf32>
      %c0_11 = arith.constant 0 : index
      %c0_12 = arith.constant 0 : index
      %13 = vector.load %arg7[%c0_11, %c0_12] : memref<16x96xf32, #tpu.memory_space<vmem>>, vector<16x96xf32>
      tpu.vector_store %arg7[%c0_11, %c0_12], %12 {strides = array<i32>} : memref<16x96xf32, #tpu.memory_space<vmem>>, vector<16x96xf32>,
    } else {
    }
    %c0 = arith.constant 0 : index
    %c0_1 = arith.constant 0 : index
    %3 = vector.load %arg7[%c0, %c0_1] : memref<16x96xf32, #tpu.memory_space<vmem>>, vector<16x96xf32>
    %c0_2 = arith.constant 0 : index
    %c0_3 = arith.constant 0 : index
    %4 = vector.load %arg3[%c0_2, %c0_3] : memref<16x32xbf16, #tpu.memory_space<vmem>>, vector<16x32xbf16>
    %c0_4 = arith.constant 0 : index
    %c0_5 = arith.constant 0 : index
    %5 = vector.load %arg4[%c0_4, %c0_5] : memref<32x96xbf16, #tpu.memory_space<vmem>>, vector<32x96xbf16>
    %cst = arith.constant dense<0.000000e+00> : vector<16x96xf32>
    %6 = tpu.matmul %4, %5, %cst {dimension_numbers = #tpu.dot_dimension_numbers<[1], [0], [0], [1], [0, 0, 1, 1], [], []>} : vector<16x32xbf16>, vector<32x96xbf16>, vector<16x96xf32> -> vector<16x96xf32>
    %7 = arith.addf %3, %6 : vector<16x96xf32>
    %c0_6 = arith.constant 0 : index
    %c0_7 = arith.constant 0 : index
    %8 = vector.load %arg7[%c0_6, %c0_7] : memref<16x96xf32, #tpu.memory_space<vmem>>, vector<16x96xf32>
    tpu.vector_store %arg7[%c0_6, %c0_7], %7 {strides = array<i32>} : memref<16x96xf32, #tpu.memory_space<vmem>>, vector<16x96xf32>,
    %c0_i32_8 = arith.constant 0 : i32
    %9 = arith.cmpi eq, %arg2, %c0_i32_8 : i32
    %10 = arith.extui %9 : i1 to i32
    %c0_i32_9 = arith.constant 0 : i32
    %11 = arith.cmpi ne, %10, %c0_i32_9 : i32
    scf.if %11 {
      %c0_10 = arith.constant 0 : index
      %c0_11 = arith.constant 0 : index
      %12 = vector.load %arg7[%c0_10, %c0_11] : memref<16x96xf32, #tpu.memory_space<vmem>>, vector<16x96xf32>
      %c0_12 = arith.constant 0 : index
      %c0_13 = arith.constant 0 : index
      %13 = vector.load %arg5[%c0_12, %c0_13] : memref<1x96xbf16, #tpu.memory_space<vmem>>, vector<1x96xbf16>
      %14 = arith.extf %13 : vector<1x96xbf16> to vector<1x96xf32>
      %15 = vector.broadcast %14 : vector<1x96xf32> to vector<16x96xf32>
      %16 = arith.addf %12, %15 : vector<16x96xf32>
      %17 = arith.truncf %16 : vector<16x96xf32> to vector<16x96xbf16>
      %c0_14 = arith.constant 0 : index
      %c0_15 = arith.constant 0 : index
      %18 = vector.load %arg6[%c0_14, %c0_15] : memref<16x96xbf16, #tpu.memory_space<vmem>>, vector<16x96xbf16>
      tpu.vector_store %arg6[%c0_14, %c0_15], %17 {strides = array<i32>} : memref<16x96xbf16, #tpu.memory_space<vmem>>, vector<16x96xbf16>,
    } else {
    }
    return
  }
  func.func @transform_0(%arg0: i32, %arg1: i32, %arg2: i32) -> (i32, i32) {
    %c0_i32 = arith.constant 0 : i32
    return %arg0, %arg2 : i32, i32
  }
  func.func @transform_1(%arg0: i32, %arg1: i32, %arg2: i32) -> (i32, i32) {
    %c0_i32 = arith.constant 0 : i32
    return %arg2, %arg1 : i32, i32
  }
  func.func @transform_2(%arg0: i32, %arg1: i32, %arg2: i32) -> (i32, i32) {
    %c0_i32 = arith.constant 0 : i32
    %c0_i32_0 = arith.constant 0 : i32
    return %c0_i32, %arg1 : i32, i32
  }
  func.func @transform_3(%arg0: i32, %arg1: i32, %arg2: i32) -> (i32, i32) {
    %c0_i32 = arith.constant 0 : i32
    return %arg0, %arg1 : i32, i32
  }
}

module attributes {stable_mosaic.version = 11 : i64} {
  func.func @_layernorm_kernel(%arg0: i32, %arg1: memref<16x32xbf16, #tpu.memory_space<vmem>>, %arg2: memref<1x32xbf16, #tpu.memory_space<vmem>>, %arg3: memref<1x32xbf16, #tpu.memory_space<vmem>>, %arg4: memref<16x32xbf16, #tpu.memory_space<vmem>>) attributes {dimension_semantics = [#tpu.dimension_semantics<parallel>], iteration_bounds = array<i64: 1>, scalar_prefetch = 0 : i64, scratch_operands = 0 : i64, tpu.core_type = #tpu.core_type<tc>, window_params = [{transform_indices = @transform_0, window_bounds = array<i64: 16, 32>}, {pipeline_mode = #tpu.pipeline_mode<synchronous>, transform_indices = @transform_1, window_bounds = array<i64: 1, 32>}, {pipeline_mode = #tpu.pipeline_mode<synchronous>, transform_indices = @transform_2, window_bounds = array<i64: 1, 32>}, {transform_indices = @transform_3, window_bounds = array<i64: 16, 32>}]} {
    %c0 = arith.constant 0 : index
    %c0_0 = arith.constant 0 : index
    %0 = vector.load %arg1[%c0, %c0_0] : memref<16x32xbf16, #tpu.memory_space<vmem>>, vector<16x32xbf16>
    %1 = arith.extf %0 : vector<16x32xbf16> to vector<16x32xf32>
    %cst = arith.constant dense<0.000000e+00> : vector<16xf32>
    %2 = vector.multi_reduction <add>, %1, %cst [1] : vector<16x32xf32> to vector<16xf32>
    %3 = vector.shape_cast %2 : vector<16xf32> to vector<16x1xf32>
    %cst_1 = arith.constant 3.200000e+01 : f32
    %4 = vector.broadcast %cst_1 : f32 to vector<16x1xf32>
    %5 = arith.divf %3, %4 : vector<16x1xf32>
    %6 = vector.broadcast %5 : vector<16x1xf32> to vector<16x32xf32>
    %7 = arith.subf %1, %6 : vector<16x32xf32>
    %8 = arith.mulf %7, %7 : vector<16x32xf32>
    %cst_2 = arith.constant dense<0.000000e+00> : vector<16xf32>
    %9 = vector.multi_reduction <add>, %8, %cst_2 [1] : vector<16x32xf32> to vector<16xf32>
    %10 = vector.shape_cast %9 : vector<16xf32> to vector<16x1xf32>
    %cst_3 = arith.constant 3.200000e+01 : f32
    %11 = vector.broadcast %cst_3 : f32 to vector<16x1xf32>
    %12 = arith.divf %10, %11 : vector<16x1xf32>
    %cst_4 = arith.constant 9.99999974E-6 : f32
    %13 = vector.broadcast %cst_4 : f32 to vector<16x1xf32>
    %14 = arith.addf %12, %13 : vector<16x1xf32>
    %15 = math.rsqrt %14 : vector<16x1xf32>
    %16 = vector.broadcast %15 : vector<16x1xf32> to vector<16x32xf32>
    %17 = arith.mulf %7, %16 : vector<16x32xf32>
    %c0_5 = arith.constant 0 : index
    %c0_6 = arith.constant 0 : index
    %18 = vector.load %arg2[%c0_5, %c0_6] : memref<1x32xbf16, #tpu.memory_space<vmem>>, vector<1x32xbf16>
    %19 = arith.extf %18 : vector<1x32xbf16> to vector<1x32xf32>
    %20 = vector.broadcast %19 : vector<1x32xf32> to vector<16x32xf32>
    %21 = arith.mulf %17, %20 : vector<16x32xf32>
    %c0_7 = arith.constant 0 : index
    %c0_8 = arith.constant 0 : index
    %22 = vector.load %arg3[%c0_7, %c0_8] : memref<1x32xbf16, #tpu.memory_space<vmem>>, vector<1x32xbf16>
    %23 = arith.extf %22 : vector<1x32xbf16> to vector<1x32xf32>
    %24 = vector.broadcast %23 : vector<1x32xf32> to vector<16x32xf32>
    %25 = arith.addf %21, %24 : vector<16x32xf32>
    %26 = arith.truncf %25 : vector<16x32xf32> to vector<16x32xbf16>
    %c0_9 = arith.constant 0 : index
    %c0_10 = arith.constant 0 : index
    %27 = vector.load %arg4[%c0_9, %c0_10] : memref<16x32xbf16, #tpu.memory_space<vmem>>, vector<16x32xbf16>
    tpu.vector_store %arg4[%c0_9, %c0_10], %26 {strides = array<i32>} : memref<16x32xbf16, #tpu.memory_space<vmem>>, vector<16x32xbf16>,
    return
  }
  func.func @transform_0(%arg0: i32) -> (i32, i32) {
    %c0_i32 = arith.constant 0 : i32
    %c0_i32_0 = arith.constant 0 : i32
    return %arg0, %c0_i32 : i32, i32
  }
  func.func @transform_1(%arg0: i32) -> (i32, i32) {
    %c0_i32 = arith.constant 0 : i32
    %c0_i32_0 = arith.constant 0 : i32
    %c0_i32_1 = arith.constant 0 : i32
    return %c0_i32, %c0_i32_0 : i32, i32
  }
  func.func @transform_2(%arg0: i32) -> (i32, i32) {
    %c0_i32 = arith.constant 0 : i32
    %c0_i32_0 = arith.constant 0 : i32
    %c0_i32_1 = arith.constant 0 : i32
    return %c0_i32, %c0_i32_0 : i32, i32
  }
  func.func @transform_3(%arg0: i32) -> (i32, i32) {
    %c0_i32 = arith.constant 0 : i32
    %c0_i32_0 = arith.constant 0 : i32
    return %arg0, %c0_i32 : i32, i32
  }
}

module attributes {stable_mosaic.version = 11 : i64} {
  func.func @_linear_residual_kernel(%arg0: i32, %arg1: i32, %arg2: i32, %arg3: memref<16x32xbf16, #tpu.memory_space<vmem>>, %arg4: memref<32x32xbf16, #tpu.memory_space<vmem>>, %arg5: memref<1x32xbf16, #tpu.memory_space<vmem>>, %arg6: memref<16x32xbf16, #tpu.memory_space<vmem>>, %arg7: memref<16x32xbf16, #tpu.memory_space<vmem>>, %arg8: memref<16x32xf32, #tpu.memory_space<vmem>>) attributes {dimension_semantics = [#tpu.dimension_semantics<parallel>, #tpu.dimension_semantics<parallel>, #tpu.dimension_semantics<arbitrary>], iteration_bounds = array<i64: 1, 1, 1>, scalar_prefetch = 0 : i64, scratch_operands = 1 : i64, tpu.core_type = #tpu.core_type<tc>, window_params = [{transform_indices = @transform_0, window_bounds = array<i64: 16, 32>}, {transform_indices = @transform_1, window_bounds = array<i64: 32, 32>}, {transform_indices = @transform_2, window_bounds = array<i64: 1, 32>}, {transform_indices = @transform_3, window_bounds = array<i64: 16, 32>}, {transform_indices = @transform_4, window_bounds = array<i64: 16, 32>}]} {
    %c0_i32 = arith.constant 0 : i32
    %0 = arith.cmpi eq, %arg2, %c0_i32 : i32
    %1 = arith.extui %0 : i1 to i32
    %c0_i32_0 = arith.constant 0 : i32
    %2 = arith.cmpi ne, %1, %c0_i32_0 : i32
    scf.if %2 {
      %cst_10 = arith.constant 0.000000e+00 : f32
      %12 = vector.broadcast %cst_10 : f32 to vector<16x32xf32>
      %c0_11 = arith.constant 0 : index
      %c0_12 = arith.constant 0 : index
      %13 = vector.load %arg8[%c0_11, %c0_12] : memref<16x32xf32, #tpu.memory_space<vmem>>, vector<16x32xf32>
      tpu.vector_store %arg8[%c0_11, %c0_12], %12 {strides = array<i32>} : memref<16x32xf32, #tpu.memory_space<vmem>>, vector<16x32xf32>,
    } else {
    }
    %c0 = arith.constant 0 : index
    %c0_1 = arith.constant 0 : index
    %3 = vector.load %arg8[%c0, %c0_1] : memref<16x32xf32, #tpu.memory_space<vmem>>, vector<16x32xf32>
    %c0_2 = arith.constant 0 : index
    %c0_3 = arith.constant 0 : index
    %4 = vector.load %arg3[%c0_2, %c0_3] : memref<16x32xbf16, #tpu.memory_space<vmem>>, vector<16x32xbf16>
    %c0_4 = arith.constant 0 : index
    %c0_5 = arith.constant 0 : index
    %5 = vector.load %arg4[%c0_4, %c0_5] : memref<32x32xbf16, #tpu.memory_space<vmem>>, vector<32x32xbf16>
    %cst = arith.constant dense<0.000000e+00> : vector<16x32xf32>
    %6 = tpu.matmul %4, %5, %cst {dimension_numbers = #tpu.dot_dimension_numbers<[1], [0], [0], [1], [0, 0, 1, 1], [], []>} : vector<16x32xbf16>, vector<32x32xbf16>, vector<16x32xf32> -> vector<16x32xf32>
    %7 = arith.addf %3, %6 : vector<16x32xf32>
    %c0_6 = arith.constant 0 : index
    %c0_7 = arith.constant 0 : index
    %8 = vector.load %arg8[%c0_6, %c0_7] : memref<16x32xf32, #tpu.memory_space<vmem>>, vector<16x32xf32>
    tpu.vector_store %arg8[%c0_6, %c0_7], %7 {strides = array<i32>} : memref<16x32xf32, #tpu.memory_space<vmem>>, vector<16x32xf32>,
    %c0_i32_8 = arith.constant 0 : i32
    %9 = arith.cmpi eq, %arg2, %c0_i32_8 : i32
    %10 = arith.extui %9 : i1 to i32
    %c0_i32_9 = arith.constant 0 : i32
    %11 = arith.cmpi ne, %10, %c0_i32_9 : i32
    scf.if %11 {
      %c0_10 = arith.constant 0 : index
      %c0_11 = arith.constant 0 : index
      %12 = vector.load %arg8[%c0_10, %c0_11] : memref<16x32xf32, #tpu.memory_space<vmem>>, vector<16x32xf32>
      %c0_12 = arith.constant 0 : index
      %c0_13 = arith.constant 0 : index
      %13 = vector.load %arg5[%c0_12, %c0_13] : memref<1x32xbf16, #tpu.memory_space<vmem>>, vector<1x32xbf16>
      %14 = arith.extf %13 : vector<1x32xbf16> to vector<1x32xf32>
      %15 = vector.broadcast %14 : vector<1x32xf32> to vector<16x32xf32>
      %16 = arith.addf %12, %15 : vector<16x32xf32>
      %c0_14 = arith.constant 0 : index
      %c0_15 = arith.constant 0 : index
      %17 = vector.load %arg6[%c0_14, %c0_15] : memref<16x32xbf16, #tpu.memory_space<vmem>>, vector<16x32xbf16>
      %18 = arith.extf %17 : vector<16x32xbf16> to vector<16x32xf32>
      %19 = arith.addf %16, %18 : vector<16x32xf32>
      %20 = arith.truncf %19 : vector<16x32xf32> to vector<16x32xbf16>
      %c0_16 = arith.constant 0 : index
      %c0_17 = arith.constant 0 : index
      %21 = vector.load %arg7[%c0_16, %c0_17] : memref<16x32xbf16, #tpu.memory_space<vmem>>, vector<16x32xbf16>
      tpu.vector_store %arg7[%c0_16, %c0_17], %20 {strides = array<i32>} : memref<16x32xbf16, #tpu.memory_space<vmem>>, vector<16x32xbf16>,
    } else {
    }
    return
  }
  func.func @transform_0(%arg0: i32, %arg1: i32, %arg2: i32) -> (i32, i32) {
    %c0_i32 = arith.constant 0 : i32
    return %arg0, %arg2 : i32, i32
  }
  func.func @transform_1(%arg0: i32, %arg1: i32, %arg2: i32) -> (i32, i32) {
    %c0_i32 = arith.constant 0 : i32
    return %arg2, %arg1 : i32, i32
  }
  func.func @transform_2(%arg0: i32, %arg1: i32, %arg2: i32) -> (i32, i32) {
    %c0_i32 = arith.constant 0 : i32
    %c0_i32_0 = arith.constant 0 : i32
    return %c0_i32, %arg1 : i32, i32
  }
  func.func @transform_3(%arg0: i32, %arg1: i32, %arg2: i32) -> (i32, i32) {
    %c0_i32 = arith.constant 0 : i32
    return %arg0, %arg1 : i32, i32
  }
  func.func @transform_4(%arg0: i32, %arg1: i32, %arg2: i32) -> (i32, i32) {
    %c0_i32 = arith.constant 0 : i32
    return %arg0, %arg1 : i32, i32
  }
}

module attributes {stable_mosaic.version = 11 : i64} {
  func.func @_flash_attn_kernel(%arg0: i32, %arg1: i32, %arg2: i32, %arg3: memref<1x8x32xbf16, #tpu.memory_space<vmem>>, %arg4: memref<1x8x32xbf16, #tpu.memory_space<vmem>>, %arg5: memref<1x8x32xbf16, #tpu.memory_space<vmem>>, %arg6: memref<1x8x32xbf16, #tpu.memory_space<vmem>>, %arg7: memref<4x8x1xf32, #tpu.memory_space<vmem>>, %arg8: memref<4x8x1xf32, #tpu.memory_space<vmem>>, %arg9: memref<4x8x8xf32, #tpu.memory_space<vmem>>) attributes {dimension_semantics = [#tpu.dimension_semantics<parallel>, #tpu.dimension_semantics<parallel>, #tpu.dimension_semantics<arbitrary>], iteration_bounds = array<i64: 2, 1, 1>, scalar_prefetch = 0 : i64, scratch_operands = 3 : i64, tpu.core_type = #tpu.core_type<tc>, window_params = [{transform_indices = @transform_0, window_bounds = array<i64: 1, 8, 32>}, {transform_indices = @transform_1, window_bounds = array<i64: 1, 8, 32>}, {transform_indices = @transform_2, window_bounds = array<i64: 1, 8, 32>}, {transform_indices = @transform_3, window_bounds = array<i64: 1, 8, 32>}]} {
    %c0_i32 = arith.constant 0 : i32
    %0 = arith.cmpi eq, %arg2, %c0_i32 : i32
    %1 = arith.extui %0 : i1 to i32
    %c0_i32_0 = arith.constant 0 : i32
    %2 = arith.cmpi ne, %1, %c0_i32_0 : i32
    scf.if %2 {
      %cst = arith.constant 0xFF800000 : f32
      %12 = vector.broadcast %cst : f32 to vector<4x8x1xf32>
      %c0 = arith.constant 0 : index
      %c0_5 = arith.constant 0 : index
      %c0_6 = arith.constant 0 : index
      %13 = vector.load %arg7[%c0, %c0_5, %c0_6] : memref<4x8x1xf32, #tpu.memory_space<vmem>>, vector<4x8x1xf32>
      tpu.vector_store %arg7[%c0, %c0_5, %c0_6], %12 {strides = array<i32>} : memref<4x8x1xf32, #tpu.memory_space<vmem>>, vector<4x8x1xf32>,
      %cst_7 = arith.constant 0.000000e+00 : f32
      %14 = vector.broadcast %cst_7 : f32 to vector<4x8x1xf32>
      %c0_8 = arith.constant 0 : index
      %c0_9 = arith.constant 0 : index
      %c0_10 = arith.constant 0 : index
      %15 = vector.load %arg8[%c0_8, %c0_9, %c0_10] : memref<4x8x1xf32, #tpu.memory_space<vmem>>, vector<4x8x1xf32>
      tpu.vector_store %arg8[%c0_8, %c0_9, %c0_10], %14 {strides = array<i32>} : memref<4x8x1xf32, #tpu.memory_space<vmem>>, vector<4x8x1xf32>,
      %cst_11 = arith.constant 0.000000e+00 : f32
      %16 = vector.broadcast %cst_11 : f32 to vector<4x8x8xf32>
      %c0_12 = arith.constant 0 : index
      %c0_13 = arith.constant 0 : index
      %c0_14 = arith.constant 0 : index
      %17 = vector.load %arg9[%c0_12, %c0_13, %c0_14] : memref<4x8x8xf32, #tpu.memory_space<vmem>>, vector<4x8x8xf32>
      tpu.vector_store %arg9[%c0_12, %c0_13, %c0_14], %16 {strides = array<i32>} : memref<4x8x8xf32, #tpu.memory_space<vmem>>, vector<4x8x8xf32>,
    } else {
    }
    %3 = arith.cmpi slt, %arg2, %arg1 : i32
    %4 = arith.extui %3 : i1 to i32
    %c0_i32_1 = arith.constant 0 : i32
    %5 = arith.cmpi ne, %4, %c0_i32_1 : i32
    scf.if %5 {
      %c0 = arith.constant 0 : index
      %c0_5 = arith.constant 0 : index
      %c0_6 = arith.constant 0 : index
      %12 = vector.load %arg3[%c0, %c0_5, %c0_6] : memref<1x8x32xbf16, #tpu.memory_space<vmem>>, vector<1x8x32xbf16>
      %13 = vector.shape_cast %12 : vector<1x8x32xbf16> to vector<8x32xbf16>
      %c0_7 = arith.constant 0 : index
      %c0_8 = arith.constant 0 : index
      %c0_9 = arith.constant 0 : index
      %14 = vector.load %arg4[%c0_7, %c0_8, %c0_9] : memref<1x8x32xbf16, #tpu.memory_space<vmem>>, vector<1x8x32xbf16>
      %15 = vector.shape_cast %14 : vector<1x8x32xbf16> to vector<8x32xbf16>
      %c0_10 = arith.constant 0 : index
      %c0_11 = arith.constant 0 : index
      %c0_12 = arith.constant 0 : index
      %16 = vector.load %arg5[%c0_10, %c0_11, %c0_12] : memref<1x8x32xbf16, #tpu.memory_space<vmem>>, vector<1x8x32xbf16>
      %17 = vector.shape_cast %16 : vector<1x8x32xbf16> to vector<8x32xbf16>
      %18 = vector.extract_strided_slice %13 {offsets = [0, 0], sizes = [8, 8], strides = [1, 1]} : vector<8x32xbf16> to vector<8x8xbf16>
      %19 = vector.extract_strided_slice %15 {offsets = [0, 0], sizes = [8, 8], strides = [1, 1]} : vector<8x32xbf16> to vector<8x8xbf16>
      %cst = arith.constant dense<0.000000e+00> : vector<8x8xf32>
      %20 = tpu.matmul %18, %19, %cst {dimension_numbers = #tpu.dot_dimension_numbers<[1], [1], [0], [0], [0, 0, 1, 0], [], []>} : vector<8x8xbf16>, vector<8x8xbf16>, vector<8x8xf32> -> vector<8x8xf32>
      %cst_13 = arith.constant 0.353553385 : f32
      %21 = vector.broadcast %cst_13 : f32 to vector<8x8xf32>
      %22 = arith.mulf %20, %21 : vector<8x8xf32>
      %c0_14 = arith.constant 0 : index
      %c0_15 = arith.constant 0 : index
      %c0_16 = arith.constant 0 : index
      %23 = vector.load %arg7[%c0_14, %c0_15, %c0_16] : memref<4x8x1xf32, #tpu.memory_space<vmem>>, vector<1x8x1xf32>
      %24 = vector.shape_cast %23 : vector<1x8x1xf32> to vector<8x1xf32>
      %cst_17 = arith.constant dense<0xFF800000> : vector<8xf32>
      %25 = vector.multi_reduction <maximumf>, %22, %cst_17 [1] : vector<8x8xf32> to vector<8xf32>
      %26 = vector.shape_cast %25 : vector<8xf32> to vector<8x1xf32>
      %27 = arith.maximumf %24, %26 : vector<8x1xf32>
      %28 = arith.subf %24, %27 : vector<8x1xf32>
      %29 = math.exp %28 : vector<8x1xf32>
      %30 = vector.broadcast %27 : vector<8x1xf32> to vector<8x8xf32>
      %31 = arith.subf %22, %30 : vector<8x8xf32>
      %32 = math.exp %31 : vector<8x8xf32>
      %c0_18 = arith.constant 0 : index
      %c0_19 = arith.constant 0 : index
      %c0_20 = arith.constant 0 : index
      %33 = vector.load %arg8[%c0_18, %c0_19, %c0_20] : memref<4x8x1xf32, #tpu.memory_space<vmem>>, vector<1x8x1xf32>
      %34 = vector.shape_cast %33 : vector<1x8x1xf32> to vector<8x1xf32>
      %35 = arith.mulf %29, %34 : vector<8x1xf32>
      %cst_21 = arith.constant dense<0.000000e+00> : vector<8xf32>
      %36 = vector.multi_reduction <add>, %32, %cst_21 [1] : vector<8x8xf32> to vector<8xf32>
      %37 = vector.shape_cast %36 : vector<8xf32> to vector<8x1xf32>
      %38 = arith.addf %35, %37 : vector<8x1xf32>
      %c0_22 = arith.constant 0 : index
      %c0_23 = arith.constant 0 : index
      %c0_24 = arith.constant 0 : index
      %39 = vector.load %arg8[%c0_22, %c0_23, %c0_24] : memref<4x8x1xf32, #tpu.memory_space<vmem>>, vector<1x8x1xf32>
      %40 = vector.shape_cast %39 : vector<1x8x1xf32> to vector<8x1xf32>
      %41 = vector.shape_cast %38 : vector<8x1xf32> to vector<1x8x1xf32>
      tpu.vector_store %arg8[%c0_22, %c0_23, %c0_24], %41 {strides = array<i32>} : memref<4x8x1xf32, #tpu.memory_space<vmem>>, vector<1x8x1xf32>,
      %c0_25 = arith.constant 0 : index
      %c0_26 = arith.constant 0 : index
      %c0_27 = arith.constant 0 : index
      %42 = vector.load %arg9[%c0_25, %c0_26, %c0_27] : memref<4x8x8xf32, #tpu.memory_space<vmem>>, vector<1x8x8xf32>
      %43 = vector.shape_cast %42 : vector<1x8x8xf32> to vector<8x8xf32>
      %44 = vector.broadcast %29 : vector<8x1xf32> to vector<8x8xf32>
      %45 = arith.mulf %44, %43 : vector<8x8xf32>
      %46 = arith.truncf %32 : vector<8x8xf32> to vector<8x8xbf16>
      %47 = vector.extract_strided_slice %17 {offsets = [0, 0], sizes = [8, 8], strides = [1, 1]} : vector<8x32xbf16> to vector<8x8xbf16>
      %cst_28 = arith.constant dense<0.000000e+00> : vector<8x8xf32>
      %48 = tpu.matmul %46, %47, %cst_28 {dimension_numbers = #tpu.dot_dimension_numbers<[1], [0], [0], [1], [0, 0, 1, 1], [], []>} : vector<8x8xbf16>, vector<8x8xbf16>, vector<8x8xf32> -> vector<8x8xf32>
      %49 = arith.addf %45, %48 : vector<8x8xf32>
      %c0_29 = arith.constant 0 : index
      %c0_30 = arith.constant 0 : index
      %c0_31 = arith.constant 0 : index
      %50 = vector.load %arg9[%c0_29, %c0_30, %c0_31] : memref<4x8x8xf32, #tpu.memory_space<vmem>>, vector<1x8x8xf32>
      %51 = vector.shape_cast %50 : vector<1x8x8xf32> to vector<8x8xf32>
      %52 = vector.shape_cast %49 : vector<8x8xf32> to vector<1x8x8xf32>
      tpu.vector_store %arg9[%c0_29, %c0_30, %c0_31], %52 {strides = array<i32>} : memref<4x8x8xf32, #tpu.memory_space<vmem>>, vector<1x8x8xf32>,
      %c0_32 = arith.constant 0 : index
      %c0_33 = arith.constant 0 : index
      %c0_34 = arith.constant 0 : index
      %53 = vector.load %arg7[%c0_32, %c0_33, %c0_34] : memref<4x8x1xf32, #tpu.memory_space<vmem>>, vector<1x8x1xf32>
      %54 = vector.shape_cast %53 : vector<1x8x1xf32> to vector<8x1xf32>
      %55 = vector.shape_cast %27 : vector<8x1xf32> to vector<1x8x1xf32>
      tpu.vector_store %arg7[%c0_32, %c0_33, %c0_34], %55 {strides = array<i32>} : memref<4x8x1xf32, #tpu.memory_space<vmem>>, vector<1x8x1xf32>,
      %56 = vector.extract_strided_slice %13 {offsets = [0, 8], sizes = [8, 8], strides = [1, 1]} : vector<8x32xbf16> to vector<8x8xbf16>
      %57 = vector.extract_strided_slice %15 {offsets = [0, 8], sizes = [8, 8], strides = [1, 1]} : vector<8x32xbf16> to vector<8x8xbf16>
      %cst_35 = arith.constant dense<0.000000e+00> : vector<8x8xf32>
      %58 = tpu.matmul %56, %57, %cst_35 {dimension_numbers = #tpu.dot_dimension_numbers<[1], [1], [0], [0], [0, 0, 1, 0], [], []>} : vector<8x8xbf16>, vector<8x8xbf16>, vector<8x8xf32> -> vector<8x8xf32>
      %cst_36 = arith.constant 0.353553385 : f32
      %59 = vector.broadcast %cst_36 : f32 to vector<8x8xf32>
      %60 = arith.mulf %58, %59 : vector<8x8xf32>
      %c1 = arith.constant 1 : index
      %c0_37 = arith.constant 0 : index
      %c0_38 = arith.constant 0 : index
      %61 = vector.load %arg7[%c1, %c0_37, %c0_38] : memref<4x8x1xf32, #tpu.memory_space<vmem>>, vector<1x8x1xf32>
      %62 = vector.shape_cast %61 : vector<1x8x1xf32> to vector<8x1xf32>
      %cst_39 = arith.constant dense<0xFF800000> : vector<8xf32>
      %63 = vector.multi_reduction <maximumf>, %60, %cst_39 [1] : vector<8x8xf32> to vector<8xf32>
      %64 = vector.shape_cast %63 : vector<8xf32> to vector<8x1xf32>
      %65 = arith.maximumf %62, %64 : vector<8x1xf32>
      %66 = arith.subf %62, %65 : vector<8x1xf32>
      %67 = math.exp %66 : vector<8x1xf32>
      %68 = vector.broadcast %65 : vector<8x1xf32> to vector<8x8xf32>
      %69 = arith.subf %60, %68 : vector<8x8xf32>
      %70 = math.exp %69 : vector<8x8xf32>
      %c1_40 = arith.constant 1 : index
      %c0_41 = arith.constant 0 : index
      %c0_42 = arith.constant 0 : index
      %71 = vector.load %arg8[%c1_40, %c0_41, %c0_42] : memref<4x8x1xf32, #tpu.memory_space<vmem>>, vector<1x8x1xf32>
      %72 = vector.shape_cast %71 : vector<1x8x1xf32> to vector<8x1xf32>
      %73 = arith.mulf %67, %72 : vector<8x1xf32>
      %cst_43 = arith.constant dense<0.000000e+00> : vector<8xf32>
      %74 = vector.multi_reduction <add>, %70, %cst_43 [1] : vector<8x8xf32> to vector<8xf32>
      %75 = vector.shape_cast %74 : vector<8xf32> to vector<8x1xf32>
      %76 = arith.addf %73, %75 : vector<8x1xf32>
      %c1_44 = arith.constant 1 : index
      %c0_45 = arith.constant 0 : index
      %c0_46 = arith.constant 0 : index
      %77 = vector.load %arg8[%c1_44, %c0_45, %c0_46] : memref<4x8x1xf32, #tpu.memory_space<vmem>>, vector<1x8x1xf32>
      %78 = vector.shape_cast %77 : vector<1x8x1xf32> to vector<8x1xf32>
      %79 = vector.shape_cast %76 : vector<8x1xf32> to vector<1x8x1xf32>
      tpu.vector_store %arg8[%c1_44, %c0_45, %c0_46], %79 {strides = array<i32>} : memref<4x8x1xf32, #tpu.memory_space<vmem>>, vector<1x8x1xf32>,
      %c1_47 = arith.constant 1 : index
      %c0_48 = arith.constant 0 : index
      %c0_49 = arith.constant 0 : index
      %80 = vector.load %arg9[%c1_47, %c0_48, %c0_49] : memref<4x8x8xf32, #tpu.memory_space<vmem>>, vector<1x8x8xf32>
      %81 = vector.shape_cast %80 : vector<1x8x8xf32> to vector<8x8xf32>
      %82 = vector.broadcast %67 : vector<8x1xf32> to vector<8x8xf32>
      %83 = arith.mulf %82, %81 : vector<8x8xf32>
      %84 = arith.truncf %70 : vector<8x8xf32> to vector<8x8xbf16>
      %85 = vector.extract_strided_slice %17 {offsets = [0, 8], sizes = [8, 8], strides = [1, 1]} : vector<8x32xbf16> to vector<8x8xbf16>
      %cst_50 = arith.constant dense<0.000000e+00> : vector<8x8xf32>
      %86 = tpu.matmul %84, %85, %cst_50 {dimension_numbers = #tpu.dot_dimension_numbers<[1], [0], [0], [1], [0, 0, 1, 1], [], []>} : vector<8x8xbf16>, vector<8x8xbf16>, vector<8x8xf32> -> vector<8x8xf32>
      %87 = arith.addf %83, %86 : vector<8x8xf32>
      %c1_51 = arith.constant 1 : index
      %c0_52 = arith.constant 0 : index
      %c0_53 = arith.constant 0 : index
      %88 = vector.load %arg9[%c1_51, %c0_52, %c0_53] : memref<4x8x8xf32, #tpu.memory_space<vmem>>, vector<1x8x8xf32>
      %89 = vector.shape_cast %88 : vector<1x8x8xf32> to vector<8x8xf32>
      %90 = vector.shape_cast %87 : vector<8x8xf32> to vector<1x8x8xf32>
      tpu.vector_store %arg9[%c1_51, %c0_52, %c0_53], %90 {strides = array<i32>} : memref<4x8x8xf32, #tpu.memory_space<vmem>>, vector<1x8x8xf32>,
      %c1_54 = arith.constant 1 : index
      %c0_55 = arith.constant 0 : index
      %c0_56 = arith.constant 0 : index
      %91 = vector.load %arg7[%c1_54, %c0_55, %c0_56] : memref<4x8x1xf32, #tpu.memory_space<vmem>>, vector<1x8x1xf32>
      %92 = vector.shape_cast %91 : vector<1x8x1xf32> to vector<8x1xf32>
      %93 = vector.shape_cast %65 : vector<8x1xf32> to vector<1x8x1xf32>
      tpu.vector_store %arg7[%c1_54, %c0_55, %c0_56], %93 {strides = array<i32>} : memref<4x8x1xf32, #tpu.memory_space<vmem>>, vector<1x8x1xf32>,
      %94 = vector.extract_strided_slice %13 {offsets = [0, 16], sizes = [8, 8], strides = [1, 1]} : vector<8x32xbf16> to vector<8x8xbf16>
      %95 = vector.extract_strided_slice %15 {offsets = [0, 16], sizes = [8, 8], strides = [1, 1]} : vector<8x32xbf16> to vector<8x8xbf16>
      %cst_57 = arith.constant dense<0.000000e+00> : vector<8x8xf32>
      %96 = tpu.matmul %94, %95, %cst_57 {dimension_numbers = #tpu.dot_dimension_numbers<[1], [1], [0], [0], [0, 0, 1, 0], [], []>} : vector<8x8xbf16>, vector<8x8xbf16>, vector<8x8xf32> -> vector<8x8xf32>
      %cst_58 = arith.constant 0.353553385 : f32
      %97 = vector.broadcast %cst_58 : f32 to vector<8x8xf32>
      %98 = arith.mulf %96, %97 : vector<8x8xf32>
      %c2 = arith.constant 2 : index
      %c0_59 = arith.constant 0 : index
      %c0_60 = arith.constant 0 : index
      %99 = vector.load %arg7[%c2, %c0_59, %c0_60] : memref<4x8x1xf32, #tpu.memory_space<vmem>>, vector<1x8x1xf32>
      %100 = vector.shape_cast %99 : vector<1x8x1xf32> to vector<8x1xf32>
      %cst_61 = arith.constant dense<0xFF800000> : vector<8xf32>
      %101 = vector.multi_reduction <maximumf>, %98, %cst_61 [1] : vector<8x8xf32> to vector<8xf32>
      %102 = vector.shape_cast %101 : vector<8xf32> to vector<8x1xf32>
      %103 = arith.maximumf %100, %102 : vector<8x1xf32>
      %104 = arith.subf %100, %103 : vector<8x1xf32>
      %105 = math.exp %104 : vector<8x1xf32>
      %106 = vector.broadcast %103 : vector<8x1xf32> to vector<8x8xf32>
      %107 = arith.subf %98, %106 : vector<8x8xf32>
      %108 = math.exp %107 : vector<8x8xf32>
      %c2_62 = arith.constant 2 : index
      %c0_63 = arith.constant 0 : index
      %c0_64 = arith.constant 0 : index
      %109 = vector.load %arg8[%c2_62, %c0_63, %c0_64] : memref<4x8x1xf32, #tpu.memory_space<vmem>>, vector<1x8x1xf32>
      %110 = vector.shape_cast %109 : vector<1x8x1xf32> to vector<8x1xf32>
      %111 = arith.mulf %105, %110 : vector<8x1xf32>
      %cst_65 = arith.constant dense<0.000000e+00> : vector<8xf32>
      %112 = vector.multi_reduction <add>, %108, %cst_65 [1] : vector<8x8xf32> to vector<8xf32>
      %113 = vector.shape_cast %112 : vector<8xf32> to vector<8x1xf32>
      %114 = arith.addf %111, %113 : vector<8x1xf32>
      %c2_66 = arith.constant 2 : index
      %c0_67 = arith.constant 0 : index
      %c0_68 = arith.constant 0 : index
      %115 = vector.load %arg8[%c2_66, %c0_67, %c0_68] : memref<4x8x1xf32, #tpu.memory_space<vmem>>, vector<1x8x1xf32>
      %116 = vector.shape_cast %115 : vector<1x8x1xf32> to vector<8x1xf32>
      %117 = vector.shape_cast %114 : vector<8x1xf32> to vector<1x8x1xf32>
      tpu.vector_store %arg8[%c2_66, %c0_67, %c0_68], %117 {strides = array<i32>} : memref<4x8x1xf32, #tpu.memory_space<vmem>>, vector<1x8x1xf32>,
      %c2_69 = arith.constant 2 : index
      %c0_70 = arith.constant 0 : index
      %c0_71 = arith.constant 0 : index
      %118 = vector.load %arg9[%c2_69, %c0_70, %c0_71] : memref<4x8x8xf32, #tpu.memory_space<vmem>>, vector<1x8x8xf32>
      %119 = vector.shape_cast %118 : vector<1x8x8xf32> to vector<8x8xf32>
      %120 = vector.broadcast %105 : vector<8x1xf32> to vector<8x8xf32>
      %121 = arith.mulf %120, %119 : vector<8x8xf32>
      %122 = arith.truncf %108 : vector<8x8xf32> to vector<8x8xbf16>
      %123 = vector.extract_strided_slice %17 {offsets = [0, 16], sizes = [8, 8], strides = [1, 1]} : vector<8x32xbf16> to vector<8x8xbf16>
      %cst_72 = arith.constant dense<0.000000e+00> : vector<8x8xf32>
      %124 = tpu.matmul %122, %123, %cst_72 {dimension_numbers = #tpu.dot_dimension_numbers<[1], [0], [0], [1], [0, 0, 1, 1], [], []>} : vector<8x8xbf16>, vector<8x8xbf16>, vector<8x8xf32> -> vector<8x8xf32>
      %125 = arith.addf %121, %124 : vector<8x8xf32>
      %c2_73 = arith.constant 2 : index
      %c0_74 = arith.constant 0 : index
      %c0_75 = arith.constant 0 : index
      %126 = vector.load %arg9[%c2_73, %c0_74, %c0_75] : memref<4x8x8xf32, #tpu.memory_space<vmem>>, vector<1x8x8xf32>
      %127 = vector.shape_cast %126 : vector<1x8x8xf32> to vector<8x8xf32>
      %128 = vector.shape_cast %125 : vector<8x8xf32> to vector<1x8x8xf32>
      tpu.vector_store %arg9[%c2_73, %c0_74, %c0_75], %128 {strides = array<i32>} : memref<4x8x8xf32, #tpu.memory_space<vmem>>, vector<1x8x8xf32>,
      %c2_76 = arith.constant 2 : index
      %c0_77 = arith.constant 0 : index
      %c0_78 = arith.constant 0 : index
      %129 = vector.load %arg7[%c2_76, %c0_77, %c0_78] : memref<4x8x1xf32, #tpu.memory_space<vmem>>, vector<1x8x1xf32>
      %130 = vector.shape_cast %129 : vector<1x8x1xf32> to vector<8x1xf32>
      %131 = vector.shape_cast %103 : vector<8x1xf32> to vector<1x8x1xf32>
      tpu.vector_store %arg7[%c2_76, %c0_77, %c0_78], %131 {strides = array<i32>} : memref<4x8x1xf32, #tpu.memory_space<vmem>>, vector<1x8x1xf32>,
      %132 = vector.extract_strided_slice %13 {offsets = [0, 24], sizes = [8, 8], strides = [1, 1]} : vector<8x32xbf16> to vector<8x8xbf16>
      %133 = vector.extract_strided_slice %15 {offsets = [0, 24], sizes = [8, 8], strides = [1, 1]} : vector<8x32xbf16> to vector<8x8xbf16>
      %cst_79 = arith.constant dense<0.000000e+00> : vector<8x8xf32>
      %134 = tpu.matmul %132, %133, %cst_79 {dimension_numbers = #tpu.dot_dimension_numbers<[1], [1], [0], [0], [0, 0, 1, 0], [], []>} : vector<8x8xbf16>, vector<8x8xbf16>, vector<8x8xf32> -> vector<8x8xf32>
      %cst_80 = arith.constant 0.353553385 : f32
      %135 = vector.broadcast %cst_80 : f32 to vector<8x8xf32>
      %136 = arith.mulf %134, %135 : vector<8x8xf32>
      %c3 = arith.constant 3 : index
      %c0_81 = arith.constant 0 : index
      %c0_82 = arith.constant 0 : index
      %137 = vector.load %arg7[%c3, %c0_81, %c0_82] : memref<4x8x1xf32, #tpu.memory_space<vmem>>, vector<1x8x1xf32>
      %138 = vector.shape_cast %137 : vector<1x8x1xf32> to vector<8x1xf32>
      %cst_83 = arith.constant dense<0xFF800000> : vector<8xf32>
      %139 = vector.multi_reduction <maximumf>, %136, %cst_83 [1] : vector<8x8xf32> to vector<8xf32>
      %140 = vector.shape_cast %139 : vector<8xf32> to vector<8x1xf32>
      %141 = arith.maximumf %138, %140 : vector<8x1xf32>
      %142 = arith.subf %138, %141 : vector<8x1xf32>
      %143 = math.exp %142 : vector<8x1xf32>
      %144 = vector.broadcast %141 : vector<8x1xf32> to vector<8x8xf32>
      %145 = arith.subf %136, %144 : vector<8x8xf32>
      %146 = math.exp %145 : vector<8x8xf32>
      %c3_84 = arith.constant 3 : index
      %c0_85 = arith.constant 0 : index
      %c0_86 = arith.constant 0 : index
      %147 = vector.load %arg8[%c3_84, %c0_85, %c0_86] : memref<4x8x1xf32, #tpu.memory_space<vmem>>, vector<1x8x1xf32>
      %148 = vector.shape_cast %147 : vector<1x8x1xf32> to vector<8x1xf32>
      %149 = arith.mulf %143, %148 : vector<8x1xf32>
      %cst_87 = arith.constant dense<0.000000e+00> : vector<8xf32>
      %150 = vector.multi_reduction <add>, %146, %cst_87 [1] : vector<8x8xf32> to vector<8xf32>
      %151 = vector.shape_cast %150 : vector<8xf32> to vector<8x1xf32>
      %152 = arith.addf %149, %151 : vector<8x1xf32>
      %c3_88 = arith.constant 3 : index
      %c0_89 = arith.constant 0 : index
      %c0_90 = arith.constant 0 : index
      %153 = vector.load %arg8[%c3_88, %c0_89, %c0_90] : memref<4x8x1xf32, #tpu.memory_space<vmem>>, vector<1x8x1xf32>
      %154 = vector.shape_cast %153 : vector<1x8x1xf32> to vector<8x1xf32>
      %155 = vector.shape_cast %152 : vector<8x1xf32> to vector<1x8x1xf32>
      tpu.vector_store %arg8[%c3_88, %c0_89, %c0_90], %155 {strides = array<i32>} : memref<4x8x1xf32, #tpu.memory_space<vmem>>, vector<1x8x1xf32>,
      %c3_91 = arith.constant 3 : index
      %c0_92 = arith.constant 0 : index
      %c0_93 = arith.constant 0 : index
      %156 = vector.load %arg9[%c3_91, %c0_92, %c0_93] : memref<4x8x8xf32, #tpu.memory_space<vmem>>, vector<1x8x8xf32>
      %157 = vector.shape_cast %156 : vector<1x8x8xf32> to vector<8x8xf32>
      %158 = vector.broadcast %143 : vector<8x1xf32> to vector<8x8xf32>
      %159 = arith.mulf %158, %157 : vector<8x8xf32>
      %160 = arith.truncf %146 : vector<8x8xf32> to vector<8x8xbf16>
      %161 = vector.extract_strided_slice %17 {offsets = [0, 24], sizes = [8, 8], strides = [1, 1]} : vector<8x32xbf16> to vector<8x8xbf16>
      %cst_94 = arith.constant dense<0.000000e+00> : vector<8x8xf32>
      %162 = tpu.matmul %160, %161, %cst_94 {dimension_numbers = #tpu.dot_dimension_numbers<[1], [0], [0], [1], [0, 0, 1, 1], [], []>} : vector<8x8xbf16>, vector<8x8xbf16>, vector<8x8xf32> -> vector<8x8xf32>
      %163 = arith.addf %159, %162 : vector<8x8xf32>
      %c3_95 = arith.constant 3 : index
      %c0_96 = arith.constant 0 : index
      %c0_97 = arith.constant 0 : index
      %164 = vector.load %arg9[%c3_95, %c0_96, %c0_97] : memref<4x8x8xf32, #tpu.memory_space<vmem>>, vector<1x8x8xf32>
      %165 = vector.shape_cast %164 : vector<1x8x8xf32> to vector<8x8xf32>
      %166 = vector.shape_cast %163 : vector<8x8xf32> to vector<1x8x8xf32>
      tpu.vector_store %arg9[%c3_95, %c0_96, %c0_97], %166 {strides = array<i32>} : memref<4x8x8xf32, #tpu.memory_space<vmem>>, vector<1x8x8xf32>,
      %c3_98 = arith.constant 3 : index
      %c0_99 = arith.constant 0 : index
      %c0_100 = arith.constant 0 : index
      %167 = vector.load %arg7[%c3_98, %c0_99, %c0_100] : memref<4x8x1xf32, #tpu.memory_space<vmem>>, vector<1x8x1xf32>
      %168 = vector.shape_cast %167 : vector<1x8x1xf32> to vector<8x1xf32>
      %169 = vector.shape_cast %141 : vector<8x1xf32> to vector<1x8x1xf32>
      tpu.vector_store %arg7[%c3_98, %c0_99, %c0_100], %169 {strides = array<i32>} : memref<4x8x1xf32, #tpu.memory_space<vmem>>, vector<1x8x1xf32>,
    } else {
    }
    %6 = arith.cmpi eq, %arg2, %arg1 : i32
    %7 = arith.extui %6 : i1 to i32
    %c0_i32_2 = arith.constant 0 : i32
    %8 = arith.cmpi ne, %7, %c0_i32_2 : i32
    scf.if %8 {
      %c0 = arith.constant 0 : index
      %c0_5 = arith.constant 0 : index
      %c0_6 = arith.constant 0 : index
      %12 = vector.load %arg3[%c0, %c0_5, %c0_6] : memref<1x8x32xbf16, #tpu.memory_space<vmem>>, vector<1x8x32xbf16>
      %13 = vector.shape_cast %12 : vector<1x8x32xbf16> to vector<8x32xbf16>
      %c0_7 = arith.constant 0 : index
      %c0_8 = arith.constant 0 : index
      %c0_9 = arith.constant 0 : index
      %14 = vector.load %arg4[%c0_7, %c0_8, %c0_9] : memref<1x8x32xbf16, #tpu.memory_space<vmem>>, vector<1x8x32xbf16>
      %15 = vector.shape_cast %14 : vector<1x8x32xbf16> to vector<8x32xbf16>
      %c0_10 = arith.constant 0 : index
      %c0_11 = arith.constant 0 : index
      %c0_12 = arith.constant 0 : index
      %16 = vector.load %arg5[%c0_10, %c0_11, %c0_12] : memref<1x8x32xbf16, #tpu.memory_space<vmem>>, vector<1x8x32xbf16>
      %17 = vector.shape_cast %16 : vector<1x8x32xbf16> to vector<8x32xbf16>
      %c8_i32 = arith.constant 8 : i32
      %18 = arith.muli %arg1, %c8_i32 : i32
      %19 = tpu.iota {dimensions = array<i32: 0>} : vector<8x8xi32>
      %20 = vector.broadcast %18 : i32 to vector<8x8xi32>
      %21 = arith.addi %20, %19 : vector<8x8xi32>
      %c8_i32_13 = arith.constant 8 : i32
      %22 = arith.muli %arg2, %c8_i32_13 : i32
      %23 = tpu.iota {dimensions = array<i32: 1>} : vector<8x8xi32>
      %24 = vector.broadcast %22 : i32 to vector<8x8xi32>
      %25 = arith.addi %24, %23 : vector<8x8xi32>
      %26 = arith.cmpi sge, %21, %25 : vector<8x8xi32>
      %27 = vector.extract_strided_slice %13 {offsets = [0, 0], sizes = [8, 8], strides = [1, 1]} : vector<8x32xbf16> to vector<8x8xbf16>
      %28 = vector.extract_strided_slice %15 {offsets = [0, 0], sizes = [8, 8], strides = [1, 1]} : vector<8x32xbf16> to vector<8x8xbf16>
      %cst = arith.constant dense<0.000000e+00> : vector<8x8xf32>
      %29 = tpu.matmul %27, %28, %cst {dimension_numbers = #tpu.dot_dimension_numbers<[1], [1], [0], [0], [0, 0, 1, 0], [], []>} : vector<8x8xbf16>, vector<8x8xbf16>, vector<8x8xf32> -> vector<8x8xf32>
      %cst_14 = arith.constant 0.353553385 : f32
      %30 = vector.broadcast %cst_14 : f32 to vector<8x8xf32>
      %31 = arith.mulf %29, %30 : vector<8x8xf32>
      %cst_15 = arith.constant -1.000000e+30 : f32
      %32 = vector.broadcast %cst_15 : f32 to vector<8x8xf32>
      %33 = arith.select %26, %31, %32 : vector<8x8xi1>, vector<8x8xf32>
      %c0_16 = arith.constant 0 : index
      %c0_17 = arith.constant 0 : index
      %c0_18 = arith.constant 0 : index
      %34 = vector.load %arg7[%c0_16, %c0_17, %c0_18] : memref<4x8x1xf32, #tpu.memory_space<vmem>>, vector<1x8x1xf32>
      %35 = vector.shape_cast %34 : vector<1x8x1xf32> to vector<8x1xf32>
      %cst_19 = arith.constant dense<0xFF800000> : vector<8xf32>
      %36 = vector.multi_reduction <maximumf>, %33, %cst_19 [1] : vector<8x8xf32> to vector<8xf32>
      %37 = vector.shape_cast %36 : vector<8xf32> to vector<8x1xf32>
      %38 = arith.maximumf %35, %37 : vector<8x1xf32>
      %39 = arith.subf %35, %38 : vector<8x1xf32>
      %40 = math.exp %39 : vector<8x1xf32>
      %41 = vector.broadcast %38 : vector<8x1xf32> to vector<8x8xf32>
      %42 = arith.subf %33, %41 : vector<8x8xf32>
      %43 = math.exp %42 : vector<8x8xf32>
      %c0_20 = arith.constant 0 : index
      %c0_21 = arith.constant 0 : index
      %c0_22 = arith.constant 0 : index
      %44 = vector.load %arg8[%c0_20, %c0_21, %c0_22] : memref<4x8x1xf32, #tpu.memory_space<vmem>>, vector<1x8x1xf32>
      %45 = vector.shape_cast %44 : vector<1x8x1xf32> to vector<8x1xf32>
      %46 = arith.mulf %40, %45 : vector<8x1xf32>
      %cst_23 = arith.constant dense<0.000000e+00> : vector<8xf32>
      %47 = vector.multi_reduction <add>, %43, %cst_23 [1] : vector<8x8xf32> to vector<8xf32>
      %48 = vector.shape_cast %47 : vector<8xf32> to vector<8x1xf32>
      %49 = arith.addf %46, %48 : vector<8x1xf32>
      %c0_24 = arith.constant 0 : index
      %c0_25 = arith.constant 0 : index
      %c0_26 = arith.constant 0 : index
      %50 = vector.load %arg8[%c0_24, %c0_25, %c0_26] : memref<4x8x1xf32, #tpu.memory_space<vmem>>, vector<1x8x1xf32>
      %51 = vector.shape_cast %50 : vector<1x8x1xf32> to vector<8x1xf32>
      %52 = vector.shape_cast %49 : vector<8x1xf32> to vector<1x8x1xf32>
      tpu.vector_store %arg8[%c0_24, %c0_25, %c0_26], %52 {strides = array<i32>} : memref<4x8x1xf32, #tpu.memory_space<vmem>>, vector<1x8x1xf32>,
      %c0_27 = arith.constant 0 : index
      %c0_28 = arith.constant 0 : index
      %c0_29 = arith.constant 0 : index
      %53 = vector.load %arg9[%c0_27, %c0_28, %c0_29] : memref<4x8x8xf32, #tpu.memory_space<vmem>>, vector<1x8x8xf32>
      %54 = vector.shape_cast %53 : vector<1x8x8xf32> to vector<8x8xf32>
      %55 = vector.broadcast %40 : vector<8x1xf32> to vector<8x8xf32>
      %56 = arith.mulf %55, %54 : vector<8x8xf32>
      %57 = arith.truncf %43 : vector<8x8xf32> to vector<8x8xbf16>
      %58 = vector.extract_strided_slice %17 {offsets = [0, 0], sizes = [8, 8], strides = [1, 1]} : vector<8x32xbf16> to vector<8x8xbf16>
      %cst_30 = arith.constant dense<0.000000e+00> : vector<8x8xf32>
      %59 = tpu.matmul %57, %58, %cst_30 {dimension_numbers = #tpu.dot_dimension_numbers<[1], [0], [0], [1], [0, 0, 1, 1], [], []>} : vector<8x8xbf16>, vector<8x8xbf16>, vector<8x8xf32> -> vector<8x8xf32>
      %60 = arith.addf %56, %59 : vector<8x8xf32>
      %c0_31 = arith.constant 0 : index
      %c0_32 = arith.constant 0 : index
      %c0_33 = arith.constant 0 : index
      %61 = vector.load %arg9[%c0_31, %c0_32, %c0_33] : memref<4x8x8xf32, #tpu.memory_space<vmem>>, vector<1x8x8xf32>
      %62 = vector.shape_cast %61 : vector<1x8x8xf32> to vector<8x8xf32>
      %63 = vector.shape_cast %60 : vector<8x8xf32> to vector<1x8x8xf32>
      tpu.vector_store %arg9[%c0_31, %c0_32, %c0_33], %63 {strides = array<i32>} : memref<4x8x8xf32, #tpu.memory_space<vmem>>, vector<1x8x8xf32>,
      %c0_34 = arith.constant 0 : index
      %c0_35 = arith.constant 0 : index
      %c0_36 = arith.constant 0 : index
      %64 = vector.load %arg7[%c0_34, %c0_35, %c0_36] : memref<4x8x1xf32, #tpu.memory_space<vmem>>, vector<1x8x1xf32>
      %65 = vector.shape_cast %64 : vector<1x8x1xf32> to vector<8x1xf32>
      %66 = vector.shape_cast %38 : vector<8x1xf32> to vector<1x8x1xf32>
      tpu.vector_store %arg7[%c0_34, %c0_35, %c0_36], %66 {strides = array<i32>} : memref<4x8x1xf32, #tpu.memory_space<vmem>>, vector<1x8x1xf32>,
      %67 = vector.extract_strided_slice %13 {offsets = [0, 8], sizes = [8, 8], strides = [1, 1]} : vector<8x32xbf16> to vector<8x8xbf16>
      %68 = vector.extract_strided_slice %15 {offsets = [0, 8], sizes = [8, 8], strides = [1, 1]} : vector<8x32xbf16> to vector<8x8xbf16>
      %cst_37 = arith.constant dense<0.000000e+00> : vector<8x8xf32>
      %69 = tpu.matmul %67, %68, %cst_37 {dimension_numbers = #tpu.dot_dimension_numbers<[1], [1], [0], [0], [0, 0, 1, 0], [], []>} : vector<8x8xbf16>, vector<8x8xbf16>, vector<8x8xf32> -> vector<8x8xf32>
      %cst_38 = arith.constant 0.353553385 : f32
      %70 = vector.broadcast %cst_38 : f32 to vector<8x8xf32>
      %71 = arith.mulf %69, %70 : vector<8x8xf32>
      %cst_39 = arith.constant -1.000000e+30 : f32
      %72 = vector.broadcast %cst_39 : f32 to vector<8x8xf32>
      %73 = arith.select %26, %71, %72 : vector<8x8xi1>, vector<8x8xf32>
      %c1 = arith.constant 1 : index
      %c0_40 = arith.constant 0 : index
      %c0_41 = arith.constant 0 : index
      %74 = vector.load %arg7[%c1, %c0_40, %c0_41] : memref<4x8x1xf32, #tpu.memory_space<vmem>>, vector<1x8x1xf32>
      %75 = vector.shape_cast %74 : vector<1x8x1xf32> to vector<8x1xf32>
      %cst_42 = arith.constant dense<0xFF800000> : vector<8xf32>
      %76 = vector.multi_reduction <maximumf>, %73, %cst_42 [1] : vector<8x8xf32> to vector<8xf32>
      %77 = vector.shape_cast %76 : vector<8xf32> to vector<8x1xf32>
      %78 = arith.maximumf %75, %77 : vector<8x1xf32>
      %79 = arith.subf %75, %78 : vector<8x1xf32>
      %80 = math.exp %79 : vector<8x1xf32>
      %81 = vector.broadcast %78 : vector<8x1xf32> to vector<8x8xf32>
      %82 = arith.subf %73, %81 : vector<8x8xf32>
      %83 = math.exp %82 : vector<8x8xf32>
      %c1_43 = arith.constant 1 : index
      %c0_44 = arith.constant 0 : index
      %c0_45 = arith.constant 0 : index
      %84 = vector.load %arg8[%c1_43, %c0_44, %c0_45] : memref<4x8x1xf32, #tpu.memory_space<vmem>>, vector<1x8x1xf32>
      %85 = vector.shape_cast %84 : vector<1x8x1xf32> to vector<8x1xf32>
      %86 = arith.mulf %80, %85 : vector<8x1xf32>
      %cst_46 = arith.constant dense<0.000000e+00> : vector<8xf32>
      %87 = vector.multi_reduction <add>, %83, %cst_46 [1] : vector<8x8xf32> to vector<8xf32>
      %88 = vector.shape_cast %87 : vector<8xf32> to vector<8x1xf32>
      %89 = arith.addf %86, %88 : vector<8x1xf32>
      %c1_47 = arith.constant 1 : index
      %c0_48 = arith.constant 0 : index
      %c0_49 = arith.constant 0 : index
      %90 = vector.load %arg8[%c1_47, %c0_48, %c0_49] : memref<4x8x1xf32, #tpu.memory_space<vmem>>, vector<1x8x1xf32>
      %91 = vector.shape_cast %90 : vector<1x8x1xf32> to vector<8x1xf32>
      %92 = vector.shape_cast %89 : vector<8x1xf32> to vector<1x8x1xf32>
      tpu.vector_store %arg8[%c1_47, %c0_48, %c0_49], %92 {strides = array<i32>} : memref<4x8x1xf32, #tpu.memory_space<vmem>>, vector<1x8x1xf32>,
      %c1_50 = arith.constant 1 : index
      %c0_51 = arith.constant 0 : index
      %c0_52 = arith.constant 0 : index
      %93 = vector.load %arg9[%c1_50, %c0_51, %c0_52] : memref<4x8x8xf32, #tpu.memory_space<vmem>>, vector<1x8x8xf32>
      %94 = vector.shape_cast %93 : vector<1x8x8xf32> to vector<8x8xf32>
      %95 = vector.broadcast %80 : vector<8x1xf32> to vector<8x8xf32>
      %96 = arith.mulf %95, %94 : vector<8x8xf32>
      %97 = arith.truncf %83 : vector<8x8xf32> to vector<8x8xbf16>
      %98 = vector.extract_strided_slice %17 {offsets = [0, 8], sizes = [8, 8], strides = [1, 1]} : vector<8x32xbf16> to vector<8x8xbf16>
      %cst_53 = arith.constant dense<0.000000e+00> : vector<8x8xf32>
      %99 = tpu.matmul %97, %98, %cst_53 {dimension_numbers = #tpu.dot_dimension_numbers<[1], [0], [0], [1], [0, 0, 1, 1], [], []>} : vector<8x8xbf16>, vector<8x8xbf16>, vector<8x8xf32> -> vector<8x8xf32>
      %100 = arith.addf %96, %99 : vector<8x8xf32>
      %c1_54 = arith.constant 1 : index
      %c0_55 = arith.constant 0 : index
      %c0_56 = arith.constant 0 : index
      %101 = vector.load %arg9[%c1_54, %c0_55, %c0_56] : memref<4x8x8xf32, #tpu.memory_space<vmem>>, vector<1x8x8xf32>
      %102 = vector.shape_cast %101 : vector<1x8x8xf32> to vector<8x8xf32>
      %103 = vector.shape_cast %100 : vector<8x8xf32> to vector<1x8x8xf32>
      tpu.vector_store %arg9[%c1_54, %c0_55, %c0_56], %103 {strides = array<i32>} : memref<4x8x8xf32, #tpu.memory_space<vmem>>, vector<1x8x8xf32>,
      %c1_57 = arith.constant 1 : index
      %c0_58 = arith.constant 0 : index
      %c0_59 = arith.constant 0 : index
      %104 = vector.load %arg7[%c1_57, %c0_58, %c0_59] : memref<4x8x1xf32, #tpu.memory_space<vmem>>, vector<1x8x1xf32>
      %105 = vector.shape_cast %104 : vector<1x8x1xf32> to vector<8x1xf32>
      %106 = vector.shape_cast %78 : vector<8x1xf32> to vector<1x8x1xf32>
      tpu.vector_store %arg7[%c1_57, %c0_58, %c0_59], %106 {strides = array<i32>} : memref<4x8x1xf32, #tpu.memory_space<vmem>>, vector<1x8x1xf32>,
      %107 = vector.extract_strided_slice %13 {offsets = [0, 16], sizes = [8, 8], strides = [1, 1]} : vector<8x32xbf16> to vector<8x8xbf16>
      %108 = vector.extract_strided_slice %15 {offsets = [0, 16], sizes = [8, 8], strides = [1, 1]} : vector<8x32xbf16> to vector<8x8xbf16>
      %cst_60 = arith.constant dense<0.000000e+00> : vector<8x8xf32>
      %109 = tpu.matmul %107, %108, %cst_60 {dimension_numbers = #tpu.dot_dimension_numbers<[1], [1], [0], [0], [0, 0, 1, 0], [], []>} : vector<8x8xbf16>, vector<8x8xbf16>, vector<8x8xf32> -> vector<8x8xf32>
      %cst_61 = arith.constant 0.353553385 : f32
      %110 = vector.broadcast %cst_61 : f32 to vector<8x8xf32>
      %111 = arith.mulf %109, %110 : vector<8x8xf32>
      %cst_62 = arith.constant -1.000000e+30 : f32
      %112 = vector.broadcast %cst_62 : f32 to vector<8x8xf32>
      %113 = arith.select %26, %111, %112 : vector<8x8xi1>, vector<8x8xf32>
      %c2 = arith.constant 2 : index
      %c0_63 = arith.constant 0 : index
      %c0_64 = arith.constant 0 : index
      %114 = vector.load %arg7[%c2, %c0_63, %c0_64] : memref<4x8x1xf32, #tpu.memory_space<vmem>>, vector<1x8x1xf32>
      %115 = vector.shape_cast %114 : vector<1x8x1xf32> to vector<8x1xf32>
      %cst_65 = arith.constant dense<0xFF800000> : vector<8xf32>
      %116 = vector.multi_reduction <maximumf>, %113, %cst_65 [1] : vector<8x8xf32> to vector<8xf32>
      %117 = vector.shape_cast %116 : vector<8xf32> to vector<8x1xf32>
      %118 = arith.maximumf %115, %117 : vector<8x1xf32>
      %119 = arith.subf %115, %118 : vector<8x1xf32>
      %120 = math.exp %119 : vector<8x1xf32>
      %121 = vector.broadcast %118 : vector<8x1xf32> to vector<8x8xf32>
      %122 = arith.subf %113, %121 : vector<8x8xf32>
      %123 = math.exp %122 : vector<8x8xf32>
      %c2_66 = arith.constant 2 : index
      %c0_67 = arith.constant 0 : index
      %c0_68 = arith.constant 0 : index
      %124 = vector.load %arg8[%c2_66, %c0_67, %c0_68] : memref<4x8x1xf32, #tpu.memory_space<vmem>>, vector<1x8x1xf32>
      %125 = vector.shape_cast %124 : vector<1x8x1xf32> to vector<8x1xf32>
      %126 = arith.mulf %120, %125 : vector<8x1xf32>
      %cst_69 = arith.constant dense<0.000000e+00> : vector<8xf32>
      %127 = vector.multi_reduction <add>, %123, %cst_69 [1] : vector<8x8xf32> to vector<8xf32>
      %128 = vector.shape_cast %127 : vector<8xf32> to vector<8x1xf32>
      %129 = arith.addf %126, %128 : vector<8x1xf32>
      %c2_70 = arith.constant 2 : index
      %c0_71 = arith.constant 0 : index
      %c0_72 = arith.constant 0 : index
      %130 = vector.load %arg8[%c2_70, %c0_71, %c0_72] : memref<4x8x1xf32, #tpu.memory_space<vmem>>, vector<1x8x1xf32>
      %131 = vector.shape_cast %130 : vector<1x8x1xf32> to vector<8x1xf32>
      %132 = vector.shape_cast %129 : vector<8x1xf32> to vector<1x8x1xf32>
      tpu.vector_store %arg8[%c2_70, %c0_71, %c0_72], %132 {strides = array<i32>} : memref<4x8x1xf32, #tpu.memory_space<vmem>>, vector<1x8x1xf32>,
      %c2_73 = arith.constant 2 : index
      %c0_74 = arith.constant 0 : index
      %c0_75 = arith.constant 0 : index
      %133 = vector.load %arg9[%c2_73, %c0_74, %c0_75] : memref<4x8x8xf32, #tpu.memory_space<vmem>>, vector<1x8x8xf32>
      %134 = vector.shape_cast %133 : vector<1x8x8xf32> to vector<8x8xf32>
      %135 = vector.broadcast %120 : vector<8x1xf32> to vector<8x8xf32>
      %136 = arith.mulf %135, %134 : vector<8x8xf32>
      %137 = arith.truncf %123 : vector<8x8xf32> to vector<8x8xbf16>
      %138 = vector.extract_strided_slice %17 {offsets = [0, 16], sizes = [8, 8], strides = [1, 1]} : vector<8x32xbf16> to vector<8x8xbf16>
      %cst_76 = arith.constant dense<0.000000e+00> : vector<8x8xf32>
      %139 = tpu.matmul %137, %138, %cst_76 {dimension_numbers = #tpu.dot_dimension_numbers<[1], [0], [0], [1], [0, 0, 1, 1], [], []>} : vector<8x8xbf16>, vector<8x8xbf16>, vector<8x8xf32> -> vector<8x8xf32>
      %140 = arith.addf %136, %139 : vector<8x8xf32>
      %c2_77 = arith.constant 2 : index
      %c0_78 = arith.constant 0 : index
      %c0_79 = arith.constant 0 : index
      %141 = vector.load %arg9[%c2_77, %c0_78, %c0_79] : memref<4x8x8xf32, #tpu.memory_space<vmem>>, vector<1x8x8xf32>
      %142 = vector.shape_cast %141 : vector<1x8x8xf32> to vector<8x8xf32>
      %143 = vector.shape_cast %140 : vector<8x8xf32> to vector<1x8x8xf32>
      tpu.vector_store %arg9[%c2_77, %c0_78, %c0_79], %143 {strides = array<i32>} : memref<4x8x8xf32, #tpu.memory_space<vmem>>, vector<1x8x8xf32>,
      %c2_80 = arith.constant 2 : index
      %c0_81 = arith.constant 0 : index
      %c0_82 = arith.constant 0 : index
      %144 = vector.load %arg7[%c2_80, %c0_81, %c0_82] : memref<4x8x1xf32, #tpu.memory_space<vmem>>, vector<1x8x1xf32>
      %145 = vector.shape_cast %144 : vector<1x8x1xf32> to vector<8x1xf32>
      %146 = vector.shape_cast %118 : vector<8x1xf32> to vector<1x8x1xf32>
      tpu.vector_store %arg7[%c2_80, %c0_81, %c0_82], %146 {strides = array<i32>} : memref<4x8x1xf32, #tpu.memory_space<vmem>>, vector<1x8x1xf32>,
      %147 = vector.extract_strided_slice %13 {offsets = [0, 24], sizes = [8, 8], strides = [1, 1]} : vector<8x32xbf16> to vector<8x8xbf16>
      %148 = vector.extract_strided_slice %15 {offsets = [0, 24], sizes = [8, 8], strides = [1, 1]} : vector<8x32xbf16> to vector<8x8xbf16>
      %cst_83 = arith.constant dense<0.000000e+00> : vector<8x8xf32>
      %149 = tpu.matmul %147, %148, %cst_83 {dimension_numbers = #tpu.dot_dimension_numbers<[1], [1], [0], [0], [0, 0, 1, 0], [], []>} : vector<8x8xbf16>, vector<8x8xbf16>, vector<8x8xf32> -> vector<8x8xf32>
      %cst_84 = arith.constant 0.353553385 : f32
      %150 = vector.broadcast %cst_84 : f32 to vector<8x8xf32>
      %151 = arith.mulf %149, %150 : vector<8x8xf32>
      %cst_85 = arith.constant -1.000000e+30 : f32
      %152 = vector.broadcast %cst_85 : f32 to vector<8x8xf32>
      %153 = arith.select %26, %151, %152 : vector<8x8xi1>, vector<8x8xf32>
      %c3 = arith.constant 3 : index
      %c0_86 = arith.constant 0 : index
      %c0_87 = arith.constant 0 : index
      %154 = vector.load %arg7[%c3, %c0_86, %c0_87] : memref<4x8x1xf32, #tpu.memory_space<vmem>>, vector<1x8x1xf32>
      %155 = vector.shape_cast %154 : vector<1x8x1xf32> to vector<8x1xf32>
      %cst_88 = arith.constant dense<0xFF800000> : vector<8xf32>
      %156 = vector.multi_reduction <maximumf>, %153, %cst_88 [1] : vector<8x8xf32> to vector<8xf32>
      %157 = vector.shape_cast %156 : vector<8xf32> to vector<8x1xf32>
      %158 = arith.maximumf %155, %157 : vector<8x1xf32>
      %159 = arith.subf %155, %158 : vector<8x1xf32>
      %160 = math.exp %159 : vector<8x1xf32>
      %161 = vector.broadcast %158 : vector<8x1xf32> to vector<8x8xf32>
      %162 = arith.subf %153, %161 : vector<8x8xf32>
      %163 = math.exp %162 : vector<8x8xf32>
      %c3_89 = arith.constant 3 : index
      %c0_90 = arith.constant 0 : index
      %c0_91 = arith.constant 0 : index
      %164 = vector.load %arg8[%c3_89, %c0_90, %c0_91] : memref<4x8x1xf32, #tpu.memory_space<vmem>>, vector<1x8x1xf32>
      %165 = vector.shape_cast %164 : vector<1x8x1xf32> to vector<8x1xf32>
      %166 = arith.mulf %160, %165 : vector<8x1xf32>
      %cst_92 = arith.constant dense<0.000000e+00> : vector<8xf32>
      %167 = vector.multi_reduction <add>, %163, %cst_92 [1] : vector<8x8xf32> to vector<8xf32>
      %168 = vector.shape_cast %167 : vector<8xf32> to vector<8x1xf32>
      %169 = arith.addf %166, %168 : vector<8x1xf32>
      %c3_93 = arith.constant 3 : index
      %c0_94 = arith.constant 0 : index
      %c0_95 = arith.constant 0 : index
      %170 = vector.load %arg8[%c3_93, %c0_94, %c0_95] : memref<4x8x1xf32, #tpu.memory_space<vmem>>, vector<1x8x1xf32>
      %171 = vector.shape_cast %170 : vector<1x8x1xf32> to vector<8x1xf32>
      %172 = vector.shape_cast %169 : vector<8x1xf32> to vector<1x8x1xf32>
      tpu.vector_store %arg8[%c3_93, %c0_94, %c0_95], %172 {strides = array<i32>} : memref<4x8x1xf32, #tpu.memory_space<vmem>>, vector<1x8x1xf32>,
      %c3_96 = arith.constant 3 : index
      %c0_97 = arith.constant 0 : index
      %c0_98 = arith.constant 0 : index
      %173 = vector.load %arg9[%c3_96, %c0_97, %c0_98] : memref<4x8x8xf32, #tpu.memory_space<vmem>>, vector<1x8x8xf32>
      %174 = vector.shape_cast %173 : vector<1x8x8xf32> to vector<8x8xf32>
      %175 = vector.broadcast %160 : vector<8x1xf32> to vector<8x8xf32>
      %176 = arith.mulf %175, %174 : vector<8x8xf32>
      %177 = arith.truncf %163 : vector<8x8xf32> to vector<8x8xbf16>
      %178 = vector.extract_strided_slice %17 {offsets = [0, 24], sizes = [8, 8], strides = [1, 1]} : vector<8x32xbf16> to vector<8x8xbf16>
      %cst_99 = arith.constant dense<0.000000e+00> : vector<8x8xf32>
      %179 = tpu.matmul %177, %178, %cst_99 {dimension_numbers = #tpu.dot_dimension_numbers<[1], [0], [0], [1], [0, 0, 1, 1], [], []>} : vector<8x8xbf16>, vector<8x8xbf16>, vector<8x8xf32> -> vector<8x8xf32>
      %180 = arith.addf %176, %179 : vector<8x8xf32>
      %c3_100 = arith.constant 3 : index
      %c0_101 = arith.constant 0 : index
      %c0_102 = arith.constant 0 : index
      %181 = vector.load %arg9[%c3_100, %c0_101, %c0_102] : memref<4x8x8xf32, #tpu.memory_space<vmem>>, vector<1x8x8xf32>
      %182 = vector.shape_cast %181 : vector<1x8x8xf32> to vector<8x8xf32>
      %183 = vector.shape_cast %180 : vector<8x8xf32> to vector<1x8x8xf32>
      tpu.vector_store %arg9[%c3_100, %c0_101, %c0_102], %183 {strides = array<i32>} : memref<4x8x8xf32, #tpu.memory_space<vmem>>, vector<1x8x8xf32>,
      %c3_103 = arith.constant 3 : index
      %c0_104 = arith.constant 0 : index
      %c0_105 = arith.constant 0 : index
      %184 = vector.load %arg7[%c3_103, %c0_104, %c0_105] : memref<4x8x1xf32, #tpu.memory_space<vmem>>, vector<1x8x1xf32>
      %185 = vector.shape_cast %184 : vector<1x8x1xf32> to vector<8x1xf32>
      %186 = vector.shape_cast %158 : vector<8x1xf32> to vector<1x8x1xf32>
      tpu.vector_store %arg7[%c3_103, %c0_104, %c0_105], %186 {strides = array<i32>} : memref<4x8x1xf32, #tpu.memory_space<vmem>>, vector<1x8x1xf32>,
    } else {
    }
    %c0_i32_3 = arith.constant 0 : i32
    %9 = arith.cmpi eq, %arg2, %c0_i32_3 : i32
    %10 = arith.extui %9 : i1 to i32
    %c0_i32_4 = arith.constant 0 : i32
    %11 = arith.cmpi ne, %10, %c0_i32_4 : i32
    scf.if %11 {
      %c0 = arith.constant 0 : index
      %c0_5 = arith.constant 0 : index
      %c0_6 = arith.constant 0 : index
      %12 = vector.load %arg8[%c0, %c0_5, %c0_6] : memref<4x8x1xf32, #tpu.memory_space<vmem>>, vector<1x8x1xf32>
      %13 = vector.shape_cast %12 : vector<1x8x1xf32> to vector<8x1xf32>
      %14 = tpu.reciprocal %13 {approx = true} : vector<8x1xf32> -> vector<8x1xf32>
      %c0_7 = arith.constant 0 : index
      %c0_8 = arith.constant 0 : index
      %c0_9 = arith.constant 0 : index
      %15 = vector.load %arg9[%c0_7, %c0_8, %c0_9] : memref<4x8x8xf32, #tpu.memory_space<vmem>>, vector<1x8x8xf32>
      %16 = vector.shape_cast %15 : vector<1x8x8xf32> to vector<8x8xf32>
      %17 = vector.broadcast %14 : vector<8x1xf32> to vector<8x8xf32>
      %18 = arith.mulf %16, %17 : vector<8x8xf32>
      %c1 = arith.constant 1 : index
      %c0_10 = arith.constant 0 : index
      %c0_11 = arith.constant 0 : index
      %19 = vector.load %arg8[%c1, %c0_10, %c0_11] : memref<4x8x1xf32, #tpu.memory_space<vmem>>, vector<1x8x1xf32>
      %20 = vector.shape_cast %19 : vector<1x8x1xf32> to vector<8x1xf32>
      %21 = tpu.reciprocal %20 {approx = true} : vector<8x1xf32> -> vector<8x1xf32>
      %c1_12 = arith.constant 1 : index
      %c0_13 = arith.constant 0 : index
      %c0_14 = arith.constant 0 : index
      %22 = vector.load %arg9[%c1_12, %c0_13, %c0_14] : memref<4x8x8xf32, #tpu.memory_space<vmem>>, vector<1x8x8xf32>
      %23 = vector.shape_cast %22 : vector<1x8x8xf32> to vector<8x8xf32>
      %24 = vector.broadcast %21 : vector<8x1xf32> to vector<8x8xf32>
      %25 = arith.mulf %23, %24 : vector<8x8xf32>
      %c2 = arith.constant 2 : index
      %c0_15 = arith.constant 0 : index
      %c0_16 = arith.constant 0 : index
      %26 = vector.load %arg8[%c2, %c0_15, %c0_16] : memref<4x8x1xf32, #tpu.memory_space<vmem>>, vector<1x8x1xf32>
      %27 = vector.shape_cast %26 : vector<1x8x1xf32> to vector<8x1xf32>
      %28 = tpu.reciprocal %27 {approx = true} : vector<8x1xf32> -> vector<8x1xf32>
      %c2_17 = arith.constant 2 : index
      %c0_18 = arith.constant 0 : index
      %c0_19 = arith.constant 0 : index
      %29 = vector.load %arg9[%c2_17, %c0_18, %c0_19] : memref<4x8x8xf32, #tpu.memory_space<vmem>>, vector<1x8x8xf32>
      %30 = vector.shape_cast %29 : vector<1x8x8xf32> to vector<8x8xf32>
      %31 = vector.broadcast %28 : vector<8x1xf32> to vector<8x8xf32>
      %32 = arith.mulf %30, %31 : vector<8x8xf32>
      %c3 = arith.constant 3 : index
      %c0_20 = arith.constant 0 : index
      %c0_21 = arith.constant 0 : index
      %33 = vector.load %arg8[%c3, %c0_20, %c0_21] : memref<4x8x1xf32, #tpu.memory_space<vmem>>, vector<1x8x1xf32>
      %34 = vector.shape_cast %33 : vector<1x8x1xf32> to vector<8x1xf32>
      %35 = tpu.reciprocal %34 {approx = true} : vector<8x1xf32> -> vector<8x1xf32>
      %c3_22 = arith.constant 3 : index
      %c0_23 = arith.constant 0 : index
      %c0_24 = arith.constant 0 : index
      %36 = vector.load %arg9[%c3_22, %c0_23, %c0_24] : memref<4x8x8xf32, #tpu.memory_space<vmem>>, vector<1x8x8xf32>
      %37 = vector.shape_cast %36 : vector<1x8x8xf32> to vector<8x8xf32>
      %38 = vector.broadcast %35 : vector<8x1xf32> to vector<8x8xf32>
      %39 = arith.mulf %37, %38 : vector<8x8xf32>
      %40 = tpu.concatenate %18, %25, %32, %39 in 1 : vector<8x8xf32>, vector<8x8xf32>, vector<8x8xf32>, vector<8x8xf32> -> vector<8x32xf32>
      %41 = arith.truncf %40 : vector<8x32xf32> to vector<8x32xbf16>
      %c0_25 = arith.constant 0 : index
      %c0_26 = arith.constant 0 : index
      %c0_27 = arith.constant 0 : index
      %42 = vector.load %arg6[%c0_25, %c0_26, %c0_27] : memref<1x8x32xbf16, #tpu.memory_space<vmem>>, vector<1x8x32xbf16>
      %43 = vector.shape_cast %42 : vector<1x8x32xbf16> to vector<8x32xbf16>
      %44 = vector.shape_cast %41 : vector<8x32xbf16> to vector<1x8x32xbf16>
      tpu.vector_store %arg6[%c0_25, %c0_26, %c0_27], %44 {strides = array<i32>} : memref<1x8x32xbf16, #tpu.memory_space<vmem>>, vector<1x8x32xbf16>,
    } else {
    }
    return
  }
  func.func @transform_0(%arg0: i32, %arg1: i32, %arg2: i32) -> (i32, i32, i32) {
    %c0_i32 = arith.constant 0 : i32
    %c0_i32_0 = arith.constant 0 : i32
    return %arg0, %arg1, %c0_i32 : i32, i32, i32
  }
  func.func @transform_1(%arg0: i32, %arg1: i32, %arg2: i32) -> (i32, i32, i32) {
    %0 = arith.minsi %arg2, %arg1 : i32
    %c0_i32 = arith.constant 0 : i32
    %c0_i32_0 = arith.constant 0 : i32
    return %arg0, %0, %c0_i32 : i32, i32, i32
  }
  func.func @transform_2(%arg0: i32, %arg1: i32, %arg2: i32) -> (i32, i32, i32) {
    %0 = arith.minsi %arg2, %arg1 : i32
    %c0_i32 = arith.constant 0 : i32
    %c0_i32_0 = arith.constant 0 : i32
    return %arg0, %0, %c0_i32 : i32, i32, i32
  }
  func.func @transform_3(%arg0: i32, %arg1: i32, %arg2: i32) -> (i32, i32, i32) {
    %c0_i32 = arith.constant 0 : i32
    %c0_i32_0 = arith.constant 0 : i32
    return %arg0, %arg1, %c0_i32 : i32, i32, i32
  }
}

module attributes {stable_mosaic.version = 11 : i64} {
  func.func @_linear_kernel(%arg0: i32, %arg1: i32, %arg2: i32, %arg3: memref<16x32xbf16, #tpu.memory_space<vmem>>, %arg4: memref<32x128xbf16, #tpu.memory_space<vmem>>, %arg5: memref<1x128xbf16, #tpu.memory_space<vmem>>, %arg6: memref<16x128xbf16, #tpu.memory_space<vmem>>, %arg7: memref<16x128xf32, #tpu.memory_space<vmem>>) attributes {dimension_semantics = [#tpu.dimension_semantics<parallel>, #tpu.dimension_semantics<parallel>, #tpu.dimension_semantics<arbitrary>], iteration_bounds = array<i64: 1, 1, 1>, scalar_prefetch = 0 : i64, scratch_operands = 1 : i64, tpu.core_type = #tpu.core_type<tc>, window_params = [{transform_indices = @transform_0, window_bounds = array<i64: 16, 32>}, {transform_indices = @transform_1, window_bounds = array<i64: 32, 128>}, {transform_indices = @transform_2, window_bounds = array<i64: 1, 128>}, {transform_indices = @transform_3, window_bounds = array<i64: 16, 128>}]} {
    %c0_i32 = arith.constant 0 : i32
    %0 = arith.cmpi eq, %arg2, %c0_i32 : i32
    %1 = arith.extui %0 : i1 to i32
    %c0_i32_0 = arith.constant 0 : i32
    %2 = arith.cmpi ne, %1, %c0_i32_0 : i32
    scf.if %2 {
      %cst_10 = arith.constant 0.000000e+00 : f32
      %12 = vector.broadcast %cst_10 : f32 to vector<16x128xf32>
      %c0_11 = arith.constant 0 : index
      %c0_12 = arith.constant 0 : index
      %13 = vector.load %arg7[%c0_11, %c0_12] : memref<16x128xf32, #tpu.memory_space<vmem>>, vector<16x128xf32>
      tpu.vector_store %arg7[%c0_11, %c0_12], %12 {strides = array<i32>} : memref<16x128xf32, #tpu.memory_space<vmem>>, vector<16x128xf32>,
    } else {
    }
    %c0 = arith.constant 0 : index
    %c0_1 = arith.constant 0 : index
    %3 = vector.load %arg7[%c0, %c0_1] : memref<16x128xf32, #tpu.memory_space<vmem>>, vector<16x128xf32>
    %c0_2 = arith.constant 0 : index
    %c0_3 = arith.constant 0 : index
    %4 = vector.load %arg3[%c0_2, %c0_3] : memref<16x32xbf16, #tpu.memory_space<vmem>>, vector<16x32xbf16>
    %c0_4 = arith.constant 0 : index
    %c0_5 = arith.constant 0 : index
    %5 = vector.load %arg4[%c0_4, %c0_5] : memref<32x128xbf16, #tpu.memory_space<vmem>>, vector<32x128xbf16>
    %cst = arith.constant dense<0.000000e+00> : vector<16x128xf32>
    %6 = tpu.matmul %4, %5, %cst {dimension_numbers = #tpu.dot_dimension_numbers<[1], [0], [0], [1], [0, 0, 1, 1], [], []>} : vector<16x32xbf16>, vector<32x128xbf16>, vector<16x128xf32> -> vector<16x128xf32>
    %7 = arith.addf %3, %6 : vector<16x128xf32>
    %c0_6 = arith.constant 0 : index
    %c0_7 = arith.constant 0 : index
    %8 = vector.load %arg7[%c0_6, %c0_7] : memref<16x128xf32, #tpu.memory_space<vmem>>, vector<16x128xf32>
    tpu.vector_store %arg7[%c0_6, %c0_7], %7 {strides = array<i32>} : memref<16x128xf32, #tpu.memory_space<vmem>>, vector<16x128xf32>,
    %c0_i32_8 = arith.constant 0 : i32
    %9 = arith.cmpi eq, %arg2, %c0_i32_8 : i32
    %10 = arith.extui %9 : i1 to i32
    %c0_i32_9 = arith.constant 0 : i32
    %11 = arith.cmpi ne, %10, %c0_i32_9 : i32
    scf.if %11 {
      %c0_10 = arith.constant 0 : index
      %c0_11 = arith.constant 0 : index
      %12 = vector.load %arg7[%c0_10, %c0_11] : memref<16x128xf32, #tpu.memory_space<vmem>>, vector<16x128xf32>
      %c0_12 = arith.constant 0 : index
      %c0_13 = arith.constant 0 : index
      %13 = vector.load %arg5[%c0_12, %c0_13] : memref<1x128xbf16, #tpu.memory_space<vmem>>, vector<1x128xbf16>
      %14 = arith.extf %13 : vector<1x128xbf16> to vector<1x128xf32>
      %15 = vector.broadcast %14 : vector<1x128xf32> to vector<16x128xf32>
      %16 = arith.addf %12, %15 : vector<16x128xf32>
      %cst_14 = arith.constant 5.000000e-01 : f32
      %17 = vector.broadcast %cst_14 : f32 to vector<16x128xf32>
      %18 = arith.mulf %17, %16 : vector<16x128xf32>
      %cst_15 = arith.constant 4.471500e-02 : f32
      %19 = vector.broadcast %cst_15 : f32 to vector<16x128xf32>
      %20 = arith.mulf %19, %16 : vector<16x128xf32>
      %21 = arith.mulf %20, %16 : vector<16x128xf32>
      %22 = arith.mulf %21, %16 : vector<16x128xf32>
      %23 = arith.addf %16, %22 : vector<16x128xf32>
      %cst_16 = arith.constant 0.797884583 : f32
      %24 = vector.broadcast %cst_16 : f32 to vector<16x128xf32>
      %25 = arith.mulf %24, %23 : vector<16x128xf32>
      %26 = math.tanh %25 : vector<16x128xf32>
      %cst_17 = arith.constant 1.000000e+00 : f32
      %27 = vector.broadcast %cst_17 : f32 to vector<16x128xf32>
      %28 = arith.addf %27, %26 : vector<16x128xf32>
      %29 = arith.mulf %18, %28 : vector<16x128xf32>
      %30 = arith.truncf %29 : vector<16x128xf32> to vector<16x128xbf16>
      %c0_18 = arith.constant 0 : index
      %c0_19 = arith.constant 0 : index
      %31 = vector.load %arg6[%c0_18, %c0_19] : memref<16x128xbf16, #tpu.memory_space<vmem>>, vector<16x128xbf16>
      tpu.vector_store %arg6[%c0_18, %c0_19], %30 {strides = array<i32>} : memref<16x128xbf16, #tpu.memory_space<vmem>>, vector<16x128xbf16>,
    } else {
    }
    return
  }
  func.func @transform_0(%arg0: i32, %arg1: i32, %arg2: i32) -> (i32, i32) {
    %c0_i32 = arith.constant 0 : i32
    return %arg0, %arg2 : i32, i32
  }
  func.func @transform_1(%arg0: i32, %arg1: i32, %arg2: i32) -> (i32, i32) {
    %c0_i32 = arith.constant 0 : i32
    return %arg2, %arg1 : i32, i32
  }
  func.func @transform_2(%arg0: i32, %arg1: i32, %arg2: i32) -> (i32, i32) {
    %c0_i32 = arith.constant 0 : i32
    %c0_i32_0 = arith.constant 0 : i32
    return %c0_i32, %arg1 : i32, i32
  }
  func.func @transform_3(%arg0: i32, %arg1: i32, %arg2: i32) -> (i32, i32) {
    %c0_i32 = arith.constant 0 : i32
    return %arg0, %arg1 : i32, i32
  }
}

module attributes {stable_mosaic.version = 11 : i64} {
  func.func @_linear_residual_kernel(%arg0: i32, %arg1: i32, %arg2: i32, %arg3: memref<16x128xbf16, #tpu.memory_space<vmem>>, %arg4: memref<128x32xbf16, #tpu.memory_space<vmem>>, %arg5: memref<1x32xbf16, #tpu.memory_space<vmem>>, %arg6: memref<16x32xbf16, #tpu.memory_space<vmem>>, %arg7: memref<16x32xbf16, #tpu.memory_space<vmem>>, %arg8: memref<16x32xf32, #tpu.memory_space<vmem>>) attributes {dimension_semantics = [#tpu.dimension_semantics<parallel>, #tpu.dimension_semantics<parallel>, #tpu.dimension_semantics<arbitrary>], iteration_bounds = array<i64: 1, 1, 1>, scalar_prefetch = 0 : i64, scratch_operands = 1 : i64, tpu.core_type = #tpu.core_type<tc>, window_params = [{transform_indices = @transform_0, window_bounds = array<i64: 16, 128>}, {transform_indices = @transform_1, window_bounds = array<i64: 128, 32>}, {transform_indices = @transform_2, window_bounds = array<i64: 1, 32>}, {transform_indices = @transform_3, window_bounds = array<i64: 16, 32>}, {transform_indices = @transform_4, window_bounds = array<i64: 16, 32>}]} {
    %c0_i32 = arith.constant 0 : i32
    %0 = arith.cmpi eq, %arg2, %c0_i32 : i32
    %1 = arith.extui %0 : i1 to i32
    %c0_i32_0 = arith.constant 0 : i32
    %2 = arith.cmpi ne, %1, %c0_i32_0 : i32
    scf.if %2 {
      %cst_10 = arith.constant 0.000000e+00 : f32
      %12 = vector.broadcast %cst_10 : f32 to vector<16x32xf32>
      %c0_11 = arith.constant 0 : index
      %c0_12 = arith.constant 0 : index
      %13 = vector.load %arg8[%c0_11, %c0_12] : memref<16x32xf32, #tpu.memory_space<vmem>>, vector<16x32xf32>
      tpu.vector_store %arg8[%c0_11, %c0_12], %12 {strides = array<i32>} : memref<16x32xf32, #tpu.memory_space<vmem>>, vector<16x32xf32>,
    } else {
    }
    %c0 = arith.constant 0 : index
    %c0_1 = arith.constant 0 : index
    %3 = vector.load %arg8[%c0, %c0_1] : memref<16x32xf32, #tpu.memory_space<vmem>>, vector<16x32xf32>
    %c0_2 = arith.constant 0 : index
    %c0_3 = arith.constant 0 : index
    %4 = vector.load %arg3[%c0_2, %c0_3] : memref<16x128xbf16, #tpu.memory_space<vmem>>, vector<16x128xbf16>
    %c0_4 = arith.constant 0 : index
    %c0_5 = arith.constant 0 : index
    %5 = vector.load %arg4[%c0_4, %c0_5] : memref<128x32xbf16, #tpu.memory_space<vmem>>, vector<128x32xbf16>
    %cst = arith.constant dense<0.000000e+00> : vector<16x32xf32>
    %6 = tpu.matmul %4, %5, %cst {dimension_numbers = #tpu.dot_dimension_numbers<[1], [0], [0], [1], [0, 0, 1, 1], [], []>} : vector<16x128xbf16>, vector<128x32xbf16>, vector<16x32xf32> -> vector<16x32xf32>
    %7 = arith.addf %3, %6 : vector<16x32xf32>
    %c0_6 = arith.constant 0 : index
    %c0_7 = arith.constant 0 : index
    %8 = vector.load %arg8[%c0_6, %c0_7] : memref<16x32xf32, #tpu.memory_space<vmem>>, vector<16x32xf32>
    tpu.vector_store %arg8[%c0_6, %c0_7], %7 {strides = array<i32>} : memref<16x32xf32, #tpu.memory_space<vmem>>, vector<16x32xf32>,
    %c0_i32_8 = arith.constant 0 : i32
    %9 = arith.cmpi eq, %arg2, %c0_i32_8 : i32
    %10 = arith.extui %9 : i1 to i32
    %c0_i32_9 = arith.constant 0 : i32
    %11 = arith.cmpi ne, %10, %c0_i32_9 : i32
    scf.if %11 {
      %c0_10 = arith.constant 0 : index
      %c0_11 = arith.constant 0 : index
      %12 = vector.load %arg8[%c0_10, %c0_11] : memref<16x32xf32, #tpu.memory_space<vmem>>, vector<16x32xf32>
      %c0_12 = arith.constant 0 : index
      %c0_13 = arith.constant 0 : index
      %13 = vector.load %arg5[%c0_12, %c0_13] : memref<1x32xbf16, #tpu.memory_space<vmem>>, vector<1x32xbf16>
      %14 = arith.extf %13 : vector<1x32xbf16> to vector<1x32xf32>
      %15 = vector.broadcast %14 : vector<1x32xf32> to vector<16x32xf32>
      %16 = arith.addf %12, %15 : vector<16x32xf32>
      %c0_14 = arith.constant 0 : index
      %c0_15 = arith.constant 0 : index
      %17 = vector.load %arg6[%c0_14, %c0_15] : memref<16x32xbf16, #tpu.memory_space<vmem>>, vector<16x32xbf16>
      %18 = arith.extf %17 : vector<16x32xbf16> to vector<16x32xf32>
      %19 = arith.addf %16, %18 : vector<16x32xf32>
      %20 = arith.truncf %19 : vector<16x32xf32> to vector<16x32xbf16>
      %c0_16 = arith.constant 0 : index
      %c0_17 = arith.constant 0 : index
      %21 = vector.load %arg7[%c0_16, %c0_17] : memref<16x32xbf16, #tpu.memory_space<vmem>>, vector<16x32xbf16>
      tpu.vector_store %arg7[%c0_16, %c0_17], %20 {strides = array<i32>} : memref<16x32xbf16, #tpu.memory_space<vmem>>, vector<16x32xbf16>,
    } else {
    }
    return
  }
  func.func @transform_0(%arg0: i32, %arg1: i32, %arg2: i32) -> (i32, i32) {
    %c0_i32 = arith.constant 0 : i32
    return %arg0, %arg2 : i32, i32
  }
  func.func @transform_1(%arg0: i32, %arg1: i32, %arg2: i32) -> (i32, i32) {
    %c0_i32 = arith.constant 0 : i32
    return %arg2, %arg1 : i32, i32
  }
  func.func @transform_2(%arg0: i32, %arg1: i32, %arg2: i32) -> (i32, i32) {
    %c0_i32 = arith.constant 0 : i32
    %c0_i32_0 = arith.constant 0 : i32
    return %c0_i32, %arg1 : i32, i32
  }
  func.func @transform_3(%arg0: i32, %arg1: i32, %arg2: i32) -> (i32, i32) {
    %c0_i32 = arith.constant 0 : i32
    return %arg0, %arg1 : i32, i32
  }
  func.func @transform_4(%arg0: i32, %arg1: i32, %arg2: i32) -> (i32, i32) {
    %c0_i32 = arith.constant 0 : i32
    return %arg0, %arg1 : i32, i32
  }
}

module attributes {stable_mosaic.version = 11 : i64} {
  func.func @_lm_head_kernel(%arg0: i32, %arg1: i32, %arg2: i32, %arg3: memref<16x32xbf16, #tpu.memory_space<vmem>>, %arg4: memref<64x32xbf16, #tpu.memory_space<vmem>>, %arg5: memref<16x64xbf16, #tpu.memory_space<vmem>>, %arg6: memref<16x64xf32, #tpu.memory_space<vmem>>) attributes {dimension_semantics = [#tpu.dimension_semantics<parallel>, #tpu.dimension_semantics<parallel>, #tpu.dimension_semantics<arbitrary>], iteration_bounds = array<i64: 1, 1, 1>, scalar_prefetch = 0 : i64, scratch_operands = 1 : i64, tpu.core_type = #tpu.core_type<tc>, window_params = [{transform_indices = @transform_0, window_bounds = array<i64: 16, 32>}, {transform_indices = @transform_1, window_bounds = array<i64: 64, 32>}, {transform_indices = @transform_2, window_bounds = array<i64: 16, 64>}]} {
    %c0_i32 = arith.constant 0 : i32
    %0 = arith.cmpi eq, %arg2, %c0_i32 : i32
    %1 = arith.extui %0 : i1 to i32
    %c0_i32_0 = arith.constant 0 : i32
    %2 = arith.cmpi ne, %1, %c0_i32_0 : i32
    scf.if %2 {
      %cst_10 = arith.constant 0.000000e+00 : f32
      %12 = vector.broadcast %cst_10 : f32 to vector<16x64xf32>
      %c0_11 = arith.constant 0 : index
      %c0_12 = arith.constant 0 : index
      %13 = vector.load %arg6[%c0_11, %c0_12] : memref<16x64xf32, #tpu.memory_space<vmem>>, vector<16x64xf32>
      tpu.vector_store %arg6[%c0_11, %c0_12], %12 {strides = array<i32>} : memref<16x64xf32, #tpu.memory_space<vmem>>, vector<16x64xf32>,
    } else {
    }
    %c0 = arith.constant 0 : index
    %c0_1 = arith.constant 0 : index
    %3 = vector.load %arg6[%c0, %c0_1] : memref<16x64xf32, #tpu.memory_space<vmem>>, vector<16x64xf32>
    %c0_2 = arith.constant 0 : index
    %c0_3 = arith.constant 0 : index
    %4 = vector.load %arg3[%c0_2, %c0_3] : memref<16x32xbf16, #tpu.memory_space<vmem>>, vector<16x32xbf16>
    %c0_4 = arith.constant 0 : index
    %c0_5 = arith.constant 0 : index
    %5 = vector.load %arg4[%c0_4, %c0_5] : memref<64x32xbf16, #tpu.memory_space<vmem>>, vector<64x32xbf16>
    %cst = arith.constant dense<0.000000e+00> : vector<16x64xf32>
    %6 = tpu.matmul %4, %5, %cst {dimension_numbers = #tpu.dot_dimension_numbers<[1], [1], [0], [0], [0, 0, 1, 0], [], []>} : vector<16x32xbf16>, vector<64x32xbf16>, vector<16x64xf32> -> vector<16x64xf32>
    %7 = arith.addf %3, %6 : vector<16x64xf32>
    %c0_6 = arith.constant 0 : index
    %c0_7 = arith.constant 0 : index
    %8 = vector.load %arg6[%c0_6, %c0_7] : memref<16x64xf32, #tpu.memory_space<vmem>>, vector<16x64xf32>
    tpu.vector_store %arg6[%c0_6, %c0_7], %7 {strides = array<i32>} : memref<16x64xf32, #tpu.memory_space<vmem>>, vector<16x64xf32>,
    %c0_i32_8 = arith.constant 0 : i32
    %9 = arith.cmpi eq, %arg2, %c0_i32_8 : i32
    %10 = arith.extui %9 : i1 to i32
    %c0_i32_9 = arith.constant 0 : i32
    %11 = arith.cmpi ne, %10, %c0_i32_9 : i32
    scf.if %11 {
      %c0_10 = arith.constant 0 : index
      %c0_11 = arith.constant 0 : index
      %12 = vector.load %arg6[%c0_10, %c0_11] : memref<16x64xf32, #tpu.memory_space<vmem>>, vector<16x64xf32>
      %13 = arith.truncf %12 : vector<16x64xf32> to vector<16x64xbf16>
      %c0_12 = arith.constant 0 : index
      %c0_13 = arith.constant 0 : index
      %14 = vector.load %arg5[%c0_12, %c0_13] : memref<16x64xbf16, #tpu.memory_space<vmem>>, vector<16x64xbf16>
      tpu.vector_store %arg5[%c0_12, %c0_13], %13 {strides = array<i32>} : memref<16x64xbf16, #tpu.memory_space<vmem>>, vector<16x64xbf16>,
    } else {
    }
    return
  }
  func.func @transform_0(%arg0: i32, %arg1: i32, %arg2: i32) -> (i32, i32) {
    %c0_i32 = arith.constant 0 : i32
    return %arg0, %arg2 : i32, i32
  }
  func.func @transform_1(%arg0: i32, %arg1: i32, %arg2: i32) -> (i32, i32) {
    %c0_i32 = arith.constant 0 : i32
    return %arg1, %arg2 : i32, i32
  }
  func.func @transform_2(%arg0: i32, %arg1: i32, %arg2: i32) -> (i32, i32) {
    %c0_i32 = arith.constant 0 : i32
    return %arg0, %arg1 : i32, i32
  }
}

</mosaic_0001>

<llo_original>
// kernel: model_from_hf_forward.16
$region0: #{model_from_hf_forward.16}
  #allocation0 [shape = 'u32[]', space=smem, size = 0x4, offset = 0x4, fixed_abs, tag = 'smem constant byte address 0x4 - core index']
  #allocation1 [shape = 'u32[72,128]{1,0:T(1,128)}', space=vmem, size = 0x9000, scoped, tag = 'internal scratch']
  %s0 = inlined_call_operand.vmem [shape: bf16[16,32], index: 0, kind: input, shape index: {}]
  %s1 = inlined_call_operand.vmem [shape: bf16[1,32], index: 1, kind: input, shape index: {}]
  %s2 = inlined_call_operand.vmem [shape: bf16[1,32], index: 2, kind: input, shape index: {}]
  %s3 = inlined_call_operand.vmem [shape: bf16[16,32], index: 3, kind: output, shape index: {}]
  %s4 = sld [smem:[#allocation0]]
  $region22: #{model_from_hf_forward.16} parent=0
    _
  %s6 = ssub.s32 1, %s4
  %s7 = scalar_select 0, %s6, %s4
  // Predicated region
  $region2: #{model_from_hf_forward.16} parent=0 // pred_check
    _
  $region3: #{model_from_hf_forward.16} parent=0 // pred_check_branch
    %9 = sbr.rel (0) target = $region5
  $region4: #{model_from_hf_forward.16} parent=0 // pred_region
    _
  $region5: #{model_from_hf_forward.16} parent=0 // pred_fallthru
    _
  // Predicated region
  $region6: #{model_from_hf_forward.16} parent=0 // pred_check
    _
  $region7: #{model_from_hf_forward.16} parent=0 // pred_check_branch
    %11 = sbr.rel (0) target = $region9
  $region8: #{model_from_hf_forward.16} parent=0 // pred_region
    _
  $region9: #{model_from_hf_forward.16} parent=0 // pred_fallthru
    _
  // Predicated region
  $region10: #{model_from_hf_forward.16} parent=0 // pred_check
    _
  $region11: #{model_from_hf_forward.16} parent=0 // pred_check_branch
    %13 = sbr.rel (0) target = $region13
  $region12: #{model_from_hf_forward.16} parent=0 // pred_region
    _
  $region13: #{model_from_hf_forward.16} parent=0 // pred_fallthru
    _
  %v14 = vld [vmem:[%s0] sm:$0xf]
  %v15 = vld [vmem:[%s0 + $0x4] sm:$0xf]
  %v16 = vunpack.c.l.bf16 %v14
  %v17 = vunpack.c.l.bf16 %v15
  %vm18 = vcmask 261120
  %v19 = vsel %vm18, %v16, 0.0
  %20 = vadd.xlane.f32.xlu0 %v19
  %v21 = vpop.xlane.xlu0 %20
  %v22 = vsel %vm18, %v17, 0.0
  %23 = vadd.xlane.f32.xlu0 %v22
  %v24 = vpop.xlane.xlu0 %23
  %v25 = vrcp.pop 32.0
  %v26 = vmul.f32 32.0, %v25
  %v27 = vsub.f32 1.0, %v26
  %v28 = vmul.f32 %v25, %v27
  %v29 = vadd.f32 %v25, %v28
  %vm30 = vweird.f32 %v25
  %v31 = vsel %vm30, %v25, %v29
  %v32 = vmul.f32 %v21, %v31
  %v33 = vmul.f32 %v24, %v31
  %v34 = vsub.f32 %v16, %v32
  %v35 = vsub.f32 %v17, %v33
  %v36 = vmul.f32 %v34, %v34
  %v37 = vmul.f32 %v35, %v35
  %v38 = vsel %vm18, %v36, 0.0
  %39 = vadd.xlane.f32.xlu0 %v38
  %v40 = vpop.xlane.xlu0 %39
  %v41 = vsel %vm18, %v37, 0.0
  %42 = vadd.xlane.f32.xlu0 %v41
  %v43 = vpop.xlane.xlu0 %42
  %v44 = vmul.f32 %v40, %v31
  %v45 = vmul.f32 %v43, %v31
  %v46 = vadd.f32 %v44, 1e-05
  %v47 = vadd.f32 %v45, 1e-05
  %v48 = vrsqrt.pop %v46
  %v49 = vmul.f32 %v48, %v46
  %v50 = vmul.f32 %v49, %v48
  %v51 = vmul.f32 0.5, %v50
  %v52 = vsub.f32 1.5, %v51
  %v53 = vmul.f32 %v48, %v52
  %vm54 = vweird.f32 %v46
  %vm55 = vweird.f32 %v48
  %vm56 = vmor %vm54, %vm55
  %v57 = vsel %vm56, %v48, %v53
  %v58 = vrsqrt.pop %v47
  %v59 = vmul.f32 %v58, %v47
  %v60 = vmul.f32 %v59, %v58
  %v61 = vmul.f32 0.5, %v60
  %v62 = vsub.f32 1.5, %v61
  %v63 = vmul.f32 %v58, %v62
  %vm64 = vweird.f32 %v47
  %vm65 = vweird.f32 %v58
  %vm66 = vmor %vm64, %vm65
  %v67 = vsel %vm66, %v58, %v63
  %v68 = vmul.f32 %v34, %v57
  %v69 = vmul.f32 %v35, %v67
  %v70 = vld [vmem:[%s1] sm:$0x1]
  %v71 = vunpack.c.l.bf16 %v70
  %v72 = vperm.slane %v71, 0
  %v73 = vmul.f32 %v68, %v72
  %v74 = vmul.f32 %v69, %v72
  %v75 = vld [vmem:[%s2] sm:$0x1]
  %v76 = vunpack.c.l.bf16 %v75
  %v77 = vperm.slane %v76, 0
  %v78 = vadd.f32 %v73, %v77
  %v79 = vadd.f32 %v74, %v77
  %v80 = vpack.c.bf16 %v78, %v78
  %v81 = vpack.c.bf16 %v79, %v79
  %vm82 = vcmask 257024
  %83 = vst.msk [vmem:[%s3] sm:$0xf] %vm82, %v80
  %84 = vst.msk [vmem:[%s3 + $0x4] sm:$0xf] %vm82, %v81
  // Predicated region
  $region14: #{model_from_hf_forward.16} parent=0 // pred_check
    _
  $region15: #{model_from_hf_forward.16} parent=0 // pred_check_branch
    %86 = sbr.rel (0) target = $region17
  $region16: #{model_from_hf_forward.16} parent=0 // pred_region
    _
  $region17: #{model_from_hf_forward.16} parent=0 // pred_fallthru
    _
  // Predicated region
  $region18: #{model_from_hf_forward.16} parent=0 // pred_check
    _
  $region19: #{model_from_hf_forward.16} parent=0 // pred_check_branch
    %88 = sbr.rel (0) target = $region21
  $region20: #{model_from_hf_forward.16} parent=0 // pred_region
    _
  $region21: #{model_from_hf_forward.16} parent=0 // pred_fallthru
    _

// kernel: model_from_hf_forward.19
$region0: #{model_from_hf_forward.19}
  #allocation0 [shape = 'u32[]', space=smem, size = 0x4, offset = 0x4, fixed_abs, tag = 'smem constant byte address 0x4 - core index']
  #allocation1 [shape = 'u32[72,128]{1,0:T(1,128)}', space=vmem, size = 0x9000, scoped, tag = 'internal scratch']
  #allocation2 [shape = 'f32[16,32]{1,0:T(8,128)}', space=vmem, size = 0x2000, scoped, tag = 'scratch operand']
  %s0 = inlined_call_operand.vmem [shape: bf16[16,32], index: 0, kind: input, shape index: {}]
  %s1 = inlined_call_operand.vmem [shape: bf16[32,32], index: 1, kind: input, shape index: {}]
  %s2 = inlined_call_operand.vmem [shape: bf16[1,32], index: 2, kind: input, shape index: {}]
  %s3 = inlined_call_operand.vmem [shape: bf16[16,32], index: 3, kind: input, shape index: {}]
  %s4 = inlined_call_operand.vmem [shape: bf16[16,32], index: 4, kind: output, shape index: {}]
  %s5 = sld [smem:[#allocation0]]
  $region34: #{model_from_hf_forward.19} parent=0
    _
  %s7 = ssub.s32 1, %s5
  %s8 = scalar_select 0, %s7, %s5
  // Predicated region
  $region2: #{model_from_hf_forward.19} parent=0 // pred_check
    _
  $region3: #{model_from_hf_forward.19} parent=0 // pred_check_branch
    %10 = sbr.rel (0) target = $region5
  $region4: #{model_from_hf_forward.19} parent=0 // pred_region
    _
  $region5: #{model_from_hf_forward.19} parent=0 // pred_fallthru
    _
  // Predicated region
  $region6: #{model_from_hf_forward.19} parent=0 // pred_check
    _
  $region7: #{model_from_hf_forward.19} parent=0 // pred_check_branch
    %12 = sbr.rel (0) target = $region9
  $region8: #{model_from_hf_forward.19} parent=0 // pred_region
    _
  $region9: #{model_from_hf_forward.19} parent=0 // pred_fallthru
    _
  // Predicated region
  $region10: #{model_from_hf_forward.19} parent=0 // pred_check
    _
  $region11: #{model_from_hf_forward.19} parent=0 // pred_check_branch
    %14 = sbr.rel (0) target = $region13
  $region12: #{model_from_hf_forward.19} parent=0 // pred_region
    _
  $region13: #{model_from_hf_forward.19} parent=0 // pred_fallthru
    _
  // Predicated region
  $region14: #{model_from_hf_forward.19} parent=0 // pred_check
    _
  $region15: #{model_from_hf_forward.19} parent=0 // pred_check_branch
    %16 = sbr.rel (0) target = $region17
  $region16: #{model_from_hf_forward.19} parent=0 // pred_region
    _
  $region17: #{model_from_hf_forward.19} parent=0 // pred_fallthru
    _
  %p18 = scmp.eq.s32.totalorder 0, 0
  // Predicated region
  $region18: #{model_from_hf_forward.19} parent=0 // pred_check
    %p19 = pneg %p18
  $region19: #{model_from_hf_forward.19} parent=0 // pred_check_branch
    %21 = sbr.rel (%p19) target = $region21
  $region20: #{model_from_hf_forward.19} parent=0 // pred_region
    %vm22 = vcmask 261120
    %23 = vst.msk [vmem:[#allocation2] sm:$0xff] %vm22, 0.0
    %24 = vst.msk [vmem:[#allocation2 + $0x8] sm:$0xff] %vm22, 0.0
  $region21: #{model_from_hf_forward.19} parent=0 // pred_fallthru
    _
  %v25 = vld [vmem:[#allocation2] sm:$0xff]
  %v26 = vld [vmem:[#allocation2 + $0x8] sm:$0xff]
  %v27 = vld [vmem:[%s0] sm:$0xf]
  %v28 = vld [vmem:[%s0 + $0x4] sm:$0xf]
  %v29 = vld [vmem:[%s1] sm:$0xf]
  %v30 = vld [vmem:[%s1 + $0x4] sm:$0xf]
  %v31 = vld [vmem:[%s1 + $0x8] sm:$0xf]
  %v32 = vld [vmem:[%s1 + $0xc] sm:$0xf]
  %v35 = vunpack.c.l.b16 %v27
  %v36 = vunpack.c.l.b16 %v28
  %v37 = vpack.c.b16 %v36, %v35
  %v42 = vunpack.c.l.b16 %v29
  %v43 = vunpack.c.l.b16 %v30
  %v44 = vunpack.c.l.b16 %v31
  %v45 = vunpack.c.l.b16 %v32
  %v46 = vpack.c.b16 %v43, %v42
  %v47 = vpack.c.b16 %v45, %v44
  %vm50 = vcmask 261120
  %v52 = vsel %vm50, %v37, 0
  %54 = vmatpush.bf16.msra.mxu0 0
  %55 = vmatpush.bf16.msra.mxu0 0
  %56 = vmatpush.bf16.msra.mxu0 0
  %57 = vmatpush.bf16.msra.mxu0 0
  %58 = vmatpush.bf16.msra.mxu0 0
  %59 = vmatpush.bf16.msra.mxu0 0
  %60 = vmatpush.bf16.msra.mxu0 %v47
  %61 = vmatpush.bf16.msra.mxu0 %v46
  %62 = vmatmul.bf16.gmra.mxu0 %v52
  %v63 = vpop.f32.mrf.mxu0
  %v64 = vadd.f32 0.0, %v63
  %v65 = vpop.f32.mrf.mxu0
  %v66 = vadd.f32 0.0, %v65
  %67 = vdwg.mxu0
  %v68 = vadd.f32 %v25, %v64
  %v69 = vadd.f32 %v26, %v66
  %70 = vst.msk [vmem:[#allocation2] sm:$0xff] %vm50, %v68
  %71 = vst.msk [vmem:[#allocation2 + $0x8] sm:$0xff] %vm50, %v69
  // Predicated region
  $region22: #{model_from_hf_forward.19} parent=0 // pred_check
    %p72 = pneg %p18
  $region23: #{model_from_hf_forward.19} parent=0 // pred_check_branch
    %74 = sbr.rel (%p72) target = $region25
  $region24: #{model_from_hf_forward.19} parent=0 // pred_region
    %v75 = vld [vmem:[#allocation2] sm:$0xff]
    %v76 = vld [vmem:[#allocation2 + $0x8] sm:$0xff]
    %v77 = vld [vmem:[%s2] sm:$0x1]
    %v78 = vunpack.c.l.bf16 %v77
    %v79 = vperm.slane %v78, 0
    %v80 = vadd.f32 %v75, %v79
    %v81 = vadd.f32 %v76, %v79
    %v82 = vld [vmem:[%s3] sm:$0xf]
    %v83 = vld [vmem:[%s3 + $0x4] sm:$0xf]
    %v84 = vunpack.c.l.bf16 %v82
    %v85 = vunpack.c.l.bf16 %v83
    %v86 = vadd.f32 %v80, %v84
    %v87 = vadd.f32 %v81, %v85
    %v88 = vpack.c.bf16 %v86, %v86
    %v89 = vpack.c.bf16 %v87, %v87
    %vm90 = vcmask 257024
    %91 = vst.msk [vmem:[%s4] sm:$0xf] %vm90, %v88
    %92 = vst.msk [vmem:[%s4 + $0x4] sm:$0xf] %vm90, %v89
  $region25: #{model_from_hf_forward.19} parent=0 // pred_fallthru
    _
  // Predicated region
  $region26: #{model_from_hf_forward.19} parent=0 // pred_check
    _
  $region27: #{model_from_hf_forward.19} parent=0 // pred_check_branch
    %94 = sbr.rel (0) target = $region29
  $region28: #{model_from_hf_forward.19} parent=0 // pred_region
    _
  $region29: #{model_from_hf_forward.19} parent=0 // pred_fallthru
    _
  // Predicated region
  $region30: #{model_from_hf_forward.19} parent=0 // pred_check
    _
  $region31: #{model_from_hf_forward.19} parent=0 // pred_check_branch
    %96 = sbr.rel (0) target = $region33
  $region32: #{model_from_hf_forward.19} parent=0 // pred_region
    _
  $region33: #{model_from_hf_forward.19} parent=0 // pred_fallthru
    _

// kernel: model_from_hf_forward.17
$region0: #{model_from_hf_forward.17}
  #allocation0 [shape = 'u32[]', space=smem, size = 0x4, offset = 0x4, fixed_abs, tag = 'smem constant byte address 0x4 - core index']
  #allocation1 [shape = 'u32[72,128]{1,0:T(1,128)}', space=vmem, size = 0x9000, scoped, tag = 'internal scratch']
  #allocation2 [shape = 'f32[16,96]{1,0:T(8,128)}', space=vmem, size = 0x2000, scoped, tag = 'scratch operand']
  %s0 = inlined_call_operand.vmem [shape: bf16[16,32], index: 0, kind: input, shape index: {}]
  %s1 = inlined_call_operand.vmem [shape: bf16[32,96], index: 1, kind: input, shape index: {}]
  %s2 = inlined_call_operand.vmem [shape: bf16[1,96], index: 2, kind: input, shape index: {}]
  %s3 = inlined_call_operand.vmem [shape: bf16[16,96], index: 3, kind: output, shape index: {}]
  %s4 = sld [smem:[#allocation0]]
  $region30: #{model_from_hf_forward.17} parent=0
    _
  %s6 = ssub.s32 1, %s4
  %s7 = scalar_select 0, %s6, %s4
  // Predicated region
  $region2: #{model_from_hf_forward.17} parent=0 // pred_check
    _
  $region3: #{model_from_hf_forward.17} parent=0 // pred_check_branch
    %9 = sbr.rel (0) target = $region5
  $region4: #{model_from_hf_forward.17} parent=0 // pred_region
    _
  $region5: #{model_from_hf_forward.17} parent=0 // pred_fallthru
    _
  // Predicated region
  $region6: #{model_from_hf_forward.17} parent=0 // pred_check
    _
  $region7: #{model_from_hf_forward.17} parent=0 // pred_check_branch
    %11 = sbr.rel (0) target = $region9
  $region8: #{model_from_hf_forward.17} parent=0 // pred_region
    _
  $region9: #{model_from_hf_forward.17} parent=0 // pred_fallthru
    _
  // Predicated region
  $region10: #{model_from_hf_forward.17} parent=0 // pred_check
    _
  $region11: #{model_from_hf_forward.17} parent=0 // pred_check_branch
    %13 = sbr.rel (0) target = $region13
  $region12: #{model_from_hf_forward.17} parent=0 // pred_region
    _
  $region13: #{model_from_hf_forward.17} parent=0 // pred_fallthru
    _
  %p15 = scmp.eq.s32.totalorder 0, 0
  // Predicated region
  $region14: #{model_from_hf_forward.17} parent=0 // pred_check
    %p16 = pneg %p15
  $region15: #{model_from_hf_forward.17} parent=0 // pred_check_branch
    %18 = sbr.rel (%p16) target = $region17
  $region16: #{model_from_hf_forward.17} parent=0 // pred_region
    %vm19 = vcmask 785408
    %20 = vst.msk [vmem:[#allocation2] sm:$0xff] %vm19, 0.0
    %21 = vst.msk [vmem:[#allocation2 + $0x8] sm:$0xff] %vm19, 0.0
  $region17: #{model_from_hf_forward.17} parent=0 // pred_fallthru
    _
  %v22 = vld [vmem:[#allocation2] sm:$0xff]
  %v23 = vld [vmem:[#allocation2 + $0x8] sm:$0xff]
  %v24 = vld [vmem:[%s0] sm:$0xf]
  %v25 = vld [vmem:[%s0 + $0x4] sm:$0xf]
  %v26 = vld [vmem:[%s1] sm:$0xf]
  %v27 = vld [vmem:[%s1 + $0x4] sm:$0xf]
  %v28 = vld [vmem:[%s1 + $0x8] sm:$0xf]
  %v29 = vld [vmem:[%s1 + $0xc] sm:$0xf]
  %v32 = vunpack.c.l.b16 %v24
  %v33 = vunpack.c.l.b16 %v25
  %v34 = vpack.c.b16 %v33, %v32
  %v39 = vunpack.c.l.b16 %v26
  %v40 = vunpack.c.l.b16 %v27
  %v41 = vunpack.c.l.b16 %v28
  %v42 = vunpack.c.l.b16 %v29
  %v43 = vpack.c.b16 %v40, %v39
  %v44 = vpack.c.b16 %v42, %v41
  %vm47 = vcmask 261120
  %v49 = vsel %vm47, %v34, 0
  %51 = vmatpush.bf16.msra.mxu0 0
  %52 = vmatpush.bf16.msra.mxu0 0
  %53 = vmatpush.bf16.msra.mxu0 0
  %54 = vmatpush.bf16.msra.mxu0 0
  %55 = vmatpush.bf16.msra.mxu0 0
  %56 = vmatpush.bf16.msra.mxu0 0
  %57 = vmatpush.bf16.msra.mxu0 %v44
  %58 = vmatpush.bf16.msra.mxu0 %v43
  %59 = vmatmul.bf16.gmra.mxu0 %v49
  %v60 = vpop.f32.mrf.mxu0
  %v61 = vadd.f32 0.0, %v60
  %v62 = vpop.f32.mrf.mxu0
  %v63 = vadd.f32 0.0, %v62
  %64 = vdwg.mxu0
  %v65 = vadd.f32 %v22, %v61
  %v66 = vadd.f32 %v23, %v63
  %vm67 = vcmask 785408
  %68 = vst.msk [vmem:[#allocation2] sm:$0xff] %vm67, %v65
  %69 = vst.msk [vmem:[#allocation2 + $0x8] sm:$0xff] %vm67, %v66
  // Predicated region
  $region18: #{model_from_hf_forward.17} parent=0 // pred_check
    %p70 = pneg %p15
  $region19: #{model_from_hf_forward.17} parent=0 // pred_check_branch
    %72 = sbr.rel (%p70) target = $region21
  $region20: #{model_from_hf_forward.17} parent=0 // pred_region
    %v73 = vld [vmem:[#allocation2] sm:$0xff]
    %v74 = vld [vmem:[#allocation2 + $0x8] sm:$0xff]
    %v75 = vld [vmem:[%s2] sm:$0x1]
    %v76 = vunpack.c.l.bf16 %v75
    %v77 = vperm.slane %v76, 0
    %v78 = vadd.f32 %v73, %v77
    %v79 = vadd.f32 %v74, %v77
    %v80 = vpack.c.bf16 %v78, %v78
    %v81 = vpack.c.bf16 %v79, %v79
    %vm82 = vcmask 781312
    %83 = vst.msk [vmem:[%s3] sm:$0xf] %vm82, %v80
    %84 = vst.msk [vmem:[%s3 + $0x4] sm:$0xf] %vm82, %v81
  $region21: #{model_from_hf_forward.17} parent=0 // pred_fallthru
    _
  // Predicated region
  $region22: #{model_from_hf_forward.17} parent=0 // pred_check
    _
  $region23: #{model_from_hf_forward.17} parent=0 // pred_check_branch
    %86 = sbr.rel (0) target = $region25
  $region24: #{model_from_hf_forward.17} parent=0 // pred_region
    _
  $region25: #{model_from_hf_forward.17} parent=0 // pred_fallthru
    _
  // Predicated region
  $region26: #{model_from_hf_forward.17} parent=0 // pred_check
    _
  $region27: #{model_from_hf_forward.17} parent=0 // pred_check_branch
    %88 = sbr.rel (0) target = $region29
  $region28: #{model_from_hf_forward.17} parent=0 // pred_region
    _
  $region29: #{model_from_hf_forward.17} parent=0 // pred_fallthru
    _

// kernel: model_from_hf_forward.21
$region0: #{model_from_hf_forward.21}
  #allocation0 [shape = 'u32[]', space=smem, size = 0x4, offset = 0x4, fixed_abs, tag = 'smem constant byte address 0x4 - core index']
  #allocation1 [shape = 'u32[72,128]{1,0:T(1,128)}', space=vmem, size = 0x9000, scoped, tag = 'internal scratch']
  #allocation2 [shape = 'f32[16,128]{1,0:T(8,128)}', space=vmem, size = 0x2000, scoped, tag = 'scratch operand']
  %s0 = inlined_call_operand.vmem [shape: bf16[16,32], index: 0, kind: input, shape index: {}]
  %s1 = inlined_call_operand.vmem [shape: bf16[32,128], index: 1, kind: input, shape index: {}]
  %s2 = inlined_call_operand.vmem [shape: bf16[1,128], index: 2, kind: input, shape index: {}]
  %s3 = inlined_call_operand.vmem [shape: bf16[16,128], index: 3, kind: output, shape index: {}]
  %s4 = sld [smem:[#allocation0]]
  $region30: #{model_from_hf_forward.21} parent=0
    _
  %s6 = ssub.s32 1, %s4
  %s7 = scalar_select 0, %s6, %s4
  // Predicated region
  $region2: #{model_from_hf_forward.21} parent=0 // pred_check
    _
  $region3: #{model_from_hf_forward.21} parent=0 // pred_check_branch
    %9 = sbr.rel (0) target = $region5
  $region4: #{model_from_hf_forward.21} parent=0 // pred_region
    _
  $region5: #{model_from_hf_forward.21} parent=0 // pred_fallthru
    _
  // Predicated region
  $region6: #{model_from_hf_forward.21} parent=0 // pred_check
    _
  $region7: #{model_from_hf_forward.21} parent=0 // pred_check_branch
    %11 = sbr.rel (0) target = $region9
  $region8: #{model_from_hf_forward.21} parent=0 // pred_region
    _
  $region9: #{model_from_hf_forward.21} parent=0 // pred_fallthru
    _
  // Predicated region
  $region10: #{model_from_hf_forward.21} parent=0 // pred_check
    _
  $region11: #{model_from_hf_forward.21} parent=0 // pred_check_branch
    %13 = sbr.rel (0) target = $region13
  $region12: #{model_from_hf_forward.21} parent=0 // pred_region
    _
  $region13: #{model_from_hf_forward.21} parent=0 // pred_fallthru
    _
  %p15 = scmp.eq.s32.totalorder 0, 0
  // Predicated region
  $region14: #{model_from_hf_forward.21} parent=0 // pred_check
    %p16 = pneg %p15
  $region15: #{model_from_hf_forward.21} parent=0 // pred_check_branch
    %18 = sbr.rel (%p16) target = $region17
  $region16: #{model_from_hf_forward.21} parent=0 // pred_region
    %19 = vst [vmem:[#allocation2] sm:$0xff] 0.0
    %20 = vst [vmem:[#allocation2 + $0x8] sm:$0xff] 0.0
  $region17: #{model_from_hf_forward.21} parent=0 // pred_fallthru
    _
  %v21 = vld [vmem:[#allocation2] sm:$0xff]
  %v22 = vld [vmem:[#allocation2 + $0x8] sm:$0xff]
  %v23 = vld [vmem:[%s0] sm:$0xf]
  %v24 = vld [vmem:[%s0 + $0x4] sm:$0xf]
  %v25 = vld [vmem:[%s1] sm:$0xf]
  %v26 = vld [vmem:[%s1 + $0x4] sm:$0xf]
  %v27 = vld [vmem:[%s1 + $0x8] sm:$0xf]
  %v28 = vld [vmem:[%s1 + $0xc] sm:$0xf]
  %v31 = vunpack.c.l.b16 %v23
  %v32 = vunpack.c.l.b16 %v24
  %v33 = vpack.c.b16 %v32, %v31
  %v38 = vunpack.c.l.b16 %v25
  %v39 = vunpack.c.l.b16 %v26
  %v40 = vunpack.c.l.b16 %v27
  %v41 = vunpack.c.l.b16 %v28
  %v42 = vpack.c.b16 %v39, %v38
  %v43 = vpack.c.b16 %v41, %v40
  %vm46 = vcmask 261120
  %v48 = vsel %vm46, %v33, 0
  %50 = vmatpush.bf16.msra.mxu0 0
  %51 = vmatpush.bf16.msra.mxu0 0
  %52 = vmatpush.bf16.msra.mxu0 0
  %53 = vmatpush.bf16.msra.mxu0 0
  %54 = vmatpush.bf16.msra.mxu0 0
  %55 = vmatpush.bf16.msra.mxu0 0
  %56 = vmatpush.bf16.msra.mxu0 %v43
  %57 = vmatpush.bf16.msra.mxu0 %v42
  %58 = vmatmul.bf16.gmra.mxu0 %v48
  %v59 = vpop.f32.mrf.mxu0
  %v60 = vadd.f32 0.0, %v59
  %v61 = vpop.f32.mrf.mxu0
  %v62 = vadd.f32 0.0, %v61
  %63 = vdwg.mxu0
  %v64 = vadd.f32 %v21, %v60
  %v65 = vadd.f32 %v22, %v62
  %66 = vst [vmem:[#allocation2] sm:$0xff] %v64
  %67 = vst [vmem:[#allocation2 + $0x8] sm:$0xff] %v65
  // Predicated region
  $region18: #{model_from_hf_forward.21} parent=0 // pred_check
    %p68 = pneg %p15
  $region19: #{model_from_hf_forward.21} parent=0 // pred_check_branch
    %70 = sbr.rel (%p68) target = $region21
  $region20: #{model_from_hf_forward.21} parent=0 // pred_region
    %v71 = vld [vmem:[#allocation2] sm:$0xff]
    %v72 = vld [vmem:[#allocation2 + $0x8] sm:$0xff]
    %v73 = vld [vmem:[%s2] sm:$0x1]
    %v74 = vunpack.c.l.bf16 %v73
    %v75 = vperm.slane %v74, 0
    %v76 = vadd.f32 %v71, %v75
    %v77 = vadd.f32 %v72, %v75
    %v78 = vmul.f32 %v76, 0.5
    %v79 = vmul.f32 %v77, 0.5
    %v80 = vmul.f32 %v76, 0.044715
    %v81 = vmul.f32 %v77, 0.044715
    %v82 = vmul.f32 %v80, %v76
    %v83 = vmul.f32 %v81, %v77
    %v84 = vmul.f32 %v82, %v76
    %v85 = vmul.f32 %v83, %v77
    %v86 = vadd.f32 %v76, %v84
    %v87 = vadd.f32 %v77, %v85
    %v88 = vmul.f32 %v86, 0.7978846
    %v89 = vmul.f32 %v87, 0.7978846
    %v90 = vtanh.pop %v88
    %v91 = vtanh.pop %v89
    %v92 = vadd.f32 %v90, 1.0
    %v93 = vadd.f32 %v91, 1.0
    %v94 = vmul.f32 %v78, %v92
    %v95 = vmul.f32 %v79, %v93
    %v96 = vpack.c.bf16 %v94, %v94
    %v97 = vpack.c.bf16 %v95, %v95
    %98 = vst [vmem:[%s3] sm:$0xf] %v96
    %99 = vst [vmem:[%s3 + $0x4] sm:$0xf] %v97
  $region21: #{model_from_hf_forward.21} parent=0 // pred_fallthru
    _
  // Predicated region
  $region22: #{model_from_hf_forward.21} parent=0 // pred_check
    _
  $region23: #{model_from_hf_forward.21} parent=0 // pred_check_branch
    %101 = sbr.rel (0) target = $region25
  $region24: #{model_from_hf_forward.21} parent=0 // pred_region
    _
  $region25: #{model_from_hf_forward.21} parent=0 // pred_fallthru
    _
  // Predicated region
  $region26: #{model_from_hf_forward.21} parent=0 // pred_check
    _
  $region27: #{model_from_hf_forward.21} parent=0 // pred_check_branch
    %103 = sbr.rel (0) target = $region29
  $region28: #{model_from_hf_forward.21} parent=0 // pred_region
    _
  $region29: #{model_from_hf_forward.21} parent=0 // pred_fallthru
    _

// kernel: model_from_hf_forward.22
$region0: #{model_from_hf_forward.22}
  #allocation0 [shape = 'u32[]', space=smem, size = 0x4, offset = 0x4, fixed_abs, tag = 'smem constant byte address 0x4 - core index']
  #allocation1 [shape = 'u32[72,128]{1,0:T(1,128)}', space=vmem, size = 0x9000, scoped, tag = 'internal scratch']
  #allocation2 [shape = 'f32[16,32]{1,0:T(8,128)}', space=vmem, size = 0x2000, scoped, tag = 'scratch operand']
  %s0 = inlined_call_operand.vmem [shape: bf16[16,128], index: 0, kind: input, shape index: {}]
  %s1 = inlined_call_operand.vmem [shape: bf16[128,32], index: 1, kind: input, shape index: {}]
  %s2 = inlined_call_operand.vmem [shape: bf16[1,32], index: 2, kind: input, shape index: {}]
  %s3 = inlined_call_operand.vmem [shape: bf16[16,32], index: 3, kind: input, shape index: {}]
  %s4 = inlined_call_operand.vmem [shape: bf16[16,32], index: 4, kind: output, shape index: {}]
  %s5 = sld [smem:[#allocation0]]
  $region34: #{model_from_hf_forward.22} parent=0
    _
  %s7 = ssub.s32 1, %s5
  %s8 = scalar_select 0, %s7, %s5
  // Predicated region
  $region2: #{model_from_hf_forward.22} parent=0 // pred_check
    _
  $region3: #{model_from_hf_forward.22} parent=0 // pred_check_branch
    %10 = sbr.rel (0) target = $region5
  $region4: #{model_from_hf_forward.22} parent=0 // pred_region
    _
  $region5: #{model_from_hf_forward.22} parent=0 // pred_fallthru
    _
  // Predicated region
  $region6: #{model_from_hf_forward.22} parent=0 // pred_check
    _
  $region7: #{model_from_hf_forward.22} parent=0 // pred_check_branch
    %12 = sbr.rel (0) target = $region9
  $region8: #{model_from_hf_forward.22} parent=0 // pred_region
    _
  $region9: #{model_from_hf_forward.22} parent=0 // pred_fallthru
    _
  // Predicated region
  $region10: #{model_from_hf_forward.22} parent=0 // pred_check
    _
  $region11: #{model_from_hf_forward.22} parent=0 // pred_check_branch
    %14 = sbr.rel (0) target = $region13
  $region12: #{model_from_hf_forward.22} parent=0 // pred_region
    _
  $region13: #{model_from_hf_forward.22} parent=0 // pred_fallthru
    _
  // Predicated region
  $region14: #{model_from_hf_forward.22} parent=0 // pred_check
    _
  $region15: #{model_from_hf_forward.22} parent=0 // pred_check_branch
    %16 = sbr.rel (0) target = $region17
  $region16: #{model_from_hf_forward.22} parent=0 // pred_region
    _
  $region17: #{model_from_hf_forward.22} parent=0 // pred_fallthru
    _
  %p17 = scmp.eq.s32.totalorder 0, 0
  // Predicated region
  $region18: #{model_from_hf_forward.22} parent=0 // pred_check
    %p18 = pneg %p17
  $region19: #{model_from_hf_forward.22} parent=0 // pred_check_branch
    %20 = sbr.rel (%p18) target = $region21
  $region20: #{model_from_hf_forward.22} parent=0 // pred_region
    %vm21 = vcmask 261120
    %22 = vst.msk [vmem:[#allocation2] sm:$0xff] %vm21, 0.0
    %23 = vst.msk [vmem:[#allocation2 + $0x8] sm:$0xff] %vm21, 0.0
  $region21: #{model_from_hf_forward.22} parent=0 // pred_fallthru
    _
  %v24 = vld [vmem:[#allocation2] sm:$0xff]
  %v25 = vld [vmem:[#allocation2 + $0x8] sm:$0xff]
  %v26 = vld [vmem:[%s0] sm:$0xf]
  %v27 = vld [vmem:[%s0 + $0x4] sm:$0xf]
  %v28 = vld [vmem:[%s1] sm:$0xf]
  %v29 = vld [vmem:[%s1 + $0x4] sm:$0xf]
  %v30 = vld [vmem:[%s1 + $0x8] sm:$0xf]
  %v31 = vld [vmem:[%s1 + $0xc] sm:$0xf]
  %v32 = vld [vmem:[%s1 + $0x10] sm:$0xf]
  %v33 = vld [vmem:[%s1 + $0x14] sm:$0xf]
  %v34 = vld [vmem:[%s1 + $0x18] sm:$0xf]
  %v35 = vld [vmem:[%s1 + $0x1c] sm:$0xf]
  %v36 = vld [vmem:[%s1 + $0x20] sm:$0xf]
  %v37 = vld [vmem:[%s1 + $0x24] sm:$0xf]
  %v38 = vld [vmem:[%s1 + $0x28] sm:$0xf]
  %v39 = vld [vmem:[%s1 + $0x2c] sm:$0xf]
  %v40 = vld [vmem:[%s1 + $0x30] sm:$0xf]
  %v41 = vld [vmem:[%s1 + $0x34] sm:$0xf]
  %v42 = vld [vmem:[%s1 + $0x38] sm:$0xf]
  %v43 = vld [vmem:[%s1 + $0x3c] sm:$0xf]
  %v46 = vunpack.c.l.b16 %v26
  %v47 = vunpack.c.l.b16 %v27
  %v48 = vpack.c.b16 %v47, %v46
  %v66 = vunpack.c.l.b16 %v28
  %v67 = vunpack.c.l.b16 %v29
  %v68 = vunpack.c.l.b16 %v30
  %v69 = vunpack.c.l.b16 %v31
  %v70 = vunpack.c.l.b16 %v32
  %v71 = vunpack.c.l.b16 %v33
  %v72 = vunpack.c.l.b16 %v34
  %v73 = vunpack.c.l.b16 %v35
  %v74 = vunpack.c.l.b16 %v36
  %v75 = vunpack.c.l.b16 %v37
  %v76 = vunpack.c.l.b16 %v38
  %v77 = vunpack.c.l.b16 %v39
  %v78 = vunpack.c.l.b16 %v40
  %v79 = vunpack.c.l.b16 %v41
  %v80 = vunpack.c.l.b16 %v42
  %v81 = vunpack.c.l.b16 %v43
  %v82 = vpack.c.b16 %v67, %v66
  %v83 = vpack.c.b16 %v69, %v68
  %v84 = vpack.c.b16 %v71, %v70
  %v85 = vpack.c.b16 %v73, %v72
  %v86 = vpack.c.b16 %v75, %v74
  %v87 = vpack.c.b16 %v77, %v76
  %v88 = vpack.c.b16 %v79, %v78
  %v89 = vpack.c.b16 %v81, %v80
  %98 = vmatpush.bf16.msra.mxu0 %v89
  %99 = vmatpush.bf16.msra.mxu0 %v88
  %100 = vmatpush.bf16.msra.mxu0 %v87
  %101 = vmatpush.bf16.msra.mxu0 %v86
  %102 = vmatpush.bf16.msra.mxu0 %v85
  %103 = vmatpush.bf16.msra.mxu0 %v84
  %104 = vmatpush.bf16.msra.mxu0 %v83
  %105 = vmatpush.bf16.msra.mxu0 %v82
  %106 = vmatmul.bf16.gmra.mxu0 %v48
  %v107 = vpop.f32.mrf.mxu0
  %v108 = vadd.f32 0.0, %v107
  %v109 = vpop.f32.mrf.mxu0
  %v110 = vadd.f32 0.0, %v109
  %111 = vdwg.mxu0
  %v112 = vadd.f32 %v24, %v108
  %v113 = vadd.f32 %v25, %v110
  %vm114 = vcmask 261120
  %115 = vst.msk [vmem:[#allocation2] sm:$0xff] %vm114, %v112
  %116 = vst.msk [vmem:[#allocation2 + $0x8] sm:$0xff] %vm114, %v113
  // Predicated region
  $region22: #{model_from_hf_forward.22} parent=0 // pred_check
    %p117 = pneg %p17
  $region23: #{model_from_hf_forward.22} parent=0 // pred_check_branch
    %119 = sbr.rel (%p117) target = $region25
  $region24: #{model_from_hf_forward.22} parent=0 // pred_region
    %v120 = vld [vmem:[#allocation2] sm:$0xff]
    %v121 = vld [vmem:[#allocation2 + $0x8] sm:$0xff]
    %v122 = vld [vmem:[%s2] sm:$0x1]
    %v123 = vunpack.c.l.bf16 %v122
    %v124 = vperm.slane %v123, 0
    %v125 = vadd.f32 %v120, %v124
    %v126 = vadd.f32 %v121, %v124
    %v127 = vld [vmem:[%s3] sm:$0xf]
    %v128 = vld [vmem:[%s3 + $0x4] sm:$0xf]
    %v129 = vunpack.c.l.bf16 %v127
    %v130 = vunpack.c.l.bf16 %v128
    %v131 = vadd.f32 %v125, %v129
    %v132 = vadd.f32 %v126, %v130
    %v133 = vpack.c.bf16 %v131, %v131
    %v134 = vpack.c.bf16 %v132, %v132
    %vm135 = vcmask 257024
    %136 = vst.msk [vmem:[%s4] sm:$0xf] %vm135, %v133
    %137 = vst.msk [vmem:[%s4 + $0x4] sm:$0xf] %vm135, %v134
  $region25: #{model_from_hf_forward.22} parent=0 // pred_fallthru
    _
  // Predicated region
  $region26: #{model_from_hf_forward.22} parent=0 // pred_check
    _
  $region27: #{model_from_hf_forward.22} parent=0 // pred_check_branch
    %139 = sbr.rel (0) target = $region29
  $region28: #{model_from_hf_forward.22} parent=0 // pred_region
    _
  $region29: #{model_from_hf_forward.22} parent=0 // pred_fallthru
    _
  // Predicated region
  $region30: #{model_from_hf_forward.22} parent=0 // pred_check
    _
  $region31: #{model_from_hf_forward.22} parent=0 // pred_check_branch
    %141 = sbr.rel (0) target = $region33
  $region32: #{model_from_hf_forward.22} parent=0 // pred_region
    _
  $region33: #{model_from_hf_forward.22} parent=0 // pred_fallthru
    _

// kernel: model_from_hf_forward.18
$region0: #{model_from_hf_forward.18}
  #allocation0 [shape = 'u32[]', space=smem, size = 0x4, offset = 0x4, fixed_abs, tag = 'smem constant byte address 0x4 - core index']
  #allocation1 [shape = 'u32[72,128]{1,0:T(1,128)}', space=vmem, size = 0x9000, scoped, tag = 'internal scratch']
  #allocation2 [shape = 'f32[4,8,1]{2,1,0:T(8,128)}', space=vmem, size = 0x4000, scoped, tag = 'scratch operand']
  #allocation3 [shape = 'f32[4,8,1]{2,1,0:T(8,128)}', space=vmem, size = 0x4000, scoped, tag = 'scratch operand']
  #allocation4 [shape = 'f32[4,8,8]{2,1,0:T(8,128)}', space=vmem, size = 0x4000, scoped, tag = 'scratch operand']
  %s0 = inlined_call_operand.vmem [shape: bf16[2,8,32], index: 0, kind: input, shape index: {}]
  %s1 = inlined_call_operand.vmem [shape: bf16[2,8,32], index: 1, kind: input, shape index: {}]
  %s2 = inlined_call_operand.vmem [shape: bf16[2,8,32], index: 2, kind: input, shape index: {}]
  %s3 = inlined_call_operand.vmem [shape: bf16[2,8,32], index: 3, kind: output, shape index: {}]
  %s4 = sld [smem:[#allocation0]]
  $region61: #{model_from_hf_forward.18} parent=0
    _
  %s6 = ssub.s32 1, %s4
  %s7 = scalar_select 0, %s6, %s4
  loop: start=0, step=1, limit=4
  $region2: #{model_from_hf_forward.18} parent=0 // loop_pre_header
    _
  $region3: #{model_from_hf_forward.18} parent=0 // loop_header
    %s9 = sphi 0, %s13
    %p10 = scmp.ge.s32.totalorder %s9, 4
    %s16 = sphi 0, %s35
    %s17 = sphi 0, %s31
    %s18 = sphi 0, %s27
    %s19 = sphi 0, %s16
    %s20 = sphi 0, %s17
    %s21 = sphi 0, %s18
    %s22 = sphi 0, %s19
    %s23 = sphi 0, %s20
    %s24 = sphi 0, %s21
    %s40 = sphi 0, %s42
    %s43 = sphi 0, %s40
    %s44 = sphi 0, %s43
    %s60 = sphi 0, %s44
    %s72 = sphi 0, %s74
    %s75 = sphi 0, %s72
    %s76 = sphi 0, %s75
    %s92 = sphi 0, %s76
    %s104 = sphi 0, %s106
    %s107 = sphi 0, %s104
    %s108 = sphi 0, %s107
    %s124 = sphi 0, %s108
    %s132 = sphi 0, %s134
    %s135 = sphi 0, %s132
    %s136 = sphi 0, %s135
    %s152 = sphi 0, %s136
  $region4: #{model_from_hf_forward.18} parent=0 // loop_header_branch
    %12 = sbr.rel (%p10) target = $region8
  $region5: #{model_from_hf_forward.18} parent=0 // loop_body
    %s14 = ssub.s32 %s9, 1
    %s15 = ssub.s32 %s9, 2
    %s25 = sadd.s32 1, %s18
    %p26 = scmp.ge.s32.totalorder %s25, 1
    %s27 = scalar_select %p26, 0, %s25
    %s28 = sadd.s32 1, %s17
    %s29 = scalar_select %p26, %s28, %s17
    %p30 = scmp.ge.s32.totalorder %s29, 1
    %s31 = scalar_select %p30, 0, %s29
    %s32 = sadd.s32 1, %s16
    %s33 = scalar_select %p30, %s32, %s16
    %p34 = scmp.ge.s32.totalorder %s33, 2
    %s35 = scalar_select %p34, 0, %s33
    %s36 = ssub.s32 %s16, %s35
    %s37 = ssub.s32 %s17, %s31
    %s38 = sor.u32 %s36, %s37
    %p39 = scmp.eq.s32.totalorder %s38, 0
    %s41 = sadd.s32 %s40, 1
    %s42 = scalar_select %p39, %s40, %s41
    %p45 = pneg %p39
    %p46 = scmp.eq.s32.totalorder %s9, 1
    %p47 = por %p45, %p46
    %p48 = scmp.ne.s32.totalorder %s40, %s43
    %p49 = scmp.eq.s32.totalorder %s9, 0
    %p50 = por %p48, %p49
    %p51 = scmp.ne.s32.totalorder %s40, %s43
    %p52 = scmp.eq.s32.totalorder %s14, 1
    %p53 = por %p51, %p52
    %p54 = scmp.ne.s32.totalorder %s43, %s44
    %p55 = scmp.eq.s32.totalorder %s14, 0
    %p56 = por %p54, %p55
    %p57 = scmp.ne.s32.totalorder %s43, %s44
    %p58 = scmp.eq.s32.totalorder %s15, 1
    %p59 = por %p57, %p58
    %p61 = scmp.ne.s32.totalorder %s44, %s60
    %p62 = scmp.eq.s32.totalorder %s15, 0
    %p63 = por %p61, %p62
    %p64 = scmp.lt.s32.totalorder %s18, %s17
    %s65 = scalar_select %p64, %s18, %s17
    %p66 = scmp.lt.s32.totalorder %s27, %s31
    %s67 = scalar_select %p66, %s27, %s31
    %s68 = ssub.s32 %s16, %s35
    %s69 = ssub.s32 %s65, %s67
    %s70 = sor.u32 %s68, %s69
    %p71 = scmp.eq.s32.totalorder %s70, 0
    %s73 = sadd.s32 %s72, 1
    %s74 = scalar_select %p71, %s72, %s73
    %p77 = pneg %p71
    %p78 = scmp.eq.s32.totalorder %s9, 1
    %p79 = por %p77, %p78
    %p80 = scmp.ne.s32.totalorder %s72, %s75
    %p81 = scmp.eq.s32.totalorder %s9, 0
    %p82 = por %p80, %p81
    %p83 = scmp.ne.s32.totalorder %s72, %s75
    %p84 = scmp.eq.s32.totalorder %s14, 1
    %p85 = por %p83, %p84
    %p86 = scmp.ne.s32.totalorder %s75, %s76
    %p87 = scmp.eq.s32.totalorder %s14, 0
    %p88 = por %p86, %p87
    %p89 = scmp.ne.s32.totalorder %s75, %s76
    %p90 = scmp.eq.s32.totalorder %s15, 1
    %p91 = por %p89, %p90
    %p93 = scmp.ne.s32.totalorder %s76, %s92
    %p94 = scmp.eq.s32.totalorder %s15, 0
    %p95 = por %p93, %p94
    %p96 = scmp.lt.s32.totalorder %s18, %s17
    %s97 = scalar_select %p96, %s18, %s17
    %p98 = scmp.lt.s32.totalorder %s27, %s31
    %s99 = scalar_select %p98, %s27, %s31
    %s100 = ssub.s32 %s16, %s35
    %s101 = ssub.s32 %s97, %s99
    %s102 = sor.u32 %s100, %s101
    %p103 = scmp.eq.s32.totalorder %s102, 0
    %s105 = sadd.s32 %s104, 1
    %s106 = scalar_select %p103, %s104, %s105
    %p109 = pneg %p103
    %p110 = scmp.eq.s32.totalorder %s9, 1
    %p111 = por %p109, %p110
    %p112 = scmp.ne.s32.totalorder %s104, %s107
    %p113 = scmp.eq.s32.totalorder %s9, 0
    %p114 = por %p112, %p113
    %p115 = scmp.ne.s32.totalorder %s104, %s107
    %p116 = scmp.eq.s32.totalorder %s14, 1
    %p117 = por %p115, %p116
    %p118 = scmp.ne.s32.totalorder %s107, %s108
    %p119 = scmp.eq.s32.totalorder %s14, 0
    %p120 = por %p118, %p119
    %p121 = scmp.ne.s32.totalorder %s107, %s108
    %p122 = scmp.eq.s32.totalorder %s15, 1
    %p123 = por %p121, %p122
    %p125 = scmp.ne.s32.totalorder %s108, %s124
    %p126 = scmp.eq.s32.totalorder %s15, 0
    %p127 = por %p125, %p126
    %s128 = ssub.s32 %s16, %s35
    %s129 = ssub.s32 %s17, %s31
    %s130 = sor.u32 %s128, %s129
    %p131 = scmp.eq.s32.totalorder %s130, 0
    %s133 = sadd.s32 %s132, 1
    %s134 = scalar_select %p131, %s132, %s133
    %p137 = pneg %p131
    %p138 = scmp.eq.s32.totalorder %s9, 1
    %p139 = por %p137, %p138
    %p140 = scmp.ne.s32.totalorder %s132, %s135
    %p141 = scmp.eq.s32.totalorder %s9, 0
    %p142 = por %p140, %p141
    %p143 = scmp.ne.s32.totalorder %s132, %s135
    %p144 = scmp.eq.s32.totalorder %s14, 1
    %p145 = por %p143, %p144
    %p146 = scmp.ne.s32.totalorder %s135, %s136
    %p147 = scmp.eq.s32.totalorder %s14, 0
    %p148 = por %p146, %p147
    %p149 = scmp.ne.s32.totalorder %s135, %s136
    %p150 = scmp.eq.s32.totalorder %s15, 1
    %p151 = por %p149, %p150
    %p153 = scmp.ne.s32.totalorder %s136, %s152
    %p154 = scmp.eq.s32.totalorder %s15, 0
    %p155 = por %p153, %p154
    %p156 = scmp.le.s32.totalorder 1, %s9
    %p157 = scmp.lt.s32.totalorder %s9, 3
    %p158 = pnand %p156, %p157
    %p159 = pneg %p158
    // Predicated region
    $region9: #{model_from_hf_forward.18} parent=5 // pred_check
      _
    $region10: #{model_from_hf_forward.18} parent=5 // pred_check_branch
      %161 = sbr.rel (%p158) target = $region12
    $region11: #{model_from_hf_forward.18} parent=5 // pred_region
      %s162 = ssub.s32 %s9, 1
    $region12: #{model_from_hf_forward.18} parent=5 // pred_fallthru
      _
    %p163 = scmp.lt.s32.totalorder %s9, 2
    // Predicated region
    $region13: #{model_from_hf_forward.18} parent=5 // pred_check
      %p164 = pneg %p163
    $region14: #{model_from_hf_forward.18} parent=5 // pred_check_branch
      %166 = sbr.rel (%p164) target = $region16
    $region15: #{model_from_hf_forward.18} parent=5 // pred_region
      // Predicated region
      $region17: #{model_from_hf_forward.18} parent=15 // pred_check
        %p167 = pneg %p50
      $region18: #{model_from_hf_forward.18} parent=15 // pred_check_branch
        %169 = sbr.rel (%p167) target = $region20
      $region19: #{model_from_hf_forward.18} parent=15 // pred_region
        %p170 = scmp.lt.s32.totalorder %s16, 1
        %s171 = scalar_select %p170, %s16, 1
        %p172 = scmp.lt.s32.totalorder %s17, 0
        %s173 = scalar_select %p172, %s17, 0
        %s174 = sadd.s32 %s173, %s171
        %s175 = smul.addr %s174, 4
        %s176 = scalar_lea.vmem %s0, %s175
      $region20: #{model_from_hf_forward.18} parent=15 // pred_fallthru
        _
      // Predicated region
      $region21: #{model_from_hf_forward.18} parent=15 // pred_check
        %p177 = pneg %p82
      $region22: #{model_from_hf_forward.18} parent=15 // pred_check_branch
        %179 = sbr.rel (%p177) target = $region24
      $region23: #{model_from_hf_forward.18} parent=15 // pred_region
        %p180 = scmp.lt.s32.totalorder %s18, %s17
        %s181 = scalar_select %p180, %s18, %s17
        %p182 = scmp.lt.s32.totalorder %s16, 1
        %s183 = scalar_select %p182, %s16, 1
        %p184 = scmp.lt.s32.totalorder %s181, 0
        %s185 = scalar_select %p184, %s181, 0
        %s186 = sadd.s32 %s185, %s183
        %s187 = smul.addr %s186, 4
        %s188 = scalar_lea.vmem %s1, %s187
        %p189 = scmp.lt.s32.totalorder %s18, %s17
        %s190 = scalar_select %p189, %s18, %s17
      $region24: #{model_from_hf_forward.18} parent=15 // pred_fallthru
        _
      // Predicated region
      $region25: #{model_from_hf_forward.18} parent=15 // pred_check
        %p191 = pneg %p114
      $region26: #{model_from_hf_forward.18} parent=15 // pred_check_branch
        %193 = sbr.rel (%p191) target = $region28
      $region27: #{model_from_hf_forward.18} parent=15 // pred_region
        %p194 = scmp.lt.s32.totalorder %s18, %s17
        %s195 = scalar_select %p194, %s18, %s17
        %p196 = scmp.lt.s32.totalorder %s16, 1
        %s197 = scalar_select %p196, %s16, 1
        %p198 = scmp.lt.s32.totalorder %s195, 0
        %s199 = scalar_select %p198, %s195, 0
        %s200 = sadd.s32 %s199, %s197
        %s201 = smul.addr %s200, 4
        %s202 = scalar_lea.vmem %s2, %s201
        %p203 = scmp.lt.s32.totalorder %s18, %s17
        %s204 = scalar_select %p203, %s18, %s17
      $region28: #{model_from_hf_forward.18} parent=15 // pred_fallthru
        _
    $region16: #{model_from_hf_forward.18} parent=5 // pred_fallthru
      _
    %p205 = scmp.le.s32.totalorder 1, %s9
    %p206 = scmp.lt.s32.totalorder %s9, 3
    %p207 = pnand %p205, %p206
    %p208 = pneg %p207
    // Predicated region
    $region29: #{model_from_hf_forward.18} parent=5 // pred_check
      _
    $region30: #{model_from_hf_forward.18} parent=5 // pred_check_branch
      %210 = sbr.rel (%p207) target = $region32
    $region31: #{model_from_hf_forward.18} parent=5 // pred_region
      %s211 = ssub.s32 %s9, 1
      %p212 = scmp.lt.s32.totalorder %s19, 1
      %s213 = scalar_select %p212, %s19, 1
      %p214 = scmp.lt.s32.totalorder %s20, 0
      %s215 = scalar_select %p214, %s20, 0
      %s216 = sadd.s32 %s215, %s213
      %s217 = smul.addr %s216, 4
      %s218 = scalar_lea.vmem %s0, %s217
      %p219 = pneg %p56
      %p220 = pneg %p53
      %p221 = scmp.lt.s32.totalorder %s21, %s20
      %s222 = scalar_select %p221, %s21, %s20
      %p223 = scmp.lt.s32.totalorder %s19, 1
      %s224 = scalar_select %p223, %s19, 1
      %p225 = scmp.lt.s32.totalorder %s222, 0
      %s226 = scalar_select %p225, %s222, 0
      %s227 = sadd.s32 %s226, %s224
      %s228 = smul.addr %s227, 4
      %s229 = scalar_lea.vmem %s1, %s228
      %p230 = pneg %p88
      %p231 = pneg %p85
      %p232 = scmp.lt.s32.totalorder %s21, %s20
      %s233 = scalar_select %p232, %s21, %s20
      %p234 = scmp.lt.s32.totalorder %s19, 1
      %s235 = scalar_select %p234, %s19, 1
      %p236 = scmp.lt.s32.totalorder %s233, 0
      %s237 = scalar_select %p236, %s233, 0
      %s238 = sadd.s32 %s237, %s235
      %s239 = smul.addr %s238, 4
      %s240 = scalar_lea.vmem %s2, %s239
      %p241 = pneg %p120
      %p242 = pneg %p117
      %p243 = pneg %p148
      %p244 = pneg %p145
      %p245 = scmp.lt.s32.totalorder %s19, 1
      %s246 = scalar_select %p245, %s19, 1
      %p247 = scmp.lt.s32.totalorder %s20, 0
      %s248 = scalar_select %p247, %s20, 0
      %s249 = sadd.s32 %s248, %s246
      %s250 = smul.addr %s249, 4
      %s251 = scalar_lea.vmem %s3, %s250
      %p252 = scmp.lt.s32.totalorder %s19, 1
      %s253 = scalar_select %p252, %s19, 1
      %p254 = scmp.lt.s32.totalorder %s20, 0
      %s255 = scalar_select %p254, %s20, 0
      %s256 = sadd.s32 %s255, %s253
      %s257 = smul.addr %s256, 4
      %s258 = scalar_lea.vmem %s0, %s257
      %p259 = scmp.lt.s32.totalorder %s21, %s20
      %s260 = scalar_select %p259, %s21, %s20
      %p261 = scmp.lt.s32.totalorder %s19, 1
      %s262 = scalar_select %p261, %s19, 1
      %p263 = scmp.lt.s32.totalorder %s260, 0
      %s264 = scalar_select %p263, %s260, 0
      %s265 = sadd.s32 %s264, %s262
      %s266 = smul.addr %s265, 4
      %s267 = scalar_lea.vmem %s1, %s266
      %p268 = scmp.lt.s32.totalorder %s21, %s20
      %s269 = scalar_select %p268, %s21, %s20
      %p270 = scmp.lt.s32.totalorder %s21, %s20
      %s271 = scalar_select %p270, %s21, %s20
      %p272 = scmp.lt.s32.totalorder %s19, 1
      %s273 = scalar_select %p272, %s19, 1
      %p274 = scmp.lt.s32.totalorder %s271, 0
      %s275 = scalar_select %p274, %s271, 0
      %s276 = sadd.s32 %s275, %s273
      %s277 = smul.addr %s276, 4
      %s278 = scalar_lea.vmem %s2, %s277
      %p279 = scmp.lt.s32.totalorder %s21, %s20
      %s280 = scalar_select %p279, %s21, %s20
      %p281 = scmp.lt.s32.totalorder %s19, 1
      %s282 = scalar_select %p281, %s19, 1
      %p283 = scmp.lt.s32.totalorder %s20, 0
      %s284 = scalar_select %p283, %s20, 0
      %s285 = sadd.s32 %s284, %s282
      %s286 = smul.addr %s285, 4
      %s287 = scalar_lea.vmem %s3, %s286
      %p289 = scmp.eq.s32.totalorder %s21, 0
      // Predicated region
      $region33: #{model_from_hf_forward.18} parent=31 // pred_check
        %p290 = pneg %p289
      $region34: #{model_from_hf_forward.18} parent=31 // pred_check_branch
        %292 = sbr.rel (%p290) target = $region36
      $region35: #{model_from_hf_forward.18} parent=31 // pred_region
        %vm293 = vcmask 7168
        %294 = vst.msk [vmem:[#allocation2] sm:$0xff] %vm293, -inf
        %295 = vst.msk [vmem:[#allocation2 + $0x8] sm:$0xff] %vm293, -inf
        %296 = vst.msk [vmem:[#allocation2 + $0x10] sm:$0xff] %vm293, -inf
        %297 = vst.msk [vmem:[#allocation2 + $0x18] sm:$0xff] %vm293, -inf
        %298 = vst.msk [vmem:[#allocation3] sm:$0xff] %vm293, 0.0
        %299 = vst.msk [vmem:[#allocation3 + $0x8] sm:$0xff] %vm293, 0.0
        %300 = vst.msk [vmem:[#allocation3 + $0x10] sm:$0xff] %vm293, 0.0
        %301 = vst.msk [vmem:[#allocation3 + $0x18] sm:$0xff] %vm293, 0.0
        %vm302 = vcmask 64512
        %303 = vst.msk [vmem:[#allocation4] sm:$0xff] %vm302, 0.0
        %304 = vst.msk [vmem:[#allocation4 + $0x8] sm:$0xff] %vm302, 0.0
        %305 = vst.msk [vmem:[#allocation4 + $0x10] sm:$0xff] %vm302, 0.0
        %306 = vst.msk [vmem:[#allocation4 + $0x18] sm:$0xff] %vm302, 0.0
      $region36: #{model_from_hf_forward.18} parent=31 // pred_fallthru
        _
      %p307 = scmp.lt.s32.totalorder %s21, %s20
      // Predicated region
      $region37: #{model_from_hf_forward.18} parent=31 // pred_check
        %p308 = pneg %p307
      $region38: #{model_from_hf_forward.18} parent=31 // pred_check_branch
        %310 = sbr.rel (%p308) target = $region40
      $region39: #{model_from_hf_forward.18} parent=31 // pred_region
        %v311 = vld [vmem:[%s258] sm:$0xf]
        %v312 = vld [vmem:[%s267] sm:$0xf]
        %v313 = vld [vmem:[%s278] sm:$0xf]
        %vm314 = vcmask 64512
        %v316 = vsel %vm314, %v311, 0
        %v319 = vsel %vm314, %v312, 0
        %321 = vmatpush.bf16.xpose.msra.mxu0 0
        %322 = vmatpush.bf16.xpose.msra.mxu0 0
        %323 = vmatpush.bf16.xpose.msra.mxu0 0
        %324 = vmatpush.bf16.xpose.msra.mxu0 0
        %325 = vmatpush.bf16.xpose.msra.mxu0 0
        %326 = vmatpush.bf16.xpose.msra.mxu0 0
        %327 = vmatpush.bf16.xpose.msra.mxu0 0
        %328 = vmatpush.bf16.xpose.msra.mxu0 %v319
        %329 = vmatmul.bf16.gmra.mxu0 %v316
        %v330 = vpop.f32.mrf.mxu0
        %v331 = vadd.f32 0.0, %v330
        %v332 = vpop.f32.mrf.mxu0
        %333 = vdwg.mxu0
        %v334 = vmul.f32 %v331, 0.35355338
        %v335 = vld [vmem:[#allocation2] sm:$0xff]
        %v336 = vsel %vm314, %v334, -inf
        %337 = vmax.xlane.f32.xlu0 %v336
        %v338 = vpop.xlane.xlu0 %337
        %v339 = vmax.f32 %v335, %v338
        %v340 = vsub.f32 %v335, %v339
        %v341 = vmul.f32 %v340, 1.442695
        %v342 = vpow.pop %v341
        %344 = vset.pattern.permute.xlu0 0
        %345 = vperm.xlu0 %344, %v339
        %v346 = vpop.permute.xlu0 %345
        %v348 = vsub.f32 %v334, %v346
        %v349 = vmul.f32 %v348, 1.442695
        %v350 = vpow.pop %v349
        %v351 = vld [vmem:[#allocation3] sm:$0xff]
        %v352 = vmul.f32 %v342, %v351
        %v353 = vsel %vm314, %v350, 0.0
        %354 = vadd.xlane.f32.xlu0 %v353
        %v355 = vpop.xlane.xlu0 %354
        %v356 = vadd.f32 %v352, %v355
        %vm357 = vcmask 7168
        %358 = vst.msk [vmem:[#allocation3] sm:$0xff] %vm357, %v356
        %v359 = vld [vmem:[#allocation4] sm:$0xff]
        %361 = vset.pattern.permute.xlu0 0
        %362 = vperm.xlu0 %361, %v342
        %v363 = vpop.permute.xlu0 %362
        %v365 = vmul.f32 %v363, %v359
        %v366 = vpack.c.bf16 %v350, %v350
        %v368 = vsel %vm314, %v366, 0
        %vm370 = vcmask 1043456
        %v372 = vsel %vm370, %v313, 0
        %374 = vmatpush.bf16.msra.mxu0 0
        %375 = vmatpush.bf16.msra.mxu0 0
        %376 = vmatpush.bf16.msra.mxu0 0
        %377 = vmatpush.bf16.msra.mxu0 0
        %378 = vmatpush.bf16.msra.mxu0 0
        %379 = vmatpush.bf16.msra.mxu0 0
        %380 = vmatpush.bf16.msra.mxu0 0
        %381 = vmatpush.bf16.msra.mxu0 %v372
        %382 = vmatmul.bf16.gmra.mxu0 %v368
        %v383 = vpop.f32.mrf.mxu0
        %v384 = vadd.f32 0.0, %v383
        %v385 = vpop.f32.mrf.mxu0
        %386 = vdwg.mxu0
        %v387 = vadd.f32 %v365, %v384
        %388 = vst.msk [vmem:[#allocation4] sm:$0xff] %vm314, %v387
        %389 = vst.msk [vmem:[#allocation2] sm:$0xff] %vm357, %v339
        %v391 = vunpack.c.l.b16 %v311
        %v392 = vpack.c.b16 %v391, %v391
        %393 = vrot.lane.b32.xlu0 %v392, 120
        %v394 = vpop.permute.xlu0 %393
        %v396 = vunpack.c.l.b16 %v312
        %v397 = vpack.c.b16 %v396, %v396
        %398 = vrot.lane.b32.xlu0 %v397, 120
        %v399 = vpop.permute.xlu0 %398
        %v401 = vsel %vm314, %v394, 0
        %v404 = vsel %vm314, %v399, 0
        %406 = vmatpush.bf16.xpose.msra.mxu0 0
        %407 = vmatpush.bf16.xpose.msra.mxu0 0
        %408 = vmatpush.bf16.xpose.msra.mxu0 0
        %409 = vmatpush.bf16.xpose.msra.mxu0 0
        %410 = vmatpush.bf16.xpose.msra.mxu0 0
        %411 = vmatpush.bf16.xpose.msra.mxu0 0
        %412 = vmatpush.bf16.xpose.msra.mxu0 0
        %413 = vmatpush.bf16.xpose.msra.mxu0 %v404
        %414 = vmatmul.bf16.gmra.mxu0 %v401
        %v415 = vpop.f32.mrf.mxu0
        %v416 = vadd.f32 0.0, %v415
        %v417 = vpop.f32.mrf.mxu0
        %418 = vdwg.mxu0
        %v419 = vmul.f32 %v416, 0.35355338
        %s420 = scalar_lea.vmem [#allocation2], 8
        %v421 = vld [vmem:[%s420] sm:$0xff]
        %v422 = vsel %vm314, %v419, -inf
        %423 = vmax.xlane.f32.xlu0 %v422
        %v424 = vpop.xlane.xlu0 %423
        %v425 = vmax.f32 %v421, %v424
        %v426 = vsub.f32 %v421, %v425
        %v427 = vmul.f32 %v426, 1.442695
        %v428 = vpow.pop %v427
        %430 = vset.pattern.permute.xlu0 0
        %431 = vperm.xlu0 %430, %v425
        %v432 = vpop.permute.xlu0 %431
        %v434 = vsub.f32 %v419, %v432
        %v435 = vmul.f32 %v434, 1.442695
        %v436 = vpow.pop %v435
        %s437 = scalar_lea.vmem [#allocation3], 8
        %v438 = vld [vmem:[%s437] sm:$0xff]
        %v439 = vmul.f32 %v428, %v438
        %v440 = vsel %vm314, %v436, 0.0
        %441 = vadd.xlane.f32.xlu0 %v440
        %v442 = vpop.xlane.xlu0 %441
        %v443 = vadd.f32 %v439, %v442
        %444 = vst.msk [vmem:[%s437] sm:$0xff] %vm357, %v443
        %s445 = scalar_lea.vmem [#allocation4], 8
        %v446 = vld [vmem:[%s445] sm:$0xff]
        %448 = vset.pattern.permute.xlu0 0
        %449 = vperm.xlu0 %448, %v428
        %v450 = vpop.permute.xlu0 %449
        %v452 = vmul.f32 %v450, %v446
        %v453 = vpack.c.bf16 %v436, %v436
        %v455 = vunpack.c.l.b16 %v313
        %v456 = vpack.c.b16 %v455, %v455
        %457 = vrot.lane.b32.xlu0 %v456, 120
        %v458 = vpop.permute.xlu0 %457
        %v460 = vsel %vm314, %v453, 0
        %v463 = vsel %vm370, %v458, 0
        %465 = vmatpush.bf16.msra.mxu0 0
        %466 = vmatpush.bf16.msra.mxu0 0
        %467 = vmatpush.bf16.msra.mxu0 0
        %468 = vmatpush.bf16.msra.mxu0 0
        %469 = vmatpush.bf16.msra.mxu0 0
        %470 = vmatpush.bf16.msra.mxu0 0
        %471 = vmatpush.bf16.msra.mxu0 0
        %472 = vmatpush.bf16.msra.mxu0 %v463
        %473 = vmatmul.bf16.gmra.mxu0 %v460
        %v474 = vpop.f32.mrf.mxu0
        %v475 = vadd.f32 0.0, %v474
        %v476 = vpop.f32.mrf.mxu0
        %477 = vdwg.mxu0
        %v478 = vadd.f32 %v452, %v475
        %479 = vst.msk [vmem:[%s445] sm:$0xff] %vm314, %v478
        %480 = vst.msk [vmem:[%s420] sm:$0xff] %vm357, %v425
        %481 = vrot.lane.b32.xlu0 %v392, 112
        %v482 = vpop.permute.xlu0 %481
        %483 = vrot.lane.b32.xlu0 %v397, 112
        %v484 = vpop.permute.xlu0 %483
        %v486 = vsel %vm314, %v482, 0
        %v489 = vsel %vm314, %v484, 0
        %491 = vmatpush.bf16.xpose.msra.mxu0 0
        %492 = vmatpush.bf16.xpose.msra.mxu0 0
        %493 = vmatpush.bf16.xpose.msra.mxu0 0
        %494 = vmatpush.bf16.xpose.msra.mxu0 0
        %495 = vmatpush.bf16.xpose.msra.mxu0 0
        %496 = vmatpush.bf16.xpose.msra.mxu0 0
        %497 = vmatpush.bf16.xpose.msra.mxu0 0
        %498 = vmatpush.bf16.xpose.msra.mxu0 %v489
        %499 = vmatmul.bf16.gmra.mxu0 %v486
        %v500 = vpop.f32.mrf.mxu0
        %v501 = vadd.f32 0.0, %v500
        %v502 = vpop.f32.mrf.mxu0
        %503 = vdwg.mxu0
        %v504 = vmul.f32 %v501, 0.35355338
        %s505 = scalar_lea.vmem [#allocation2], 16
        %v506 = vld [vmem:[%s505] sm:$0xff]
        %v507 = vsel %vm314, %v504, -inf
        %508 = vmax.xlane.f32.xlu0 %v507
        %v509 = vpop.xlane.xlu0 %508
        %v510 = vmax.f32 %v506, %v509
        %v511 = vsub.f32 %v506, %v510
        %v512 = vmul.f32 %v511, 1.442695
        %v513 = vpow.pop %v512
        %515 = vset.pattern.permute.xlu0 0
        %516 = vperm.xlu0 %515, %v510
        %v517 = vpop.permute.xlu0 %516
        %v519 = vsub.f32 %v504, %v517
        %v520 = vmul.f32 %v519, 1.442695
        %v521 = vpow.pop %v520
        %s522 = scalar_lea.vmem [#allocation3], 16
        %v523 = vld [vmem:[%s522] sm:$0xff]
        %v524 = vmul.f32 %v513, %v523
        %v525 = vsel %vm314, %v521, 0.0
        %526 = vadd.xlane.f32.xlu0 %v525
        %v527 = vpop.xlane.xlu0 %526
        %v528 = vadd.f32 %v524, %v527
        %529 = vst.msk [vmem:[%s522] sm:$0xff] %vm357, %v528
        %s530 = scalar_lea.vmem [#allocation4], 16
        %v531 = vld [vmem:[%s530] sm:$0xff]
        %533 = vset.pattern.permute.xlu0 0
        %534 = vperm.xlu0 %533, %v513
        %v535 = vpop.permute.xlu0 %534
        %v537 = vmul.f32 %v535, %v531
        %v538 = vpack.c.bf16 %v521, %v521
        %539 = vrot.lane.b32.xlu0 %v456, 112
        %v540 = vpop.permute.xlu0 %539
        %v542 = vsel %vm314, %v538, 0
        %v545 = vsel %vm370, %v540, 0
        %547 = vmatpush.bf16.msra.mxu0 0
        %548 = vmatpush.bf16.msra.mxu0 0
        %549 = vmatpush.bf16.msra.mxu0 0
        %550 = vmatpush.bf16.msra.mxu0 0
        %551 = vmatpush.bf16.msra.mxu0 0
        %552 = vmatpush.bf16.msra.mxu0 0
        %553 = vmatpush.bf16.msra.mxu0 0
        %554 = vmatpush.bf16.msra.mxu0 %v545
        %555 = vmatmul.bf16.gmra.mxu0 %v542
        %v556 = vpop.f32.mrf.mxu0
        %v557 = vadd.f32 0.0, %v556
        %v558 = vpop.f32.mrf.mxu0
        %559 = vdwg.mxu0
        %v560 = vadd.f32 %v537, %v557
        %561 = vst.msk [vmem:[%s530] sm:$0xff] %vm314, %v560
        %562 = vst.msk [vmem:[%s505] sm:$0xff] %vm357, %v510
        %563 = vrot.lane.b32.xlu0 %v392, 104
        %v564 = vpop.permute.xlu0 %563
        %565 = vrot.lane.b32.xlu0 %v397, 104
        %v566 = vpop.permute.xlu0 %565
        %v568 = vsel %vm314, %v564, 0
        %v571 = vsel %vm314, %v566, 0
        %573 = vmatpush.bf16.xpose.msra.mxu0 0
        %574 = vmatpush.bf16.xpose.msra.mxu0 0
        %575 = vmatpush.bf16.xpose.msra.mxu0 0
        %576 = vmatpush.bf16.xpose.msra.mxu0 0
        %577 = vmatpush.bf16.xpose.msra.mxu0 0
        %578 = vmatpush.bf16.xpose.msra.mxu0 0
        %579 = vmatpush.bf16.xpose.msra.mxu0 0
        %580 = vmatpush.bf16.xpose.msra.mxu0 %v571
        %581 = vmatmul.bf16.gmra.mxu0 %v568
        %v582 = vpop.f32.mrf.mxu0
        %v583 = vadd.f32 0.0, %v582
        %v584 = vpop.f32.mrf.mxu0
        %585 = vdwg.mxu0
        %v586 = vmul.f32 %v583, 0.35355338
        %s587 = scalar_lea.vmem [#allocation2], 24
        %v588 = vld [vmem:[%s587] sm:$0xff]
        %v589 = vsel %vm314, %v586, -inf
        %590 = vmax.xlane.f32.xlu0 %v589
        %v591 = vpop.xlane.xlu0 %590
        %v592 = vmax.f32 %v588, %v591
        %v593 = vsub.f32 %v588, %v592
        %v594 = vmul.f32 %v593, 1.442695
        %v595 = vpow.pop %v594
        %597 = vset.pattern.permute.xlu0 0
        %598 = vperm.xlu0 %597, %v592
        %v599 = vpop.permute.xlu0 %598
        %v601 = vsub.f32 %v586, %v599
        %v602 = vmul.f32 %v601, 1.442695
        %v603 = vpow.pop %v602
        %s604 = scalar_lea.vmem [#allocation3], 24
        %v605 = vld [vmem:[%s604] sm:$0xff]
        %v606 = vmul.f32 %v595, %v605
        %v607 = vsel %vm314, %v603, 0.0
        %608 = vadd.xlane.f32.xlu0 %v607
        %v609 = vpop.xlane.xlu0 %608
        %v610 = vadd.f32 %v606, %v609
        %611 = vst.msk [vmem:[%s604] sm:$0xff] %vm357, %v610
        %s612 = scalar_lea.vmem [#allocation4], 24
        %v613 = vld [vmem:[%s612] sm:$0xff]
        %615 = vset.pattern.permute.xlu0 0
        %616 = vperm.xlu0 %615, %v595
        %v617 = vpop.permute.xlu0 %616
        %v619 = vmul.f32 %v617, %v613
        %v620 = vpack.c.bf16 %v603, %v603
        %621 = vrot.lane.b32.xlu0 %v456, 104
        %v622 = vpop.permute.xlu0 %621
        %v624 = vsel %vm314, %v620, 0
        %v627 = vsel %vm370, %v622, 0
        %629 = vmatpush.bf16.msra.mxu0 0
        %630 = vmatpush.bf16.msra.mxu0 0
        %631 = vmatpush.bf16.msra.mxu0 0
        %632 = vmatpush.bf16.msra.mxu0 0
        %633 = vmatpush.bf16.msra.mxu0 0
        %634 = vmatpush.bf16.msra.mxu0 0
        %635 = vmatpush.bf16.msra.mxu0 0
        %636 = vmatpush.bf16.msra.mxu0 %v627
        %637 = vmatmul.bf16.gmra.mxu0 %v624
        %v638 = vpop.f32.mrf.mxu0
        %v639 = vadd.f32 0.0, %v638
        %v640 = vpop.f32.mrf.mxu0
        %641 = vdwg.mxu0
        %v642 = vadd.f32 %v619, %v639
        %643 = vst.msk [vmem:[%s612] sm:$0xff] %vm314, %v642
        %644 = vst.msk [vmem:[%s587] sm:$0xff] %vm357, %v592
      $region40: #{model_from_hf_forward.18} parent=31 // pred_fallthru
        _
      %p645 = scmp.eq.s32.totalorder %s21, %s20
      // Predicated region
      $region41: #{model_from_hf_forward.18} parent=31 // pred_check
        %p646 = pneg %p645
      $region42: #{model_from_hf_forward.18} parent=31 // pred_check_branch
        %648 = sbr.rel (%p646) target = $region44
      $region43: #{model_from_hf_forward.18} parent=31 // pred_region
        %v649 = vld [vmem:[%s258] sm:$0xf]
        %v650 = vld [vmem:[%s267] sm:$0xf]
        %v651 = vld [vmem:[%s278] sm:$0xf]
        %s652 = smul.u32 %s20, 8
        %v653 = vlaneseq
        %v654 = vshrl.u32 %v653, 7
        %v655 = vstv %s652
        %v656 = vadd.s32 %v655, %v654
        %s657 = smul.u32 %s21, 8
        %v658 = vlaneseq
        %v659 = vand.u32 %v658, 127
        %v660 = vstv %s657
        %v661 = vadd.s32 %v660, %v659
        %vm662 = vcmp.ge.s32.totalorder %v656, %v661
        %vm663 = vcmask 64512
        %v665 = vsel %vm663, %v649, 0
        %v668 = vsel %vm663, %v650, 0
        %670 = vmatpush.bf16.xpose.msra.mxu0 0
        %671 = vmatpush.bf16.xpose.msra.mxu0 0
        %672 = vmatpush.bf16.xpose.msra.mxu0 0
        %673 = vmatpush.bf16.xpose.msra.mxu0 0
        %674 = vmatpush.bf16.xpose.msra.mxu0 0
        %675 = vmatpush.bf16.xpose.msra.mxu0 0
        %676 = vmatpush.bf16.xpose.msra.mxu0 0
        %677 = vmatpush.bf16.xpose.msra.mxu0 %v668
        %678 = vmatmul.bf16.gmra.mxu0 %v665
        %v679 = vpop.f32.mrf.mxu0
        %v680 = vadd.f32 0.0, %v679
        %v681 = vpop.f32.mrf.mxu0
        %682 = vdwg.mxu0
        %v683 = vmul.f32 %v680, 0.35355338
        %v684 = vsel %vm662, %v683, -1e+30
        %v685 = vld [vmem:[#allocation2] sm:$0xff]
        %v686 = vsel %vm663, %v684, -inf
        %687 = vmax.xlane.f32.xlu0 %v686
        %v688 = vpop.xlane.xlu0 %687
        %v689 = vmax.f32 %v685, %v688
        %v690 = vsub.f32 %v685, %v689
        %v691 = vmul.f32 %v690, 1.442695
        %v692 = vpow.pop %v691
        %694 = vset.pattern.permute.xlu0 0
        %695 = vperm.xlu0 %694, %v689
        %v696 = vpop.permute.xlu0 %695
        %v698 = vsub.f32 %v684, %v696
        %v699 = vmul.f32 %v698, 1.442695
        %v700 = vpow.pop %v699
        %v701 = vld [vmem:[#allocation3] sm:$0xff]
        %v702 = vmul.f32 %v692, %v701
        %v703 = vsel %vm663, %v700, 0.0
        %704 = vadd.xlane.f32.xlu0 %v703
        %v705 = vpop.xlane.xlu0 %704
        %v706 = vadd.f32 %v702, %v705
        %vm707 = vcmask 7168
        %708 = vst.msk [vmem:[#allocation3] sm:$0xff] %vm707, %v706
        %v709 = vld [vmem:[#allocation4] sm:$0xff]
        %711 = vset.pattern.permute.xlu0 0
        %712 = vperm.xlu0 %711, %v692
        %v713 = vpop.permute.xlu0 %712
        %v715 = vmul.f32 %v713, %v709
        %v716 = vpack.c.bf16 %v700, %v700
        %v718 = vsel %vm663, %v716, 0
        %vm720 = vcmask 1043456
        %v722 = vsel %vm720, %v651, 0
        %724 = vmatpush.bf16.msra.mxu0 0
        %725 = vmatpush.bf16.msra.mxu0 0
        %726 = vmatpush.bf16.msra.mxu0 0
        %727 = vmatpush.bf16.msra.mxu0 0
        %728 = vmatpush.bf16.msra.mxu0 0
        %729 = vmatpush.bf16.msra.mxu0 0
        %730 = vmatpush.bf16.msra.mxu0 0
        %731 = vmatpush.bf16.msra.mxu0 %v722
        %732 = vmatmul.bf16.gmra.mxu0 %v718
        %v733 = vpop.f32.mrf.mxu0
        %v734 = vadd.f32 0.0, %v733
        %v735 = vpop.f32.mrf.mxu0
        %736 = vdwg.mxu0
        %v737 = vadd.f32 %v715, %v734
        %738 = vst.msk [vmem:[#allocation4] sm:$0xff] %vm663, %v737
        %739 = vst.msk [vmem:[#allocation2] sm:$0xff] %vm707, %v689
        %v741 = vunpack.c.l.b16 %v649
        %v742 = vpack.c.b16 %v741, %v741
        %743 = vrot.lane.b32.xlu0 %v742, 120
        %v744 = vpop.permute.xlu0 %743
        %v746 = vunpack.c.l.b16 %v650
        %v747 = vpack.c.b16 %v746, %v746
        %748 = vrot.lane.b32.xlu0 %v747, 120
        %v749 = vpop.permute.xlu0 %748
        %v751 = vsel %vm663, %v744, 0
        %v754 = vsel %vm663, %v749, 0
        %756 = vmatpush.bf16.xpose.msra.mxu0 0
        %757 = vmatpush.bf16.xpose.msra.mxu0 0
        %758 = vmatpush.bf16.xpose.msra.mxu0 0
        %759 = vmatpush.bf16.xpose.msra.mxu0 0
        %760 = vmatpush.bf16.xpose.msra.mxu0 0
        %761 = vmatpush.bf16.xpose.msra.mxu0 0
        %762 = vmatpush.bf16.xpose.msra.mxu0 0
        %763 = vmatpush.bf16.xpose.msra.mxu0 %v754
        %764 = vmatmul.bf16.gmra.mxu0 %v751
        %v765 = vpop.f32.mrf.mxu0
        %v766 = vadd.f32 0.0, %v765
        %v767 = vpop.f32.mrf.mxu0
        %768 = vdwg.mxu0
        %v769 = vmul.f32 %v766, 0.35355338
        %v770 = vsel %vm662, %v769, -1e+30
        %s771 = scalar_lea.vmem [#allocation2], 8
        %v772 = vld [vmem:[%s771] sm:$0xff]
        %v773 = vsel %vm663, %v770, -inf
        %774 = vmax.xlane.f32.xlu0 %v773
        %v775 = vpop.xlane.xlu0 %774
        %v776 = vmax.f32 %v772, %v775
        %v777 = vsub.f32 %v772, %v776
        %v778 = vmul.f32 %v777, 1.442695
        %v779 = vpow.pop %v778
        %781 = vset.pattern.permute.xlu0 0
        %782 = vperm.xlu0 %781, %v776
        %v783 = vpop.permute.xlu0 %782
        %v785 = vsub.f32 %v770, %v783
        %v786 = vmul.f32 %v785, 1.442695
        %v787 = vpow.pop %v786
        %s788 = scalar_lea.vmem [#allocation3], 8
        %v789 = vld [vmem:[%s788] sm:$0xff]
        %v790 = vmul.f32 %v779, %v789
        %v791 = vsel %vm663, %v787, 0.0
        %792 = vadd.xlane.f32.xlu0 %v791
        %v793 = vpop.xlane.xlu0 %792
        %v794 = vadd.f32 %v790, %v793
        %795 = vst.msk [vmem:[%s788] sm:$0xff] %vm707, %v794
        %s796 = scalar_lea.vmem [#allocation4], 8
        %v797 = vld [vmem:[%s796] sm:$0xff]
        %799 = vset.pattern.permute.xlu0 0
        %800 = vperm.xlu0 %799, %v779
        %v801 = vpop.permute.xlu0 %800
        %v803 = vmul.f32 %v801, %v797
        %v804 = vpack.c.bf16 %v787, %v787
        %v806 = vunpack.c.l.b16 %v651
        %v807 = vpack.c.b16 %v806, %v806
        %808 = vrot.lane.b32.xlu0 %v807, 120
        %v809 = vpop.permute.xlu0 %808
        %v811 = vsel %vm663, %v804, 0
        %v814 = vsel %vm720, %v809, 0
        %816 = vmatpush.bf16.msra.mxu0 0
        %817 = vmatpush.bf16.msra.mxu0 0
        %818 = vmatpush.bf16.msra.mxu0 0
        %819 = vmatpush.bf16.msra.mxu0 0
        %820 = vmatpush.bf16.msra.mxu0 0
        %821 = vmatpush.bf16.msra.mxu0 0
        %822 = vmatpush.bf16.msra.mxu0 0
        %823 = vmatpush.bf16.msra.mxu0 %v814
        %824 = vmatmul.bf16.gmra.mxu0 %v811
        %v825 = vpop.f32.mrf.mxu0
        %v826 = vadd.f32 0.0, %v825
        %v827 = vpop.f32.mrf.mxu0
        %828 = vdwg.mxu0
        %v829 = vadd.f32 %v803, %v826
        %830 = vst.msk [vmem:[%s796] sm:$0xff] %vm663, %v829
        %831 = vst.msk [vmem:[%s771] sm:$0xff] %vm707, %v776
        %832 = vrot.lane.b32.xlu0 %v742, 112
        %v833 = vpop.permute.xlu0 %832
        %834 = vrot.lane.b32.xlu0 %v747, 112
        %v835 = vpop.permute.xlu0 %834
        %v837 = vsel %vm663, %v833, 0
        %v840 = vsel %vm663, %v835, 0
        %842 = vmatpush.bf16.xpose.msra.mxu0 0
        %843 = vmatpush.bf16.xpose.msra.mxu0 0
        %844 = vmatpush.bf16.xpose.msra.mxu0 0
        %845 = vmatpush.bf16.xpose.msra.mxu0 0
        %846 = vmatpush.bf16.xpose.msra.mxu0 0
        %847 = vmatpush.bf16.xpose.msra.mxu0 0
        %848 = vmatpush.bf16.xpose.msra.mxu0 0
        %849 = vmatpush.bf16.xpose.msra.mxu0 %v840
        %850 = vmatmul.bf16.gmra.mxu0 %v837
        %v851 = vpop.f32.mrf.mxu0
        %v852 = vadd.f32 0.0, %v851
        %v853 = vpop.f32.mrf.mxu0
        %854 = vdwg.mxu0
        %v855 = vmul.f32 %v852, 0.35355338
        %v856 = vsel %vm662, %v855, -1e+30
        %s857 = scalar_lea.vmem [#allocation2], 16
        %v858 = vld [vmem:[%s857] sm:$0xff]
        %v859 = vsel %vm663, %v856, -inf
        %860 = vmax.xlane.f32.xlu0 %v859
        %v861 = vpop.xlane.xlu0 %860
        %v862 = vmax.f32 %v858, %v861
        %v863 = vsub.f32 %v858, %v862
        %v864 = vmul.f32 %v863, 1.442695
        %v865 = vpow.pop %v864
        %867 = vset.pattern.permute.xlu0 0
        %868 = vperm.xlu0 %867, %v862
        %v869 = vpop.permute.xlu0 %868
        %v871 = vsub.f32 %v856, %v869
        %v872 = vmul.f32 %v871, 1.442695
        %v873 = vpow.pop %v872
        %s874 = scalar_lea.vmem [#allocation3], 16
        %v875 = vld [vmem:[%s874] sm:$0xff]
        %v876 = vmul.f32 %v865, %v875
        %v877 = vsel %vm663, %v873, 0.0
        %878 = vadd.xlane.f32.xlu0 %v877
        %v879 = vpop.xlane.xlu0 %878
        %v880 = vadd.f32 %v876, %v879
        %881 = vst.msk [vmem:[%s874] sm:$0xff] %vm707, %v880
        %s882 = scalar_lea.vmem [#allocation4], 16
        %v883 = vld [vmem:[%s882] sm:$0xff]
        %885 = vset.pattern.permute.xlu0 0
        %886 = vperm.xlu0 %885, %v865
        %v887 = vpop.permute.xlu0 %886
        %v889 = vmul.f32 %v887, %v883
        %v890 = vpack.c.bf16 %v873, %v873
        %891 = vrot.lane.b32.xlu0 %v807, 112
        %v892 = vpop.permute.xlu0 %891
        %v894 = vsel %vm663, %v890, 0
        %v897 = vsel %vm720, %v892, 0
        %899 = vmatpush.bf16.msra.mxu0 0
        %900 = vmatpush.bf16.msra.mxu0 0
        %901 = vmatpush.bf16.msra.mxu0 0
        %902 = vmatpush.bf16.msra.mxu0 0
        %903 = vmatpush.bf16.msra.mxu0 0
        %904 = vmatpush.bf16.msra.mxu0 0
        %905 = vmatpush.bf16.msra.mxu0 0
        %906 = vmatpush.bf16.msra.mxu0 %v897
        %907 = vmatmul.bf16.gmra.mxu0 %v894
        %v908 = vpop.f32.mrf.mxu0
        %v909 = vadd.f32 0.0, %v908
        %v910 = vpop.f32.mrf.mxu0
        %911 = vdwg.mxu0
        %v912 = vadd.f32 %v889, %v909
        %913 = vst.msk [vmem:[%s882] sm:$0xff] %vm663, %v912
        %914 = vst.msk [vmem:[%s857] sm:$0xff] %vm707, %v862
        %915 = vrot.lane.b32.xlu0 %v742, 104
        %v916 = vpop.permute.xlu0 %915
        %917 = vrot.lane.b32.xlu0 %v747, 104
        %v918 = vpop.permute.xlu0 %917
        %v920 = vsel %vm663, %v916, 0
        %v923 = vsel %vm663, %v918, 0
        %925 = vmatpush.bf16.xpose.msra.mxu0 0
        %926 = vmatpush.bf16.xpose.msra.mxu0 0
        %927 = vmatpush.bf16.xpose.msra.mxu0 0
        %928 = vmatpush.bf16.xpose.msra.mxu0 0
        %929 = vmatpush.bf16.xpose.msra.mxu0 0
        %930 = vmatpush.bf16.xpose.msra.mxu0 0
        %931 = vmatpush.bf16.xpose.msra.mxu0 0
        %932 = vmatpush.bf16.xpose.msra.mxu0 %v923
        %933 = vmatmul.bf16.gmra.mxu0 %v920
        %v934 = vpop.f32.mrf.mxu0
        %v935 = vadd.f32 0.0, %v934
        %v936 = vpop.f32.mrf.mxu0
        %937 = vdwg.mxu0
        %v938 = vmul.f32 %v935, 0.35355338
        %v939 = vsel %vm662, %v938, -1e+30
        %s940 = scalar_lea.vmem [#allocation2], 24
        %v941 = vld [vmem:[%s940] sm:$0xff]
        %v942 = vsel %vm663, %v939, -inf
        %943 = vmax.xlane.f32.xlu0 %v942
        %v944 = vpop.xlane.xlu0 %943
        %v945 = vmax.f32 %v941, %v944
        %v946 = vsub.f32 %v941, %v945
        %v947 = vmul.f32 %v946, 1.442695
        %v948 = vpow.pop %v947
        %950 = vset.pattern.permute.xlu0 0
        %951 = vperm.xlu0 %950, %v945
        %v952 = vpop.permute.xlu0 %951
        %v954 = vsub.f32 %v939, %v952
        %v955 = vmul.f32 %v954, 1.442695
        %v956 = vpow.pop %v955
        %s957 = scalar_lea.vmem [#allocation3], 24
        %v958 = vld [vmem:[%s957] sm:$0xff]
        %v959 = vmul.f32 %v948, %v958
        %v960 = vsel %vm663, %v956, 0.0
        %961 = vadd.xlane.f32.xlu0 %v960
        %v962 = vpop.xlane.xlu0 %961
        %v963 = vadd.f32 %v959, %v962
        %964 = vst.msk [vmem:[%s957] sm:$0xff] %vm707, %v963
        %s965 = scalar_lea.vmem [#allocation4], 24
        %v966 = vld [vmem:[%s965] sm:$0xff]
        %968 = vset.pattern.permute.xlu0 0
        %969 = vperm.xlu0 %968, %v948
        %v970 = vpop.permute.xlu0 %969
        %v972 = vmul.f32 %v970, %v966
        %v973 = vpack.c.bf16 %v956, %v956
        %974 = vrot.lane.b32.xlu0 %v807, 104
        %v975 = vpop.permute.xlu0 %974
        %v977 = vsel %vm663, %v973, 0
        %v980 = vsel %vm720, %v975, 0
        %982 = vmatpush.bf16.msra.mxu0 0
        %983 = vmatpush.bf16.msra.mxu0 0
        %984 = vmatpush.bf16.msra.mxu0 0
        %985 = vmatpush.bf16.msra.mxu0 0
        %986 = vmatpush.bf16.msra.mxu0 0
        %987 = vmatpush.bf16.msra.mxu0 0
        %988 = vmatpush.bf16.msra.mxu0 0
        %989 = vmatpush.bf16.msra.mxu0 %v980
        %990 = vmatmul.bf16.gmra.mxu0 %v977
        %v991 = vpop.f32.mrf.mxu0
        %v992 = vadd.f32 0.0, %v991
        %v993 = vpop.f32.mrf.mxu0
        %994 = vdwg.mxu0
        %v995 = vadd.f32 %v972, %v992
        %996 = vst.msk [vmem:[%s965] sm:$0xff] %vm663, %v995
        %997 = vst.msk [vmem:[%s940] sm:$0xff] %vm707, %v945
      $region44: #{model_from_hf_forward.18} parent=31 // pred_fallthru
        _
      // Predicated region
      $region45: #{model_from_hf_forward.18} parent=31 // pred_check
        %p998 = pneg %p289
      $region46: #{model_from_hf_forward.18} parent=31 // pred_check_branch
        %1000 = sbr.rel (%p998) target = $region48
      $region47: #{model_from_hf_forward.18} parent=31 // pred_region
        %v1001 = vld [vmem:[#allocation3] sm:$0xff]
        %v1002 = vrcp.pop %v1001
        %v1003 = vld [vmem:[#allocation4] sm:$0xff]
        %1005 = vset.pattern.permute.xlu0 0
        %1006 = vperm.xlu0 %1005, %v1002
        %v1007 = vpop.permute.xlu0 %1006
        %v1009 = vmul.f32 %v1003, %v1007
        %s1010 = scalar_lea.vmem [#allocation3], 8
        %v1011 = vld [vmem:[%s1010] sm:$0xff]
        %v1012 = vrcp.pop %v1011
        %s1013 = scalar_lea.vmem [#allocation4], 8
        %v1014 = vld [vmem:[%s1013] sm:$0xff]
        %1016 = vset.pattern.permute.xlu0 0
        %1017 = vperm.xlu0 %1016, %v1012
        %v1018 = vpop.permute.xlu0 %1017
        %v1020 = vmul.f32 %v1014, %v1018
        %s1021 = scalar_lea.vmem [#allocation3], 16
        %v1022 = vld [vmem:[%s1021] sm:$0xff]
        %v1023 = vrcp.pop %v1022
        %s1024 = scalar_lea.vmem [#allocation4], 16
        %v1025 = vld [vmem:[%s1024] sm:$0xff]
        %1027 = vset.pattern.permute.xlu0 0
        %1028 = vperm.xlu0 %1027, %v1023
        %v1029 = vpop.permute.xlu0 %1028
        %v1031 = vmul.f32 %v1025, %v1029
        %s1032 = scalar_lea.vmem [#allocation3], 24
        %v1033 = vld [vmem:[%s1032] sm:$0xff]
        %v1034 = vrcp.pop %v1033
        %s1035 = scalar_lea.vmem [#allocation4], 24
        %v1036 = vld [vmem:[%s1035] sm:$0xff]
        %1038 = vset.pattern.permute.xlu0 0
        %1039 = vperm.xlu0 %1038, %v1034
        %v1040 = vpop.permute.xlu0 %1039
        %v1042 = vmul.f32 %v1036, %v1040
        %1044 = vrot.lane.b32.xlu0 %v1020, 8
        %v1045 = vpop.permute.xlu0 %1044
        %1048 = vrot.lane.b32.xlu0 %v1031, 16
        %v1049 = vpop.permute.xlu0 %1048
        %1052 = vrot.lane.b32.xlu0 %v1042, 24
        %v1053 = vpop.permute.xlu0 %1052
        %vm1055 = vcmask 64512
        %v1056 = vsel %vm1055, %v1009, %v1045
        %vm1057 = vcmask 130048
        %v1058 = vsel %vm1057, %v1056, %v1049
        %vm1059 = vcmask 195584
        %v1060 = vsel %vm1059, %v1058, %v1053
        %v1061 = vpack.c.bf16 %v1060, %v1060
        %vm1062 = vcmask 257024
        %1063 = vst.msk [vmem:[%s287] sm:$0xf] %vm1062, %v1061
      $region48: #{model_from_hf_forward.18} parent=31 // pred_fallthru
        _
      %p1064 = scmp.lt.s32.totalorder %s19, 1
      %s1065 = scalar_select %p1064, %s19, 1
      %p1066 = scmp.lt.s32.totalorder %s20, 0
      %s1067 = scalar_select %p1066, %s20, 0
      %s1068 = sadd.s32 %s1067, %s1065
      %s1069 = smul.addr %s1068, 4
      %s1070 = scalar_lea.vmem %s3, %s1069
      // Predicated region
      $region49: #{model_from_hf_forward.18} parent=31 // pred_check
        %p1071 = pneg %p145
      $region50: #{model_from_hf_forward.18} parent=31 // pred_check_branch
        %1073 = sbr.rel (%p1071) target = $region52
      $region51: #{model_from_hf_forward.18} parent=31 // pred_region
        _
      $region52: #{model_from_hf_forward.18} parent=31 // pred_fallthru
        _
    $region32: #{model_from_hf_forward.18} parent=5 // pred_fallthru
      _
    %p1074 = scmp.le.s32.totalorder 2, %s9
    // Predicated region
    $region53: #{model_from_hf_forward.18} parent=5 // pred_check
      %p1075 = pneg %p1074
    $region54: #{model_from_hf_forward.18} parent=5 // pred_check_branch
      %1077 = sbr.rel (%p1075) target = $region56
    $region55: #{model_from_hf_forward.18} parent=5 // pred_region
      %s1078 = ssub.s32 %s9, 2
      // Predicated region
      $region57: #{model_from_hf_forward.18} parent=55 // pred_check
        %p1079 = pneg %p151
      $region58: #{model_from_hf_forward.18} parent=55 // pred_check_branch
        %1081 = sbr.rel (%p1079) target = $region60
      $region59: #{model_from_hf_forward.18} parent=55 // pred_region
        %p1082 = scmp.lt.s32.totalorder %s22, 1
        %s1083 = scalar_select %p1082, %s22, 1
        %p1084 = scmp.lt.s32.totalorder %s23, 0
        %s1085 = scalar_select %p1084, %s23, 0
        %s1086 = sadd.s32 %s1085, %s1083
        %s1087 = smul.addr %s1086, 4
        %s1088 = scalar_lea.vmem %s3, %s1087
      $region60: #{model_from_hf_forward.18} parent=55 // pred_fallthru
        _
    $region56: #{model_from_hf_forward.18} parent=5 // pred_fallthru
      _
  $region6: #{model_from_hf_forward.18} parent=0 // loop_footer
    %s13 = sadd.s32 1, %s9
  $region7: #{model_from_hf_forward.18} parent=0 // loop_footer_branch
    %8 = sbr.rel target = $region3
  $region8: #{model_from_hf_forward.18} parent=0 // loop_exit
    _

// kernel: model_from_hf_forward.31
$region0: #{model_from_hf_forward.31}
  #allocation0 [shape = 'u32[]', space=smem, size = 0x4, offset = 0x4, fixed_abs, tag = 'smem constant byte address 0x4 - core index']
  #allocation1 [shape = 'u32[72,128]{1,0:T(1,128)}', space=vmem, size = 0x9000, scoped, tag = 'internal scratch']
  #allocation2 [shape = 'f32[16,64]{1,0:T(8,128)}', space=vmem, size = 0x2000, scoped, tag = 'scratch operand']
  %s0 = inlined_call_operand.vmem [shape: bf16[16,32], index: 0, kind: input, shape index: {}]
  %s1 = inlined_call_operand.vmem [shape: bf16[64,32], index: 1, kind: input, shape index: {}]
  %s2 = inlined_call_operand.hbm [shape: bf16[16,64], index: 2, kind: output, shape index: {}]
  %s3 = sld [smem:[#allocation0]]
  $region26: #{model_from_hf_forward.31} parent=0
    _
  %s5 = ssub.s32 1, %s3
  %s6 = scalar_select 0, %s5, %s3
  $region1: #{model_from_hf_forward.31} parent=0
    #allocation3 [shape = 'u8[4096]{0}', space=vmem, size = 0x1000, scoped, tag = 'output window, operand 0, single buffered']
    #allocation4 [shape = 's32[1]{0}', space=sflag, size = 0x4, scoped, tag = 'scoped memory for model_from_hf_forward.31']
    %7 = vsyncpa [#allocation4], 0
    // Predicated region
    $region2: #{model_from_hf_forward.31} parent=1 // pred_check
      _
    $region3: #{model_from_hf_forward.31} parent=1 // pred_check_branch
      %9 = sbr.rel (0) target = $region5
    $region4: #{model_from_hf_forward.31} parent=1 // pred_region
      _
    $region5: #{model_from_hf_forward.31} parent=1 // pred_fallthru
      _
    // Predicated region
    $region6: #{model_from_hf_forward.31} parent=1 // pred_check
      _
    $region7: #{model_from_hf_forward.31} parent=1 // pred_check_branch
      %11 = sbr.rel (0) target = $region9
    $region8: #{model_from_hf_forward.31} parent=1 // pred_region
      _
    $region9: #{model_from_hf_forward.31} parent=1 // pred_fallthru
      _
    %p13 = scmp.eq.s32.totalorder 0, 0
    // Predicated region
    $region10: #{model_from_hf_forward.31} parent=1 // pred_check
      %p14 = pneg %p13
    $region11: #{model_from_hf_forward.31} parent=1 // pred_check_branch
      %16 = sbr.rel (%p14) target = $region13
    $region12: #{model_from_hf_forward.31} parent=1 // pred_region
      %vm17 = vcmask 523264
      %18 = vst.msk [vmem:[#allocation2] sm:$0xff] %vm17, 0.0
      %19 = vst.msk [vmem:[#allocation2 + $0x8] sm:$0xff] %vm17, 0.0
    $region13: #{model_from_hf_forward.31} parent=1 // pred_fallthru
      _
    %v20 = vld [vmem:[#allocation2] sm:$0xff]
    %v21 = vld [vmem:[#allocation2 + $0x8] sm:$0xff]
    %v22 = vld [vmem:[%s0] sm:$0xf]
    %v23 = vld [vmem:[%s0 + $0x4] sm:$0xf]
    %v24 = vld [vmem:[%s1] sm:$0xf]
    %v25 = vld [vmem:[%s1 + $0x4] sm:$0xf]
    %v26 = vld [vmem:[%s1 + $0x8] sm:$0xf]
    %v27 = vld [vmem:[%s1 + $0xc] sm:$0xf]
    %v28 = vld [vmem:[%s1 + $0x10] sm:$0xf]
    %v29 = vld [vmem:[%s1 + $0x14] sm:$0xf]
    %v30 = vld [vmem:[%s1 + $0x18] sm:$0xf]
    %v31 = vld [vmem:[%s1 + $0x1c] sm:$0xf]
    %v34 = vunpack.c.l.b16 %v22
    %v35 = vunpack.c.l.b16 %v23
    %v36 = vpack.c.b16 %v35, %v34
    %v45 = vunpack.c.l.b16 %v24
    %v46 = vunpack.c.l.b16 %v25
    %v47 = vunpack.c.l.b16 %v26
    %v48 = vunpack.c.l.b16 %v27
    %v49 = vunpack.c.l.b16 %v28
    %v50 = vunpack.c.l.b16 %v29
    %v51 = vunpack.c.l.b16 %v30
    %v52 = vunpack.c.l.b16 %v31
    %v53 = vpack.c.b16 %v46, %v45
    %v54 = vpack.c.b16 %v48, %v47
    %v55 = vpack.c.b16 %v50, %v49
    %v56 = vpack.c.b16 %v52, %v51
    %vm57 = vcmask 261120
    %v59 = vsel %vm57, %v36, 0
    %v62 = vsel %vm57, %v53, 0
    %v65 = vsel %vm57, %v54, 0
    %v68 = vsel %vm57, %v55, 0
    %v71 = vsel %vm57, %v56, 0
    %73 = vmatpush.bf16.xpose.msra.mxu0 0
    %74 = vmatpush.bf16.xpose.msra.mxu0 0
    %75 = vmatpush.bf16.xpose.msra.mxu0 0
    %76 = vmatpush.bf16.xpose.msra.mxu0 0
    %77 = vmatpush.bf16.xpose.msra.mxu0 %v71
    %78 = vmatpush.bf16.xpose.msra.mxu0 %v68
    %79 = vmatpush.bf16.xpose.msra.mxu0 %v65
    %80 = vmatpush.bf16.xpose.msra.mxu0 %v62
    %81 = vmatmul.bf16.gmra.mxu0 %v59
    %v82 = vpop.f32.mrf.mxu0
    %v83 = vadd.f32 0.0, %v82
    %v84 = vpop.f32.mrf.mxu0
    %v85 = vadd.f32 0.0, %v84
    %86 = vdwg.mxu0
    %v87 = vadd.f32 %v20, %v83
    %v88 = vadd.f32 %v21, %v85
    %vm89 = vcmask 523264
    %90 = vst.msk [vmem:[#allocation2] sm:$0xff] %vm89, %v87
    %91 = vst.msk [vmem:[#allocation2 + $0x8] sm:$0xff] %vm89, %v88
    // Predicated region
    $region14: #{model_from_hf_forward.31} parent=1 // pred_check
      %p92 = pneg %p13
    $region15: #{model_from_hf_forward.31} parent=1 // pred_check_branch
      %94 = sbr.rel (%p92) target = $region17
    $region16: #{model_from_hf_forward.31} parent=1 // pred_region
      %v95 = vld [vmem:[#allocation2] sm:$0xff]
      %v96 = vld [vmem:[#allocation2 + $0x8] sm:$0xff]
      %v97 = vpack.c.bf16 %v95, %v95
      %v98 = vpack.c.bf16 %v96, %v96
      %vm99 = vcmask 519168
      %100 = vst.msk [vmem:[#allocation3] sm:$0xf] %vm99, %v97
      %101 = vst.msk [vmem:[#allocation3 + $0x4] sm:$0xf] %vm99, %v98
    $region17: #{model_from_hf_forward.31} parent=1 // pred_fallthru
      _
    // Predicated region
    $region18: #{model_from_hf_forward.31} parent=1 // pred_check
      _
    $region19: #{model_from_hf_forward.31} parent=1 // pred_check_branch
      %103 = sbr.rel (0) target = $region21
    $region20: #{model_from_hf_forward.31} parent=1 // pred_region
      %105 = vsyncadd [#allocation4], 0
      %s106 = sshll.u32 [#allocation3], 4
      %s107 = int_to_ptr.vmem [resolvable:$true] %s106
      %s108 = sshll.u32 %s2, 4
      %s109 = int_to_ptr.hbm [resolvable:$true] %s108
      %114 = dma.vmem_to_hbm [thread:$0]  %s107, 128, %s109, [#allocation4], 64, 64, 4
    $region21: #{model_from_hf_forward.31} parent=1 // pred_fallthru
      _
    // Predicated region
    $region22: #{model_from_hf_forward.31} parent=1 // pred_check
      _
    $region23: #{model_from_hf_forward.31} parent=1 // pred_check_branch
      %116 = sbr.rel (0) target = $region25
    $region24: #{model_from_hf_forward.31} parent=1 // pred_region
      %118 = dma.done [#allocation4], 128
    $region25: #{model_from_hf_forward.31} parent=1 // pred_fallthru
      _
    %119 = vsyncpa [#allocation4], 1

</llo_original>
